<compile_context>
chip_gen: v7x
topology: tpu7x:2x2x1
jax: 0.10.0
libtpu: 0.0.40
codegen_flags: <defaults>
</compile_context>

<pallas_src>
import jax
import jax.numpy as jnp
from jax.experimental import pallas as pl
from jax.experimental.pallas import tpu as pltpu

# logical (PyTorch) sizes
D_IN, D_H, D_Z = 784, 600, 100
# lane-padded sizes (multiples of 128)
DP_IN, DP_H, DP_Z = 896, 640, 128

TB_MAX = 512     # max batch rows per grid step (fits all generations' VMEM comfortably)
MIN_SPLIT = 256  # only force >= 2 grid steps (for v7x 2-core sharding) at this batch size


def _round_up(n, m):
    return (n + m - 1) // m * m


def _cdiv(a, b):
    return (a + b - 1) // b


def _choose_tiles(B):
    """Balanced batch tiling: <= 7 dead rows per tile; even #steps for v7x when B is big."""
    n = max(1, _cdiv(B, TB_MAX))
    if B >= MIN_SPLIT:
        n = max(n, 2)
        n += n % 2  # even step count so both v7x TensorCores get equal work
    tb = _round_up(_cdiv(B, n), 8)
    return tb, n * tb


def _vae_kernel(x_ref, eps_ref,
                w1_ref, b1_ref,
                wh_ref, bh_ref,
                w3_ref, b3_ref,
                w4_ref, b4_ref,
                recon_ref, mulv_ref):
    # --- encode: fc1 + relu ---
    x = x_ref[...]                                                       # bf16 [TB, 896]
    h1 = jnp.dot(x, w1_ref[...], preferred_element_type=jnp.float32) + b1_ref[...]
    h1 = jnp.maximum(h1, 0.0).astype(jnp.bfloat16)                       # [TB, 640]

    # --- fused fc21 || fc22 head: one lane-dense [640, 256] matmul ---
    head = jnp.dot(h1, wh_ref[...], preferred_element_type=jnp.float32) + bh_ref[...]
    mu = head[:, :DP_Z]                                                  # [TB, 128]
    logvar = head[:, DP_Z:]                                              # [TB, 128]

    # --- reparameterize: z = mu + eps * exp(0.5 * logvar) ---
    # padded lanes: mu=0, logvar=0 -> exp=1, eps=0 -> z padded lanes stay 0
    z = mu + eps_ref[...].astype(jnp.float32) * jnp.exp(0.5 * logvar)    # [TB, 128]

    # --- decode: fc3 + relu, fc4 + sigmoid ---
    h3 = jnp.dot(z.astype(jnp.bfloat16), w3_ref[...],
                 preferred_element_type=jnp.float32) + b3_ref[...]
    h3 = jnp.maximum(h3, 0.0).astype(jnp.bfloat16)                       # [TB, 640]
    logits = jnp.dot(h3, w4_ref[...], preferred_element_type=jnp.float32) + b4_ref[...]

    recon_ref[...] = jax.nn.sigmoid(logits).astype(jnp.bfloat16)         # [TB, 896] bf16
    mulv_ref[...] = head                                                 # [TB, 256] f32 (mu||logvar)


@jax.jit
def vae_forward(x, eps, p):
    """x: [B, 1, 28, 28] (anything reshapable to [-1, 784]); eps: [B, 100].

    Returns (recon[bf16], mu[f32], logvar[f32]); compute losses on recon in f32.
    """
    xf = x.reshape(-1, D_IN)
    B = xf.shape[0]
    TB, Bp = _choose_tiles(B)

    # zero-pad batch rows and feature lanes (zeros are exact no-ops through the net);
    # activations DMA'd as bf16 (the MXU consumes bf16 anyway).
    xp = jnp.zeros((Bp, DP_IN), jnp.bfloat16).at[:B, :D_IN].set(xf.astype(jnp.bfloat16))
    ep = jnp.zeros((Bp, DP_Z), jnp.bfloat16).at[:B, :D_Z].set(eps.astype(jnp.bfloat16))

    def act_spec(d):
        return pl.BlockSpec((TB, d), lambda i: (i, 0))

    def resident(shape):  # constant index_map -> weights stay VMEM-resident across steps
        # TODO(synk): pipeline_mode=pl.Buffered(1) would drop the redundant second weight
        # buffer (~2.7 MiB); omitted to stay on the known-good BlockSpec signature.
        return pl.BlockSpec(shape, lambda i: (0, 0))

    grid_spec = pltpu.PrefetchScalarGridSpec(
        num_scalar_prefetch=0,
        grid=(Bp // TB,),
        in_specs=[
            act_spec(DP_IN),                 # x tile (bf16)
            act_spec(DP_Z),                  # eps tile (bf16)
            resident((DP_IN, DP_H)),         # w1 (bf16)
            resident((1, DP_H)),             # b1 (f32)
            resident((DP_H, 2 * DP_Z)),      # fused w21||w22 (bf16)
            resident((1, 2 * DP_Z)),         # fused b21||b22 (f32)
            resident((DP_Z, DP_H)),          # w3 (bf16)
            resident((1, DP_H)),             # b3 (f32)
            resident((DP_H, DP_IN)),         # w4 (bf16)
            resident((1, DP_IN)),            # b4 (f32)
        ],
        out_specs=(
            pl.BlockSpec((TB, DP_IN), lambda i: (i, 0)),       # recon (bf16)
            pl.BlockSpec((TB, 2 * DP_Z), lambda i: (i, 0)),    # mu || logvar (f32)
        ),
    )

    recon_p, mulv_p = pl.pallas_call(
        _vae_kernel,
        grid_spec=grid_spec,
        out_shape=(
            jax.ShapeDtypeStruct((Bp, DP_IN), jnp.bfloat16),
            jax.ShapeDtypeStruct((Bp, 2 * DP_Z), jnp.float32),
        ),
        compiler_params=pltpu.CompilerParams(
            dimension_semantics=("parallel",),          # batch axis -> both v7x cores
            vmem_limit_bytes=32 * 1024 * 1024,          # ~1.7x actual ~18 MiB footprint at TB=512
        ),
    )(xp, ep,
      p["w1"], p["b1"], p["wh"], p["bh"],
      p["w3"], p["b3"], p["w4"], p["b4"])

    recon = recon_p[:B, :D_IN]
    mu = mulv_p[:B, :D_Z]
    logvar = mulv_p[:B, DP_Z:DP_Z + D_Z]
    return recon, mu, logvar


# ----------------------------- parameter setup ------------------------------

def _init_linear(key, fan_in, fan_out):
    """PyTorch-like init U(-1/sqrt(fan_in), 1/sqrt(fan_in)); weight in [in, out] layout."""
    kw, kb = jax.random.split(key)
    bound = 1.0 / jnp.sqrt(jnp.float32(fan_in))
    w = jax.random.uniform(kw, (fan_in, fan_out), jnp.float32, -bound, bound)
    b = jax.random.uniform(kb, (1, fan_out), jnp.float32, -bound, bound)
    return w, b


def init_params(key):
    keys = jax.random.split(key, 5)
    w1, b1 = _init_linear(keys[0], D_IN, D_H)
    w21, b21 = _init_linear(keys[1], D_H, D_Z)
    w22, b22 = _init_linear(keys[2], D_H, D_Z)
    w3, b3 = _init_linear(keys[3], D_Z, D_H)
    w4, b4 = _init_linear(keys[4], D_H, D_IN)
    return dict(w1=w1, b1=b1, w21=w21, b21=b21, w22=w22, b22=b22,
                w3=w3, b3=b3, w4=w4, b4=b4)


def prep_params(raw):
    """Pad to lane multiples, fuse fc21/fc22, cast weights to bf16 (biases stay f32)."""
    def pad2(a, r, c):
        return jnp.pad(a, ((0, r - a.shape[0]), (0, c - a.shape[1])))

    w1 = pad2(raw["w1"], DP_IN, DP_H).astype(jnp.bfloat16)
    b1 = pad2(raw["b1"], 1, DP_H).astype(jnp.float32)

    wh = jnp.zeros((DP_H, 2 * DP_Z), jnp.float32)
    wh = wh.at[:D_H, :D_Z].set(raw["w21"])
    wh = wh.at[:D_H, DP_Z:DP_Z + D_Z].set(raw["w22"])
    bh = jnp.zeros((1, 2 * DP_Z), jnp.float32)
    bh = bh.at[:, :D_Z].set(raw["b21"])
    bh = bh.at[:, DP_Z:DP_Z + D_Z].set(raw["b22"])

    w3 = pad2(raw["w3"], DP_Z, DP_H).astype(jnp.bfloat16)
    b3 = pad2(raw["b3"], 1, DP_H).astype(jnp.float32)
    w4 = pad2(raw["w4"], DP_H, DP_IN).astype(jnp.bfloat16)
    b4 = pad2(raw["b4"], 1, DP_IN).astype(jnp.float32)

    return dict(w1=w1, b1=b1, wh=wh.astype(jnp.bfloat16), bh=bh,
                w3=w3, b3=b3, w4=w4, b4=b4)


# ------------------------------ reference ------------------------------------

def _reference_forward(x, eps, pp):
    """Pure-JAX reference using the same bf16 weights/activations, f32 accumulation."""
    xb = x.reshape(-1, D_IN).astype(jnp.bfloat16)
    eb = eps.astype(jnp.bfloat16)

    def mm(a, w):
        return jnp.dot(a.astype(jnp.bfloat16), w, preferred_element_type=jnp.float32)

    w1 = pp["w1"][:D_IN, :D_H];  b1 = pp["b1"][:, :D_H]
    w21 = pp["wh"][:D_H, :D_Z];  b21 = pp["bh"][:, :D_Z]
    w22 = pp["wh"][:D_H, DP_Z:DP_Z + D_Z]; b22 = pp["bh"][:, DP_Z:DP_Z + D_Z]
    w3 = pp["w3"][:D_Z, :D_H];   b3 = pp["b3"][:, :D_H]
    w4 = pp["w4"][:D_H, :D_IN];  b4 = pp["b4"][:, :D_IN]

    h1 = jnp.maximum(mm(xb, w1) + b1, 0.0)
    mu = mm(h1, w21) + b21
    logvar = mm(h1, w22) + b22
    z = mu + eb.astype(jnp.float32) * jnp.exp(0.5 * logvar)
    h3 = jnp.maximum(mm(z, w3) + b3, 0.0)
    recon = jax.nn.sigmoid(mm(h3, w4) + b4)
    return recon, mu, logvar


if __name__ == "__main__":
    key = jax.random.PRNGKey(0)
    k_params, k_x, k_eps, k_x2, k_eps2 = jax.random.split(key, 5)

    raw = init_params(k_params)
    params = prep_params(raw)

    # Case 1: small batch (single grid step).  Case 2: larger batch that exercises
    # the balanced multi-tile path (>= 2 even grid steps, padded dead rows).
    cases = ((8, k_x, k_eps), (300, k_x2, k_eps2))

    for B, kx, ke in cases:
        # MNIST-like input, NCHW, values in [0, 1)
        x = jax.random.uniform(kx, (B, 1, 28, 28), jnp.float32)
        # eps for the reparameterization trick (torch.randn_like(std) equivalent)
        # TODO(synk): eps could be generated in-kernel with pltpu.prng_* to drop this
        # HBM stream, at the cost of changing the random stream vs torch.randn.
        eps = jax.random.normal(ke, (B, D_Z), jnp.float32)

        recon, mu, logvar = vae_forward(x, eps, params)
        jax.block_until_ready((recon, mu, logvar))

        r_ref, mu_ref, lv_ref = _reference_forward(x, eps, params)
        assert recon.shape == (B, D_IN) and mu.shape == (B, D_Z) and logvar.shape == (B, D_Z)
        assert jnp.allclose(recon.astype(jnp.float32), r_ref, atol=5e-2, rtol=5e-2)
        assert jnp.allclose(mu, mu_ref, atol=5e-2, rtol=5e-2)
        assert jnp.allclose(logvar, lv_ref, atol=5e-2, rtol=5e-2)

    print("KERNEL_OK")
</pallas_src>

<mosaic_0001>
module attributes {stable_mosaic.version = 11 : i64} {
  func.func @_vae_kernel(%arg0: i32, %arg1: memref<8x896xbf16, #tpu.memory_space<vmem>>, %arg2: memref<8x128xbf16, #tpu.memory_space<vmem>>, %arg3: memref<896x640xbf16, #tpu.memory_space<vmem>>, %arg4: memref<1x640xf32, #tpu.memory_space<vmem>>, %arg5: memref<640x256xbf16, #tpu.memory_space<vmem>>, %arg6: memref<1x256xf32, #tpu.memory_space<vmem>>, %arg7: memref<128x640xbf16, #tpu.memory_space<vmem>>, %arg8: memref<1x640xf32, #tpu.memory_space<vmem>>, %arg9: memref<640x896xbf16, #tpu.memory_space<vmem>>, %arg10: memref<1x896xf32, #tpu.memory_space<vmem>>, %arg11: memref<8x896xbf16, #tpu.memory_space<vmem>>, %arg12: memref<8x256xf32, #tpu.memory_space<vmem>>) attributes {dimension_semantics = [#tpu.dimension_semantics<parallel>], iteration_bounds = array<i64: 1>, scalar_prefetch = 0 : i64, scratch_operands = 0 : i64, tpu.core_type = #tpu.core_type<tc>, window_params = [{transform_indices = @transform_0, window_bounds = array<i64: 8, 896>}, {transform_indices = @transform_1, window_bounds = array<i64: 8, 128>}, {pipeline_mode = #tpu.pipeline_mode<synchronous>, transform_indices = @transform_2, window_bounds = array<i64: 896, 640>}, {pipeline_mode = #tpu.pipeline_mode<synchronous>, transform_indices = @transform_3, window_bounds = array<i64: 1, 640>}, {pipeline_mode = #tpu.pipeline_mode<synchronous>, transform_indices = @transform_4, window_bounds = array<i64: 640, 256>}, {pipeline_mode = #tpu.pipeline_mode<synchronous>, transform_indices = @transform_5, window_bounds = array<i64: 1, 256>}, {pipeline_mode = #tpu.pipeline_mode<synchronous>, transform_indices = @transform_6, window_bounds = array<i64: 128, 640>}, {pipeline_mode = #tpu.pipeline_mode<synchronous>, transform_indices = @transform_7, window_bounds = array<i64: 1, 640>}, {pipeline_mode = #tpu.pipeline_mode<synchronous>, transform_indices = @transform_8, window_bounds = array<i64: 640, 896>}, {pipeline_mode = #tpu.pipeline_mode<synchronous>, transform_indices = @transform_9, window_bounds = array<i64: 1, 896>}, {transform_indices = @transform_10, window_bounds = array<i64: 8, 896>}, {transform_indices = @transform_11, window_bounds = array<i64: 8, 256>}]} {
    %c0 = arith.constant 0 : index
    %c0_0 = arith.constant 0 : index
    %0 = vector.load %arg1[%c0, %c0_0] : memref<8x896xbf16, #tpu.memory_space<vmem>>, vector<8x896xbf16>
    %c0_1 = arith.constant 0 : index
    %c0_2 = arith.constant 0 : index
    %1 = vector.load %arg3[%c0_1, %c0_2] : memref<896x640xbf16, #tpu.memory_space<vmem>>, vector<896x640xbf16>
    %cst = arith.constant dense<0.000000e+00> : vector<8x640xf32>
    %2 = tpu.matmul %0, %1, %cst {dimension_numbers = #tpu.dot_dimension_numbers<[1], [0], [0], [1], [0, 0, 1, 1], [], []>} : vector<8x896xbf16>, vector<896x640xbf16>, vector<8x640xf32> -> vector<8x640xf32>
    %c0_3 = arith.constant 0 : index
    %c0_4 = arith.constant 0 : index
    %3 = vector.load %arg4[%c0_3, %c0_4] : memref<1x640xf32, #tpu.memory_space<vmem>>, vector<1x640xf32>
    %4 = vector.broadcast %3 : vector<1x640xf32> to vector<8x640xf32>
    %5 = arith.addf %2, %4 : vector<8x640xf32>
    %cst_5 = arith.constant 0.000000e+00 : f32
    %6 = vector.broadcast %cst_5 : f32 to vector<8x640xf32>
    %7 = arith.maximumf %5, %6 : vector<8x640xf32>
    %8 = arith.truncf %7 : vector<8x640xf32> to vector<8x640xbf16>
    %c0_6 = arith.constant 0 : index
    %c0_7 = arith.constant 0 : index
    %9 = vector.load %arg5[%c0_6, %c0_7] : memref<640x256xbf16, #tpu.memory_space<vmem>>, vector<640x256xbf16>
    %cst_8 = arith.constant dense<0.000000e+00> : vector<8x256xf32>
    %10 = tpu.matmul %8, %9, %cst_8 {dimension_numbers = #tpu.dot_dimension_numbers<[1], [0], [0], [1], [0, 0, 1, 1], [], []>} : vector<8x640xbf16>, vector<640x256xbf16>, vector<8x256xf32> -> vector<8x256xf32>
    %c0_9 = arith.constant 0 : index
    %c0_10 = arith.constant 0 : index
    %11 = vector.load %arg6[%c0_9, %c0_10] : memref<1x256xf32, #tpu.memory_space<vmem>>, vector<1x256xf32>
    %12 = vector.broadcast %11 : vector<1x256xf32> to vector<8x256xf32>
    %13 = arith.addf %10, %12 : vector<8x256xf32>
    %14 = vector.extract_strided_slice %13 {offsets = [0, 0], sizes = [8, 128], strides = [1, 1]} : vector<8x256xf32> to vector<8x128xf32>
    %15 = vector.extract_strided_slice %13 {offsets = [0, 128], sizes = [8, 128], strides = [1, 1]} : vector<8x256xf32> to vector<8x128xf32>
    %c0_11 = arith.constant 0 : index
    %c0_12 = arith.constant 0 : index
    %16 = vector.load %arg2[%c0_11, %c0_12] : memref<8x128xbf16, #tpu.memory_space<vmem>>, vector<8x128xbf16>
    %17 = arith.extf %16 : vector<8x128xbf16> to vector<8x128xf32>
    %cst_13 = arith.constant 5.000000e-01 : f32
    %18 = vector.broadcast %cst_13 : f32 to vector<8x128xf32>
    %19 = arith.mulf %18, %15 : vector<8x128xf32>
    %20 = math.exp %19 : vector<8x128xf32>
    %21 = arith.mulf %17, %20 : vector<8x128xf32>
    %22 = arith.addf %14, %21 : vector<8x128xf32>
    %23 = arith.truncf %22 : vector<8x128xf32> to vector<8x128xbf16>
    %c0_14 = arith.constant 0 : index
    %c0_15 = arith.constant 0 : index
    %24 = vector.load %arg7[%c0_14, %c0_15] : memref<128x640xbf16, #tpu.memory_space<vmem>>, vector<128x640xbf16>
    %cst_16 = arith.constant dense<0.000000e+00> : vector<8x640xf32>
    %25 = tpu.matmul %23, %24, %cst_16 {dimension_numbers = #tpu.dot_dimension_numbers<[1], [0], [0], [1], [0, 0, 1, 1], [], []>} : vector<8x128xbf16>, vector<128x640xbf16>, vector<8x640xf32> -> vector<8x640xf32>
    %c0_17 = arith.constant 0 : index
    %c0_18 = arith.constant 0 : index
    %26 = vector.load %arg8[%c0_17, %c0_18] : memref<1x640xf32, #tpu.memory_space<vmem>>, vector<1x640xf32>
    %27 = vector.broadcast %26 : vector<1x640xf32> to vector<8x640xf32>
    %28 = arith.addf %25, %27 : vector<8x640xf32>
    %cst_19 = arith.constant 0.000000e+00 : f32
    %29 = vector.broadcast %cst_19 : f32 to vector<8x640xf32>
    %30 = arith.maximumf %28, %29 : vector<8x640xf32>
    %31 = arith.truncf %30 : vector<8x640xf32> to vector<8x640xbf16>
    %c0_20 = arith.constant 0 : index
    %c0_21 = arith.constant 0 : index
    %32 = vector.load %arg9[%c0_20, %c0_21] : memref<640x896xbf16, #tpu.memory_space<vmem>>, vector<640x896xbf16>
    %cst_22 = arith.constant dense<0.000000e+00> : vector<8x896xf32>
    %33 = tpu.matmul %31, %32, %cst_22 {dimension_numbers = #tpu.dot_dimension_numbers<[1], [0], [0], [1], [0, 0, 1, 1], [], []>} : vector<8x640xbf16>, vector<640x896xbf16>, vector<8x896xf32> -> vector<8x896xf32>
    %c0_23 = arith.constant 0 : index
    %c0_24 = arith.constant 0 : index
    %34 = vector.load %arg10[%c0_23, %c0_24] : memref<1x896xf32, #tpu.memory_space<vmem>>, vector<1x896xf32>
    %35 = vector.broadcast %34 : vector<1x896xf32> to vector<8x896xf32>
    %36 = arith.addf %33, %35 : vector<8x896xf32>
    %37 = arith.negf %36 : vector<8x896xf32>
    %38 = math.exp %37 : vector<8x896xf32>
    %cst_25 = arith.constant 1.000000e+00 : f32
    %39 = vector.broadcast %cst_25 : f32 to vector<8x896xf32>
    %40 = arith.addf %39, %38 : vector<8x896xf32>
    %41 = arith.divf %39, %40 : vector<8x896xf32>
    %42 = arith.truncf %41 : vector<8x896xf32> to vector<8x896xbf16>
    %c0_26 = arith.constant 0 : index
    %c0_27 = arith.constant 0 : index
    %43 = vector.load %arg11[%c0_26, %c0_27] : memref<8x896xbf16, #tpu.memory_space<vmem>>, vector<8x896xbf16>
    tpu.vector_store %arg11[%c0_26, %c0_27], %42 {strides = array<i32>} : memref<8x896xbf16, #tpu.memory_space<vmem>>, vector<8x896xbf16>,
    %c0_28 = arith.constant 0 : index
    %c0_29 = arith.constant 0 : index
    %44 = vector.load %arg12[%c0_28, %c0_29] : memref<8x256xf32, #tpu.memory_space<vmem>>, vector<8x256xf32>
    tpu.vector_store %arg12[%c0_28, %c0_29], %13 {strides = array<i32>} : memref<8x256xf32, #tpu.memory_space<vmem>>, vector<8x256xf32>,
    return
  }
  func.func @transform_0(%arg0: i32) -> (i32, i32) {
    %c0_i32 = arith.constant 0 : i32
    %c0_i32_0 = arith.constant 0 : i32
    return %arg0, %c0_i32 : i32, i32
  }
  func.func @transform_1(%arg0: i32) -> (i32, i32) {
    %c0_i32 = arith.constant 0 : i32
    %c0_i32_0 = arith.constant 0 : i32
    return %arg0, %c0_i32 : i32, i32
  }
  func.func @transform_2(%arg0: i32) -> (i32, i32) {
    %c0_i32 = arith.constant 0 : i32
    %c0_i32_0 = arith.constant 0 : i32
    %c0_i32_1 = arith.constant 0 : i32
    return %c0_i32, %c0_i32_0 : i32, i32
  }
  func.func @transform_3(%arg0: i32) -> (i32, i32) {
    %c0_i32 = arith.constant 0 : i32
    %c0_i32_0 = arith.constant 0 : i32
    %c0_i32_1 = arith.constant 0 : i32
    return %c0_i32, %c0_i32_0 : i32, i32
  }
  func.func @transform_4(%arg0: i32) -> (i32, i32) {
    %c0_i32 = arith.constant 0 : i32
    %c0_i32_0 = arith.constant 0 : i32
    %c0_i32_1 = arith.constant 0 : i32
    return %c0_i32, %c0_i32_0 : i32, i32
  }
  func.func @transform_5(%arg0: i32) -> (i32, i32) {
    %c0_i32 = arith.constant 0 : i32
    %c0_i32_0 = arith.constant 0 : i32
    %c0_i32_1 = arith.constant 0 : i32
    return %c0_i32, %c0_i32_0 : i32, i32
  }
  func.func @transform_6(%arg0: i32) -> (i32, i32) {
    %c0_i32 = arith.constant 0 : i32
    %c0_i32_0 = arith.constant 0 : i32
    %c0_i32_1 = arith.constant 0 : i32
    return %c0_i32, %c0_i32_0 : i32, i32
  }
  func.func @transform_7(%arg0: i32) -> (i32, i32) {
    %c0_i32 = arith.constant 0 : i32
    %c0_i32_0 = arith.constant 0 : i32
    %c0_i32_1 = arith.constant 0 : i32
    return %c0_i32, %c0_i32_0 : i32, i32
  }
  func.func @transform_8(%arg0: i32) -> (i32, i32) {
    %c0_i32 = arith.constant 0 : i32
    %c0_i32_0 = arith.constant 0 : i32
    %c0_i32_1 = arith.constant 0 : i32
    return %c0_i32, %c0_i32_0 : i32, i32
  }
  func.func @transform_9(%arg0: i32) -> (i32, i32) {
    %c0_i32 = arith.constant 0 : i32
    %c0_i32_0 = arith.constant 0 : i32
    %c0_i32_1 = arith.constant 0 : i32
    return %c0_i32, %c0_i32_0 : i32, i32
  }
  func.func @transform_10(%arg0: i32) -> (i32, i32) {
    %c0_i32 = arith.constant 0 : i32
    %c0_i32_0 = arith.constant 0 : i32
    return %arg0, %c0_i32 : i32, i32
  }
  func.func @transform_11(%arg0: i32) -> (i32, i32) {
    %c0_i32 = arith.constant 0 : i32
    %c0_i32_0 = arith.constant 0 : i32
    return %arg0, %c0_i32 : i32, i32
  }
}

</mosaic_0001>

<llo_original>
// kernel: vae_forward.1
$region0: #{vae_forward.1}
  #allocation0 [shape = 'u32[]', space=smem, size = 0x4, offset = 0x4, fixed_abs, tag = 'smem constant byte address 0x4 - core index']
  #allocation1 [shape = 'u32[144,128]{1,0:T(1,128)}', space=vmem, size = 0x12000, scoped, tag = 'internal scratch']
  %s0 = inlined_call_operand.vmem [shape: bf16[8,896], index: 0, kind: input, shape index: {}]
  %s1 = inlined_call_operand.vmem [shape: bf16[8,128], index: 1, kind: input, shape index: {}]
  %s2 = inlined_call_operand.hbm [shape: bf16[896,640], index: 2, kind: input, shape index: {}]
  %s3 = inlined_call_operand.hbm [shape: f32[1,640], index: 3, kind: input, shape index: {}]
  %s4 = inlined_call_operand.hbm [shape: bf16[640,256], index: 4, kind: input, shape index: {}]
  %s5 = inlined_call_operand.hbm [shape: f32[1,256], index: 5, kind: input, shape index: {}]
  %s6 = inlined_call_operand.hbm [shape: bf16[128,640], index: 6, kind: input, shape index: {}]
  %s7 = inlined_call_operand.hbm [shape: f32[1,640], index: 7, kind: input, shape index: {}]
  %s8 = inlined_call_operand.hbm [shape: bf16[640,896], index: 8, kind: input, shape index: {}]
  %s9 = inlined_call_operand.hbm [shape: f32[1,896], index: 9, kind: input, shape index: {}]
  %s10 = inlined_call_operand.hbm [shape: bf16[8,896], index: 10, kind: output, shape index: {0}]
  %s11 = inlined_call_operand.vmem [shape: f32[8,256], index: 11, kind: output, shape index: {1}]
  %12 = xla_tuple %s10, %s11
  %s13 = sld [smem:[#allocation0]]
  $region90: #{vae_forward.1} parent=0
    _
  %s15 = ssub.s32 1, %s13
  %s16 = scalar_select 0, %s15, %s13
  $region1: #{vae_forward.1} parent=0
    #allocation2 [shape = 'u8[1146880]{0}', space=vmem, size = 0x118000, scoped, tag = 'input window, operand 2, single buffered']
    #allocation3 [shape = 's32[1]{0}', space=sflag, size = 0x4, scoped, tag = 'scoped memory for vae_forward.1']
    #allocation4 [shape = 's32[1]{0}', space=sflag, size = 0x4, scoped, tag = 'scoped memory for vae_forward.1']
    #allocation5 [shape = 'u8[2560]{0}', space=vmem, size = 0xc00, scoped, tag = 'input window, operand 3, single buffered']
    #allocation6 [shape = 's32[1]{0}', space=sflag, size = 0x4, scoped, tag = 'scoped memory for vae_forward.1']
    #allocation7 [shape = 'u8[327680]{0}', space=vmem, size = 0x50000, scoped, tag = 'input window, operand 4, single buffered']
    #allocation8 [shape = 'u8[1024]{0}', space=vmem, size = 0x400, scoped, tag = 'input window, operand 5, single buffered']
    #allocation9 [shape = 's32[1]{0}', space=sflag, size = 0x4, scoped, tag = 'scoped memory for vae_forward.1']
    #allocation10 [shape = 'u8[163840]{0}', space=vmem, size = 0x28000, scoped, tag = 'input window, operand 6, single buffered']
    #allocation11 [shape = 'u8[2560]{0}', space=vmem, size = 0xc00, scoped, tag = 'input window, operand 7, single buffered']
    #allocation12 [shape = 's32[1]{0}', space=sflag, size = 0x4, scoped, tag = 'scoped memory for vae_forward.1']
    #allocation13 [shape = 'u8[1146880]{0}', space=vmem, size = 0x118000, scoped, tag = 'input window, operand 8, single buffered']
    #allocation14 [shape = 'u8[3584]{0}', space=vmem, size = 0x1000, scoped, tag = 'input window, operand 9, single buffered']
    #allocation15 [shape = 's32[1]{0}', space=sflag, size = 0x4, scoped, tag = 'scoped memory for vae_forward.1']
    #allocation16 [shape = 'u8[14336]{0}', space=vmem, size = 0x3800, scoped, tag = 'output window, operand 0, single buffered']
    %17 = vsyncpa [#allocation3], 0
    %18 = vsyncpa [#allocation6], 0
    %19 = vsyncpa [#allocation9], 0
    %20 = vsyncpa [#allocation12], 0
    %21 = vsyncpa [#allocation15], 0
    %22 = vsyncpa [#allocation4], 0
    // Predicated region
    $region2: #{vae_forward.1} parent=1 // pred_check
      _
    $region3: #{vae_forward.1} parent=1 // pred_check_branch
      %24 = sbr.rel (0) target = $region5
    $region4: #{vae_forward.1} parent=1 // pred_region
      _
    $region5: #{vae_forward.1} parent=1 // pred_fallthru
      _
    // Predicated region
    $region6: #{vae_forward.1} parent=1 // pred_check
      _
    $region7: #{vae_forward.1} parent=1 // pred_check_branch
      %26 = sbr.rel (0) target = $region9
    $region8: #{vae_forward.1} parent=1 // pred_region
      _
    $region9: #{vae_forward.1} parent=1 // pred_fallthru
      _
    // Predicated region
    $region10: #{vae_forward.1} parent=1 // pred_check
      _
    $region11: #{vae_forward.1} parent=1 // pred_check_branch
      %28 = sbr.rel (0) target = $region13
    $region12: #{vae_forward.1} parent=1 // pred_region
      %s30 = ssub.s32 35840, 35840
      %31 = vsyncadd [#allocation3], %s30
      %s32 = sshll.u32 [#allocation2], 4
      %s33 = int_to_ptr.vmem [resolvable:$true] %s32
      %38 = dma.hbm_to_vmem [thread:$0]  %s2, 35840, %s33, [#allocation3], 320, 320, 20
    $region13: #{vae_forward.1} parent=1 // pred_fallthru
      _
    // Predicated region
    $region14: #{vae_forward.1} parent=1 // pred_check
      _
    $region15: #{vae_forward.1} parent=1 // pred_check_branch
      %40 = sbr.rel (0) target = $region17
    $region16: #{vae_forward.1} parent=1 // pred_region
      %s42 = ssub.s32 80, 80
      %43 = vsyncadd [#allocation6], %s42
      %s45 = sshll.u32 [#allocation5], 4
      %s46 = int_to_ptr.vmem [resolvable:$true] %s45
      %48 = dma.hbm_to_vmem [thread:$0]  %s3, 80, %s46, [#allocation6]
    $region17: #{vae_forward.1} parent=1 // pred_fallthru
      _
    // Predicated region
    $region18: #{vae_forward.1} parent=1 // pred_check
      _
    $region19: #{vae_forward.1} parent=1 // pred_check_branch
      %50 = sbr.rel (0) target = $region21
    $region20: #{vae_forward.1} parent=1 // pred_region
      %s52 = ssub.s32 10240, 10240
      %53 = vsyncadd [#allocation6], %s52
      %s54 = sshll.u32 [#allocation7], 4
      %s55 = int_to_ptr.vmem [resolvable:$true] %s54
      %60 = dma.hbm_to_vmem [thread:$0]  %s4, 10240, %s55, [#allocation6], 128, 128, 8
    $region21: #{vae_forward.1} parent=1 // pred_fallthru
      _
    // Predicated region
    $region22: #{vae_forward.1} parent=1 // pred_check
      _
    $region23: #{vae_forward.1} parent=1 // pred_check_branch
      %62 = sbr.rel (0) target = $region25
    $region24: #{vae_forward.1} parent=1 // pred_region
      %s64 = ssub.s32 32, 32
      %65 = vsyncadd [#allocation9], %s64
      %s67 = sshll.u32 [#allocation8], 4
      %s68 = int_to_ptr.vmem [resolvable:$true] %s67
      %70 = dma.hbm_to_vmem [thread:$0]  %s5, 32, %s68, [#allocation9]
    $region25: #{vae_forward.1} parent=1 // pred_fallthru
      _
    // Predicated region
    $region26: #{vae_forward.1} parent=1 // pred_check
      _
    $region27: #{vae_forward.1} parent=1 // pred_check_branch
      %72 = sbr.rel (0) target = $region29
    $region28: #{vae_forward.1} parent=1 // pred_region
      %s74 = ssub.s32 5120, 5120
      %75 = vsyncadd [#allocation9], %s74
      %s76 = sshll.u32 [#allocation10], 4
      %s77 = int_to_ptr.vmem [resolvable:$true] %s76
      %82 = dma.hbm_to_vmem [thread:$0]  %s6, 5120, %s77, [#allocation9], 320, 320, 20
    $region29: #{vae_forward.1} parent=1 // pred_fallthru
      _
    // Predicated region
    $region30: #{vae_forward.1} parent=1 // pred_check
      _
    $region31: #{vae_forward.1} parent=1 // pred_check_branch
      %84 = sbr.rel (0) target = $region33
    $region32: #{vae_forward.1} parent=1 // pred_region
      %s86 = ssub.s32 80, 80
      %87 = vsyncadd [#allocation12], %s86
      %s89 = sshll.u32 [#allocation11], 4
      %s90 = int_to_ptr.vmem [resolvable:$true] %s89
      %92 = dma.hbm_to_vmem [thread:$0]  %s7, 80, %s90, [#allocation12]
    $region33: #{vae_forward.1} parent=1 // pred_fallthru
      _
    // Predicated region
    $region34: #{vae_forward.1} parent=1 // pred_check
      _
    $region35: #{vae_forward.1} parent=1 // pred_check_branch
      %94 = sbr.rel (0) target = $region37
    $region36: #{vae_forward.1} parent=1 // pred_region
      %s96 = ssub.s32 35840, 35840
      %97 = vsyncadd [#allocation12], %s96
      %s98 = sshll.u32 [#allocation13], 4
      %s99 = int_to_ptr.vmem [resolvable:$true] %s98
      %104 = dma.hbm_to_vmem [thread:$0]  %s8, 35840, %s99, [#allocation12], 448, 448, 28
    $region37: #{vae_forward.1} parent=1 // pred_fallthru
      _
    // Predicated region
    $region38: #{vae_forward.1} parent=1 // pred_check
      _
    $region39: #{vae_forward.1} parent=1 // pred_check_branch
      %106 = sbr.rel (0) target = $region41
    $region40: #{vae_forward.1} parent=1 // pred_region
      %s108 = ssub.s32 112, 112
      %109 = vsyncadd [#allocation15], %s108
      %s111 = sshll.u32 [#allocation14], 4
      %s112 = int_to_ptr.vmem [resolvable:$true] %s111
      %114 = dma.hbm_to_vmem [thread:$0]  %s9, 112, %s112, [#allocation15]
    $region41: #{vae_forward.1} parent=1 // pred_fallthru
      _
    // Predicated region
    $region42: #{vae_forward.1} parent=1 // pred_check
      _
    $region43: #{vae_forward.1} parent=1 // pred_check_branch
      %116 = sbr.rel (0) target = $region45
    $region44: #{vae_forward.1} parent=1 // pred_region
      %117 = dma.done [#allocation3], 35840
    $region45: #{vae_forward.1} parent=1 // pred_fallthru
      _
    // Predicated region
    $region46: #{vae_forward.1} parent=1 // pred_check
      _
    $region47: #{vae_forward.1} parent=1 // pred_check_branch
      %119 = sbr.rel (0) target = $region49
    $region48: #{vae_forward.1} parent=1 // pred_region
      %120 = dma.done [#allocation6], 80
    $region49: #{vae_forward.1} parent=1 // pred_fallthru
      _
    // Predicated region
    $region50: #{vae_forward.1} parent=1 // pred_check
      _
    $region51: #{vae_forward.1} parent=1 // pred_check_branch
      %122 = sbr.rel (0) target = $region53
    $region52: #{vae_forward.1} parent=1 // pred_region
      %123 = dma.done [#allocation6], 10240
    $region53: #{vae_forward.1} parent=1 // pred_fallthru
      _
    // Predicated region
    $region54: #{vae_forward.1} parent=1 // pred_check
      _
    $region55: #{vae_forward.1} parent=1 // pred_check_branch
      %125 = sbr.rel (0) target = $region57
    $region56: #{vae_forward.1} parent=1 // pred_region
      %126 = dma.done [#allocation9], 32
    $region57: #{vae_forward.1} parent=1 // pred_fallthru
      _
    // Predicated region
    $region58: #{vae_forward.1} parent=1 // pred_check
      _
    $region59: #{vae_forward.1} parent=1 // pred_check_branch
      %128 = sbr.rel (0) target = $region61
    $region60: #{vae_forward.1} parent=1 // pred_region
      %129 = dma.done [#allocation9], 5120
    $region61: #{vae_forward.1} parent=1 // pred_fallthru
      _
    // Predicated region
    $region62: #{vae_forward.1} parent=1 // pred_check
      _
    $region63: #{vae_forward.1} parent=1 // pred_check_branch
      %131 = sbr.rel (0) target = $region65
    $region64: #{vae_forward.1} parent=1 // pred_region
      %132 = dma.done [#allocation12], 80
    $region65: #{vae_forward.1} parent=1 // pred_fallthru
      _
    // Predicated region
    $region66: #{vae_forward.1} parent=1 // pred_check
      _
    $region67: #{vae_forward.1} parent=1 // pred_check_branch
      %134 = sbr.rel (0) target = $region69
    $region68: #{vae_forward.1} parent=1 // pred_region
      %135 = dma.done [#allocation12], 35840
    $region69: #{vae_forward.1} parent=1 // pred_fallthru
      _
    // Predicated region
    $region70: #{vae_forward.1} parent=1 // pred_check
      _
    $region71: #{vae_forward.1} parent=1 // pred_check_branch
      %137 = sbr.rel (0) target = $region73
    $region72: #{vae_forward.1} parent=1 // pred_region
      %138 = dma.done [#allocation15], 112
    $region73: #{vae_forward.1} parent=1 // pred_fallthru
      _
    %v140 = vld [vmem:[%s0] sm:$0xff]
    %v141 = vld [vmem:[%s0 + $0x8] sm:$0xff]
    %v142 = vld [vmem:[%s0 + $0x10] sm:$0xff]
    %v143 = vld [vmem:[%s0 + $0x18] sm:$0xf]
    %v144 = vld [vmem:[#allocation2] sm:$0xff]
    %v145 = vld [vmem:[#allocation2 + $0x8] sm:$0xff]
    %v146 = vld [vmem:[#allocation2 + $0x10] sm:$0xf]
    %v147 = vld [vmem:[#allocation2 + $0x14] sm:$0xff]
    %v148 = vld [vmem:[#allocation2 + $0x1c] sm:$0xff]
    %v149 = vld [vmem:[#allocation2 + $0x24] sm:$0xf]
    %v150 = vld [vmem:[#allocation2 + $0x28] sm:$0xff]
    %v151 = vld [vmem:[#allocation2 + $0x30] sm:$0xff]
    %v152 = vld [vmem:[#allocation2 + $0x38] sm:$0xf]
    %v153 = vld [vmem:[#allocation2 + $0x3c] sm:$0xff]
    %v154 = vld [vmem:[#allocation2 + $0x44] sm:$0xff]
    %v155 = vld [vmem:[#allocation2 + $0x4c] sm:$0xf]
    %v156 = vld [vmem:[#allocation2 + $0x50] sm:$0xff]
    %v157 = vld [vmem:[#allocation2 + $0x58] sm:$0xff]
    %v158 = vld [vmem:[#allocation2 + $0x60] sm:$0xf]
    %v159 = vld [vmem:[#allocation2 + $0x64] sm:$0xff]
    %v160 = vld [vmem:[#allocation2 + $0x6c] sm:$0xff]
    %v161 = vld [vmem:[#allocation2 + $0x74] sm:$0xf]
    %v162 = vld [vmem:[#allocation2 + $0x78] sm:$0xff]
    %v163 = vld [vmem:[#allocation2 + $0x80] sm:$0xff]
    %v164 = vld [vmem:[#allocation2 + $0x88] sm:$0xf]
    %v165 = vld [vmem:[#allocation2 + $0x8c] sm:$0xff]
    %v166 = vld [vmem:[#allocation2 + $0x94] sm:$0xff]
    %v167 = vld [vmem:[#allocation2 + $0x9c] sm:$0xf]
    %v168 = vld [vmem:[#allocation2 + $0xa0] sm:$0xff]
    %v169 = vld [vmem:[#allocation2 + $0xa8] sm:$0xff]
    %v170 = vld [vmem:[#allocation2 + $0xb0] sm:$0xf]
    %v171 = vld [vmem:[#allocation2 + $0xb4] sm:$0xff]
    %v172 = vld [vmem:[#allocation2 + $0xbc] sm:$0xff]
    %v173 = vld [vmem:[#allocation2 + $0xc4] sm:$0xf]
    %v174 = vld [vmem:[#allocation2 + $0xc8] sm:$0xff]
    %v175 = vld [vmem:[#allocation2 + $0xd0] sm:$0xff]
    %v176 = vld [vmem:[#allocation2 + $0xd8] sm:$0xf]
    %v177 = vld [vmem:[#allocation2 + $0xdc] sm:$0xff]
    %v178 = vld [vmem:[#allocation2 + $0xe4] sm:$0xff]
    %v179 = vld [vmem:[#allocation2 + $0xec] sm:$0xf]
    %v180 = vld [vmem:[#allocation2 + $0xf0] sm:$0xff]
    %v181 = vld [vmem:[#allocation2 + $0xf8] sm:$0xff]
    %v182 = vld [vmem:[#allocation2 + $0x100] sm:$0xf]
    %v183 = vld [vmem:[#allocation2 + $0x104] sm:$0xff]
    %v184 = vld [vmem:[#allocation2 + $0x10c] sm:$0xff]
    %v185 = vld [vmem:[#allocation2 + $0x114] sm:$0xf]
    %v186 = vld [vmem:[#allocation2 + $0x118] sm:$0xff]
    %v187 = vld [vmem:[#allocation2 + $0x120] sm:$0xff]
    %v188 = vld [vmem:[#allocation2 + $0x128] sm:$0xf]
    %v189 = vld [vmem:[#allocation2 + $0x12c] sm:$0xff]
    %v190 = vld [vmem:[#allocation2 + $0x134] sm:$0xff]
    %v191 = vld [vmem:[#allocation2 + $0x13c] sm:$0xf]
    %v192 = vld [vmem:[#allocation2 + $0x140] sm:$0xff]
    %v193 = vld [vmem:[#allocation2 + $0x148] sm:$0xff]
    %v194 = vld [vmem:[#allocation2 + $0x150] sm:$0xf]
    %v195 = vld [vmem:[#allocation2 + $0x154] sm:$0xff]
    %v196 = vld [vmem:[#allocation2 + $0x15c] sm:$0xff]
    %v197 = vld [vmem:[#allocation2 + $0x164] sm:$0xf]
    %v198 = vld [vmem:[#allocation2 + $0x168] sm:$0xff]
    %v199 = vld [vmem:[#allocation2 + $0x170] sm:$0xff]
    %v200 = vld [vmem:[#allocation2 + $0x178] sm:$0xf]
    %v201 = vld [vmem:[#allocation2 + $0x17c] sm:$0xff]
    %v202 = vld [vmem:[#allocation2 + $0x184] sm:$0xff]
    %v203 = vld [vmem:[#allocation2 + $0x18c] sm:$0xf]
    %v204 = vld [vmem:[#allocation2 + $0x190] sm:$0xff]
    %v205 = vld [vmem:[#allocation2 + $0x198] sm:$0xff]
    %v206 = vld [vmem:[#allocation2 + $0x1a0] sm:$0xf]
    %v207 = vld [vmem:[#allocation2 + $0x1a4] sm:$0xff]
    %v208 = vld [vmem:[#allocation2 + $0x1ac] sm:$0xff]
    %v209 = vld [vmem:[#allocation2 + $0x1b4] sm:$0xf]
    %v210 = vld [vmem:[#allocation2 + $0x1b8] sm:$0xff]
    %v211 = vld [vmem:[#allocation2 + $0x1c0] sm:$0xff]
    %v212 = vld [vmem:[#allocation2 + $0x1c8] sm:$0xf]
    %v213 = vld [vmem:[#allocation2 + $0x1cc] sm:$0xff]
    %v214 = vld [vmem:[#allocation2 + $0x1d4] sm:$0xff]
    %v215 = vld [vmem:[#allocation2 + $0x1dc] sm:$0xf]
    %v216 = vld [vmem:[#allocation2 + $0x1e0] sm:$0xff]
    %v217 = vld [vmem:[#allocation2 + $0x1e8] sm:$0xff]
    %v218 = vld [vmem:[#allocation2 + $0x1f0] sm:$0xf]
    %v219 = vld [vmem:[#allocation2 + $0x1f4] sm:$0xff]
    %v220 = vld [vmem:[#allocation2 + $0x1fc] sm:$0xff]
    %v221 = vld [vmem:[#allocation2 + $0x204] sm:$0xf]
    %v222 = vld [vmem:[#allocation2 + $0x208] sm:$0xff]
    %v223 = vld [vmem:[#allocation2 + $0x210] sm:$0xff]
    %v224 = vld [vmem:[#allocation2 + $0x218] sm:$0xf]
    %v225 = vld [vmem:[#allocation2 + $0x21c] sm:$0xff]
    %v226 = vld [vmem:[#allocation2 + $0x224] sm:$0xff]
    %v227 = vld [vmem:[#allocation2 + $0x22c] sm:$0xf]
    %v228 = vld [vmem:[#allocation2 + $0x230] sm:$0xff]
    %v229 = vld [vmem:[#allocation2 + $0x238] sm:$0xff]
    %v230 = vld [vmem:[#allocation2 + $0x240] sm:$0xf]
    %v231 = vld [vmem:[#allocation2 + $0x244] sm:$0xff]
    %v232 = vld [vmem:[#allocation2 + $0x24c] sm:$0xff]
    %v233 = vld [vmem:[#allocation2 + $0x254] sm:$0xf]
    %v234 = vld [vmem:[#allocation2 + $0x258] sm:$0xff]
    %v235 = vld [vmem:[#allocation2 + $0x260] sm:$0xff]
    %v236 = vld [vmem:[#allocation2 + $0x268] sm:$0xf]
    %v237 = vld [vmem:[#allocation2 + $0x26c] sm:$0xff]
    %v238 = vld [vmem:[#allocation2 + $0x274] sm:$0xff]
    %v239 = vld [vmem:[#allocation2 + $0x27c] sm:$0xf]
    %v240 = vld [vmem:[#allocation2 + $0x280] sm:$0xff]
    %v241 = vld [vmem:[#allocation2 + $0x288] sm:$0xff]
    %v242 = vld [vmem:[#allocation2 + $0x290] sm:$0xf]
    %v243 = vld [vmem:[#allocation2 + $0x294] sm:$0xff]
    %v244 = vld [vmem:[#allocation2 + $0x29c] sm:$0xff]
    %v245 = vld [vmem:[#allocation2 + $0x2a4] sm:$0xf]
    %v246 = vld [vmem:[#allocation2 + $0x2a8] sm:$0xff]
    %v247 = vld [vmem:[#allocation2 + $0x2b0] sm:$0xff]
    %v248 = vld [vmem:[#allocation2 + $0x2b8] sm:$0xf]
    %v249 = vld [vmem:[#allocation2 + $0x2bc] sm:$0xff]
    %v250 = vld [vmem:[#allocation2 + $0x2c4] sm:$0xff]
    %v251 = vld [vmem:[#allocation2 + $0x2cc] sm:$0xf]
    %v252 = vld [vmem:[#allocation2 + $0x2d0] sm:$0xff]
    %v253 = vld [vmem:[#allocation2 + $0x2d8] sm:$0xff]
    %v254 = vld [vmem:[#allocation2 + $0x2e0] sm:$0xf]
    %v255 = vld [vmem:[#allocation2 + $0x2e4] sm:$0xff]
    %v256 = vld [vmem:[#allocation2 + $0x2ec] sm:$0xff]
    %v257 = vld [vmem:[#allocation2 + $0x2f4] sm:$0xf]
    %v258 = vld [vmem:[#allocation2 + $0x2f8] sm:$0xff]
    %v259 = vld [vmem:[#allocation2 + $0x300] sm:$0xff]
    %v260 = vld [vmem:[#allocation2 + $0x308] sm:$0xf]
    %v261 = vld [vmem:[#allocation2 + $0x30c] sm:$0xff]
    %v262 = vld [vmem:[#allocation2 + $0x314] sm:$0xff]
    %v263 = vld [vmem:[#allocation2 + $0x31c] sm:$0xf]
    %v264 = vld [vmem:[#allocation2 + $0x320] sm:$0xff]
    %v265 = vld [vmem:[#allocation2 + $0x328] sm:$0xff]
    %v266 = vld [vmem:[#allocation2 + $0x330] sm:$0xf]
    %v267 = vld [vmem:[#allocation2 + $0x334] sm:$0xff]
    %v268 = vld [vmem:[#allocation2 + $0x33c] sm:$0xff]
    %v269 = vld [vmem:[#allocation2 + $0x344] sm:$0xf]
    %v270 = vld [vmem:[#allocation2 + $0x348] sm:$0xff]
    %v271 = vld [vmem:[#allocation2 + $0x350] sm:$0xff]
    %v272 = vld [vmem:[#allocation2 + $0x358] sm:$0xf]
    %v273 = vld [vmem:[#allocation2 + $0x35c] sm:$0xff]
    %v274 = vld [vmem:[#allocation2 + $0x364] sm:$0xff]
    %v275 = vld [vmem:[#allocation2 + $0x36c] sm:$0xf]
    %v276 = vld [vmem:[#allocation2 + $0x370] sm:$0xff]
    %v277 = vld [vmem:[#allocation2 + $0x378] sm:$0xff]
    %v278 = vld [vmem:[#allocation2 + $0x380] sm:$0xf]
    %v279 = vld [vmem:[#allocation2 + $0x384] sm:$0xff]
    %v280 = vld [vmem:[#allocation2 + $0x38c] sm:$0xff]
    %v281 = vld [vmem:[#allocation2 + $0x394] sm:$0xf]
    %v282 = vld [vmem:[#allocation2 + $0x398] sm:$0xff]
    %v283 = vld [vmem:[#allocation2 + $0x3a0] sm:$0xff]
    %v284 = vld [vmem:[#allocation2 + $0x3a8] sm:$0xf]
    %v285 = vld [vmem:[#allocation2 + $0x3ac] sm:$0xff]
    %v286 = vld [vmem:[#allocation2 + $0x3b4] sm:$0xff]
    %v287 = vld [vmem:[#allocation2 + $0x3bc] sm:$0xf]
    %v288 = vld [vmem:[#allocation2 + $0x3c0] sm:$0xff]
    %v289 = vld [vmem:[#allocation2 + $0x3c8] sm:$0xff]
    %v290 = vld [vmem:[#allocation2 + $0x3d0] sm:$0xf]
    %v291 = vld [vmem:[#allocation2 + $0x3d4] sm:$0xff]
    %v292 = vld [vmem:[#allocation2 + $0x3dc] sm:$0xff]
    %v293 = vld [vmem:[#allocation2 + $0x3e4] sm:$0xf]
    %v294 = vld [vmem:[#allocation2 + $0x3e8] sm:$0xff]
    %v295 = vld [vmem:[#allocation2 + $0x3f0] sm:$0xff]
    %v296 = vld [vmem:[#allocation2 + $0x3f8] sm:$0xf]
    %v297 = vld [vmem:[#allocation2 + $0x3fc] sm:$0xff]
    %v298 = vld [vmem:[#allocation2 + $0x404] sm:$0xff]
    %v299 = vld [vmem:[#allocation2 + $0x40c] sm:$0xf]
    %v300 = vld [vmem:[#allocation2 + $0x410] sm:$0xff]
    %v301 = vld [vmem:[#allocation2 + $0x418] sm:$0xff]
    %v302 = vld [vmem:[#allocation2 + $0x420] sm:$0xf]
    %v303 = vld [vmem:[#allocation2 + $0x424] sm:$0xff]
    %v304 = vld [vmem:[#allocation2 + $0x42c] sm:$0xff]
    %v305 = vld [vmem:[#allocation2 + $0x434] sm:$0xf]
    %v306 = vld [vmem:[#allocation2 + $0x438] sm:$0xff]
    %v307 = vld [vmem:[#allocation2 + $0x440] sm:$0xff]
    %v308 = vld [vmem:[#allocation2 + $0x448] sm:$0xf]
    %v309 = vld [vmem:[#allocation2 + $0x44c] sm:$0xff]
    %v310 = vld [vmem:[#allocation2 + $0x454] sm:$0xff]
    %v311 = vld [vmem:[#allocation2 + $0x45c] sm:$0xf]
    %v312 = vld [vmem:[#allocation2 + $0x460] sm:$0xff]
    %v313 = vld [vmem:[#allocation2 + $0x468] sm:$0xff]
    %v314 = vld [vmem:[#allocation2 + $0x470] sm:$0xf]
    %v315 = vld [vmem:[#allocation2 + $0x474] sm:$0xff]
    %v316 = vld [vmem:[#allocation2 + $0x47c] sm:$0xff]
    %v317 = vld [vmem:[#allocation2 + $0x484] sm:$0xf]
    %v318 = vld [vmem:[#allocation2 + $0x488] sm:$0xff]
    %v319 = vld [vmem:[#allocation2 + $0x490] sm:$0xff]
    %v320 = vld [vmem:[#allocation2 + $0x498] sm:$0xf]
    %v321 = vld [vmem:[#allocation2 + $0x49c] sm:$0xff]
    %v322 = vld [vmem:[#allocation2 + $0x4a4] sm:$0xff]
    %v323 = vld [vmem:[#allocation2 + $0x4ac] sm:$0xf]
    %v324 = vld [vmem:[#allocation2 + $0x4b0] sm:$0xff]
    %v325 = vld [vmem:[#allocation2 + $0x4b8] sm:$0xff]
    %v326 = vld [vmem:[#allocation2 + $0x4c0] sm:$0xf]
    %v327 = vld [vmem:[#allocation2 + $0x4c4] sm:$0xff]
    %v328 = vld [vmem:[#allocation2 + $0x4cc] sm:$0xff]
    %v329 = vld [vmem:[#allocation2 + $0x4d4] sm:$0xf]
    %v330 = vld [vmem:[#allocation2 + $0x4d8] sm:$0xff]
    %v331 = vld [vmem:[#allocation2 + $0x4e0] sm:$0xff]
    %v332 = vld [vmem:[#allocation2 + $0x4e8] sm:$0xf]
    %v333 = vld [vmem:[#allocation2 + $0x4ec] sm:$0xff]
    %v334 = vld [vmem:[#allocation2 + $0x4f4] sm:$0xff]
    %v335 = vld [vmem:[#allocation2 + $0x4fc] sm:$0xf]
    %v336 = vld [vmem:[#allocation2 + $0x500] sm:$0xff]
    %v337 = vld [vmem:[#allocation2 + $0x508] sm:$0xff]
    %v338 = vld [vmem:[#allocation2 + $0x510] sm:$0xf]
    %v339 = vld [vmem:[#allocation2 + $0x514] sm:$0xff]
    %v340 = vld [vmem:[#allocation2 + $0x51c] sm:$0xff]
    %v341 = vld [vmem:[#allocation2 + $0x524] sm:$0xf]
    %v342 = vld [vmem:[#allocation2 + $0x528] sm:$0xff]
    %v343 = vld [vmem:[#allocation2 + $0x530] sm:$0xff]
    %v344 = vld [vmem:[#allocation2 + $0x538] sm:$0xf]
    %v345 = vld [vmem:[#allocation2 + $0x53c] sm:$0xff]
    %v346 = vld [vmem:[#allocation2 + $0x544] sm:$0xff]
    %v347 = vld [vmem:[#allocation2 + $0x54c] sm:$0xf]
    %v348 = vld [vmem:[#allocation2 + $0x550] sm:$0xff]
    %v349 = vld [vmem:[#allocation2 + $0x558] sm:$0xff]
    %v350 = vld [vmem:[#allocation2 + $0x560] sm:$0xf]
    %v351 = vld [vmem:[#allocation2 + $0x564] sm:$0xff]
    %v352 = vld [vmem:[#allocation2 + $0x56c] sm:$0xff]
    %v353 = vld [vmem:[#allocation2 + $0x574] sm:$0xf]
    %v354 = vld [vmem:[#allocation2 + $0x578] sm:$0xff]
    %v355 = vld [vmem:[#allocation2 + $0x580] sm:$0xff]
    %v356 = vld [vmem:[#allocation2 + $0x588] sm:$0xf]
    %v357 = vld [vmem:[#allocation2 + $0x58c] sm:$0xff]
    %v358 = vld [vmem:[#allocation2 + $0x594] sm:$0xff]
    %v359 = vld [vmem:[#allocation2 + $0x59c] sm:$0xf]
    %v360 = vld [vmem:[#allocation2 + $0x5a0] sm:$0xff]
    %v361 = vld [vmem:[#allocation2 + $0x5a8] sm:$0xff]
    %v362 = vld [vmem:[#allocation2 + $0x5b0] sm:$0xf]
    %v363 = vld [vmem:[#allocation2 + $0x5b4] sm:$0xff]
    %v364 = vld [vmem:[#allocation2 + $0x5bc] sm:$0xff]
    %v365 = vld [vmem:[#allocation2 + $0x5c4] sm:$0xf]
    %v366 = vld [vmem:[#allocation2 + $0x5c8] sm:$0xff]
    %v367 = vld [vmem:[#allocation2 + $0x5d0] sm:$0xff]
    %v368 = vld [vmem:[#allocation2 + $0x5d8] sm:$0xf]
    %v369 = vld [vmem:[#allocation2 + $0x5dc] sm:$0xff]
    %v370 = vld [vmem:[#allocation2 + $0x5e4] sm:$0xff]
    %v371 = vld [vmem:[#allocation2 + $0x5ec] sm:$0xf]
    %v372 = vld [vmem:[#allocation2 + $0x5f0] sm:$0xff]
    %v373 = vld [vmem:[#allocation2 + $0x5f8] sm:$0xff]
    %v374 = vld [vmem:[#allocation2 + $0x600] sm:$0xf]
    %v375 = vld [vmem:[#allocation2 + $0x604] sm:$0xff]
    %v376 = vld [vmem:[#allocation2 + $0x60c] sm:$0xff]
    %v377 = vld [vmem:[#allocation2 + $0x614] sm:$0xf]
    %v378 = vld [vmem:[#allocation2 + $0x618] sm:$0xff]
    %v379 = vld [vmem:[#allocation2 + $0x620] sm:$0xff]
    %v380 = vld [vmem:[#allocation2 + $0x628] sm:$0xf]
    %v381 = vld [vmem:[#allocation2 + $0x62c] sm:$0xff]
    %v382 = vld [vmem:[#allocation2 + $0x634] sm:$0xff]
    %v383 = vld [vmem:[#allocation2 + $0x63c] sm:$0xf]
    %v384 = vld [vmem:[#allocation2 + $0x640] sm:$0xff]
    %v385 = vld [vmem:[#allocation2 + $0x648] sm:$0xff]
    %v386 = vld [vmem:[#allocation2 + $0x650] sm:$0xf]
    %v387 = vld [vmem:[#allocation2 + $0x654] sm:$0xff]
    %v388 = vld [vmem:[#allocation2 + $0x65c] sm:$0xff]
    %v389 = vld [vmem:[#allocation2 + $0x664] sm:$0xf]
    %v390 = vld [vmem:[#allocation2 + $0x668] sm:$0xff]
    %v391 = vld [vmem:[#allocation2 + $0x670] sm:$0xff]
    %v392 = vld [vmem:[#allocation2 + $0x678] sm:$0xf]
    %v393 = vld [vmem:[#allocation2 + $0x67c] sm:$0xff]
    %v394 = vld [vmem:[#allocation2 + $0x684] sm:$0xff]
    %v395 = vld [vmem:[#allocation2 + $0x68c] sm:$0xf]
    %v396 = vld [vmem:[#allocation2 + $0x690] sm:$0xff]
    %v397 = vld [vmem:[#allocation2 + $0x698] sm:$0xff]
    %v398 = vld [vmem:[#allocation2 + $0x6a0] sm:$0xf]
    %v399 = vld [vmem:[#allocation2 + $0x6a4] sm:$0xff]
    %v400 = vld [vmem:[#allocation2 + $0x6ac] sm:$0xff]
    %v401 = vld [vmem:[#allocation2 + $0x6b4] sm:$0xf]
    %v402 = vld [vmem:[#allocation2 + $0x6b8] sm:$0xff]
    %v403 = vld [vmem:[#allocation2 + $0x6c0] sm:$0xff]
    %v404 = vld [vmem:[#allocation2 + $0x6c8] sm:$0xf]
    %v405 = vld [vmem:[#allocation2 + $0x6cc] sm:$0xff]
    %v406 = vld [vmem:[#allocation2 + $0x6d4] sm:$0xff]
    %v407 = vld [vmem:[#allocation2 + $0x6dc] sm:$0xf]
    %v408 = vld [vmem:[#allocation2 + $0x6e0] sm:$0xff]
    %v409 = vld [vmem:[#allocation2 + $0x6e8] sm:$0xff]
    %v410 = vld [vmem:[#allocation2 + $0x6f0] sm:$0xf]
    %v411 = vld [vmem:[#allocation2 + $0x6f4] sm:$0xff]
    %v412 = vld [vmem:[#allocation2 + $0x6fc] sm:$0xff]
    %v413 = vld [vmem:[#allocation2 + $0x704] sm:$0xf]
    %v414 = vld [vmem:[#allocation2 + $0x708] sm:$0xff]
    %v415 = vld [vmem:[#allocation2 + $0x710] sm:$0xff]
    %v416 = vld [vmem:[#allocation2 + $0x718] sm:$0xf]
    %v417 = vld [vmem:[#allocation2 + $0x71c] sm:$0xff]
    %v418 = vld [vmem:[#allocation2 + $0x724] sm:$0xff]
    %v419 = vld [vmem:[#allocation2 + $0x72c] sm:$0xf]
    %v420 = vld [vmem:[#allocation2 + $0x730] sm:$0xff]
    %v421 = vld [vmem:[#allocation2 + $0x738] sm:$0xff]
    %v422 = vld [vmem:[#allocation2 + $0x740] sm:$0xf]
    %v423 = vld [vmem:[#allocation2 + $0x744] sm:$0xff]
    %v424 = vld [vmem:[#allocation2 + $0x74c] sm:$0xff]
    %v425 = vld [vmem:[#allocation2 + $0x754] sm:$0xf]
    %v426 = vld [vmem:[#allocation2 + $0x758] sm:$0xff]
    %v427 = vld [vmem:[#allocation2 + $0x760] sm:$0xff]
    %v428 = vld [vmem:[#allocation2 + $0x768] sm:$0xf]
    %v429 = vld [vmem:[#allocation2 + $0x76c] sm:$0xff]
    %v430 = vld [vmem:[#allocation2 + $0x774] sm:$0xff]
    %v431 = vld [vmem:[#allocation2 + $0x77c] sm:$0xf]
    %v432 = vld [vmem:[#allocation2 + $0x780] sm:$0xff]
    %v433 = vld [vmem:[#allocation2 + $0x788] sm:$0xff]
    %v434 = vld [vmem:[#allocation2 + $0x790] sm:$0xf]
    %v435 = vld [vmem:[#allocation2 + $0x794] sm:$0xff]
    %v436 = vld [vmem:[#allocation2 + $0x79c] sm:$0xff]
    %v437 = vld [vmem:[#allocation2 + $0x7a4] sm:$0xf]
    %v438 = vld [vmem:[#allocation2 + $0x7a8] sm:$0xff]
    %v439 = vld [vmem:[#allocation2 + $0x7b0] sm:$0xff]
    %v440 = vld [vmem:[#allocation2 + $0x7b8] sm:$0xf]
    %v441 = vld [vmem:[#allocation2 + $0x7bc] sm:$0xff]
    %v442 = vld [vmem:[#allocation2 + $0x7c4] sm:$0xff]
    %v443 = vld [vmem:[#allocation2 + $0x7cc] sm:$0xf]
    %v444 = vld [vmem:[#allocation2 + $0x7d0] sm:$0xff]
    %v445 = vld [vmem:[#allocation2 + $0x7d8] sm:$0xff]
    %v446 = vld [vmem:[#allocation2 + $0x7e0] sm:$0xf]
    %v447 = vld [vmem:[#allocation2 + $0x7e4] sm:$0xff]
    %v448 = vld [vmem:[#allocation2 + $0x7ec] sm:$0xff]
    %v449 = vld [vmem:[#allocation2 + $0x7f4] sm:$0xf]
    %v450 = vld [vmem:[#allocation2 + $0x7f8] sm:$0xff]
    %v451 = vld [vmem:[#allocation2 + $0x800] sm:$0xff]
    %v452 = vld [vmem:[#allocation2 + $0x808] sm:$0xf]
    %v453 = vld [vmem:[#allocation2 + $0x80c] sm:$0xff]
    %v454 = vld [vmem:[#allocation2 + $0x814] sm:$0xff]
    %v455 = vld [vmem:[#allocation2 + $0x81c] sm:$0xf]
    %v456 = vld [vmem:[#allocation2 + $0x820] sm:$0xff]
    %v457 = vld [vmem:[#allocation2 + $0x828] sm:$0xff]
    %v458 = vld [vmem:[#allocation2 + $0x830] sm:$0xf]
    %v459 = vld [vmem:[#allocation2 + $0x834] sm:$0xff]
    %v460 = vld [vmem:[#allocation2 + $0x83c] sm:$0xff]
    %v461 = vld [vmem:[#allocation2 + $0x844] sm:$0xf]
    %v462 = vld [vmem:[#allocation2 + $0x848] sm:$0xff]
    %v463 = vld [vmem:[#allocation2 + $0x850] sm:$0xff]
    %v464 = vld [vmem:[#allocation2 + $0x858] sm:$0xf]
    %v465 = vld [vmem:[#allocation2 + $0x85c] sm:$0xff]
    %v466 = vld [vmem:[#allocation2 + $0x864] sm:$0xff]
    %v467 = vld [vmem:[#allocation2 + $0x86c] sm:$0xf]
    %v468 = vld [vmem:[#allocation2 + $0x870] sm:$0xff]
    %v469 = vld [vmem:[#allocation2 + $0x878] sm:$0xff]
    %v470 = vld [vmem:[#allocation2 + $0x880] sm:$0xf]
    %v471 = vld [vmem:[#allocation2 + $0x884] sm:$0xff]
    %v472 = vld [vmem:[#allocation2 + $0x88c] sm:$0xff]
    %v473 = vld [vmem:[#allocation2 + $0x894] sm:$0xf]
    %v474 = vld [vmem:[#allocation2 + $0x898] sm:$0xff]
    %v475 = vld [vmem:[#allocation2 + $0x8a0] sm:$0xff]
    %v476 = vld [vmem:[#allocation2 + $0x8a8] sm:$0xf]
    %v477 = vld [vmem:[#allocation2 + $0x8ac] sm:$0xff]
    %v478 = vld [vmem:[#allocation2 + $0x8b4] sm:$0xff]
    %v479 = vld [vmem:[#allocation2 + $0x8bc] sm:$0xf]
    %v480 = vld [vmem:[#allocation5] sm:$0x1f]
    %v482 = vlaneseq
    %v483 = vshrl.u32 %v482, 7
    %v484 = vsub.s32 0, %v483
    %v485 = vrot.slane %v480, %v484
    %v486 = vlaneseq
    %v487 = vshrl.u32 %v486, 7
    %v488 = vsub.s32 1, %v487
    %v489 = vrot.slane %v480, %v488
    %v490 = vlaneseq
    %v491 = vshrl.u32 %v490, 7
    %v492 = vsub.s32 2, %v491
    %v493 = vrot.slane %v480, %v492
    %v494 = vlaneseq
    %v495 = vshrl.u32 %v494, 7
    %v496 = vsub.s32 3, %v495
    %v497 = vrot.slane %v480, %v496
    %v498 = vlaneseq
    %v499 = vshrl.u32 %v498, 7
    %v500 = vsub.s32 4, %v499
    %v501 = vrot.slane %v480, %v500
    %v511 = vunpack.c.l.b16 %v140
    %v512 = vunpack.c.h.b16 %v140
    %v513 = vunpack.c.l.b16 %v141
    %v514 = vunpack.c.h.b16 %v141
    %v515 = vunpack.c.l.b16 %v142
    %v516 = vunpack.c.h.b16 %v142
    %v517 = vunpack.c.l.b16 %v143
    %v518 = vpack.c.b16 %v511, %v511
    %v519 = vpack.c.b16 %v512, %v512
    %v520 = vpack.c.b16 %v513, %v513
    %v521 = vpack.c.b16 %v514, %v514
    %v522 = vpack.c.b16 %v515, %v515
    %v523 = vpack.c.b16 %v516, %v516
    %v524 = vpack.c.b16 %v517, %v517
    %v868 = vunpack.c.l.b16 %v144
    %v869 = vunpack.c.h.b16 %v144
    %v870 = vunpack.c.l.b16 %v145
    %v871 = vunpack.c.h.b16 %v145
    %v872 = vunpack.c.l.b16 %v146
    %v873 = vunpack.c.l.b16 %v147
    %v874 = vunpack.c.h.b16 %v147
    %v875 = vunpack.c.l.b16 %v148
    %v876 = vunpack.c.h.b16 %v148
    %v877 = vunpack.c.l.b16 %v149
    %v878 = vunpack.c.l.b16 %v150
    %v879 = vunpack.c.h.b16 %v150
    %v880 = vunpack.c.l.b16 %v151
    %v881 = vunpack.c.h.b16 %v151
    %v882 = vunpack.c.l.b16 %v152
    %v883 = vunpack.c.l.b16 %v153
    %v884 = vunpack.c.h.b16 %v153
    %v885 = vunpack.c.l.b16 %v154
    %v886 = vunpack.c.h.b16 %v154
    %v887 = vunpack.c.l.b16 %v155
    %v888 = vunpack.c.l.b16 %v156
    %v889 = vunpack.c.h.b16 %v156
    %v890 = vunpack.c.l.b16 %v157
    %v891 = vunpack.c.h.b16 %v157
    %v892 = vunpack.c.l.b16 %v158
    %v893 = vunpack.c.l.b16 %v159
    %v894 = vunpack.c.h.b16 %v159
    %v895 = vunpack.c.l.b16 %v160
    %v896 = vunpack.c.h.b16 %v160
    %v897 = vunpack.c.l.b16 %v161
    %v898 = vunpack.c.l.b16 %v162
    %v899 = vunpack.c.h.b16 %v162
    %v900 = vunpack.c.l.b16 %v163
    %v901 = vunpack.c.h.b16 %v163
    %v902 = vunpack.c.l.b16 %v164
    %v903 = vunpack.c.l.b16 %v165
    %v904 = vunpack.c.h.b16 %v165
    %v905 = vunpack.c.l.b16 %v166
    %v906 = vunpack.c.h.b16 %v166
    %v907 = vunpack.c.l.b16 %v167
    %v908 = vunpack.c.l.b16 %v168
    %v909 = vunpack.c.h.b16 %v168
    %v910 = vunpack.c.l.b16 %v169
    %v911 = vunpack.c.h.b16 %v169
    %v912 = vunpack.c.l.b16 %v170
    %v913 = vunpack.c.l.b16 %v171
    %v914 = vunpack.c.h.b16 %v171
    %v915 = vunpack.c.l.b16 %v172
    %v916 = vunpack.c.h.b16 %v172
    %v917 = vunpack.c.l.b16 %v173
    %v918 = vunpack.c.l.b16 %v174
    %v919 = vunpack.c.h.b16 %v174
    %v920 = vunpack.c.l.b16 %v175
    %v921 = vunpack.c.h.b16 %v175
    %v922 = vunpack.c.l.b16 %v176
    %v923 = vunpack.c.l.b16 %v177
    %v924 = vunpack.c.h.b16 %v177
    %v925 = vunpack.c.l.b16 %v178
    %v926 = vunpack.c.h.b16 %v178
    %v927 = vunpack.c.l.b16 %v179
    %v928 = vunpack.c.l.b16 %v180
    %v929 = vunpack.c.h.b16 %v180
    %v930 = vunpack.c.l.b16 %v181
    %v931 = vunpack.c.h.b16 %v181
    %v932 = vunpack.c.l.b16 %v182
    %v933 = vunpack.c.l.b16 %v183
    %v934 = vunpack.c.h.b16 %v183
    %v935 = vunpack.c.l.b16 %v184
    %v936 = vunpack.c.h.b16 %v184
    %v937 = vunpack.c.l.b16 %v185
    %v938 = vunpack.c.l.b16 %v186
    %v939 = vunpack.c.h.b16 %v186
    %v940 = vunpack.c.l.b16 %v187
    %v941 = vunpack.c.h.b16 %v187
    %v942 = vunpack.c.l.b16 %v188
    %v943 = vunpack.c.l.b16 %v189
    %v944 = vunpack.c.h.b16 %v189
    %v945 = vunpack.c.l.b16 %v190
    %v946 = vunpack.c.h.b16 %v190
    %v947 = vunpack.c.l.b16 %v191
    %v948 = vunpack.c.l.b16 %v192
    %v949 = vunpack.c.h.b16 %v192
    %v950 = vunpack.c.l.b16 %v193
    %v951 = vunpack.c.h.b16 %v193
    %v952 = vunpack.c.l.b16 %v194
    %v953 = vunpack.c.l.b16 %v195
    %v954 = vunpack.c.h.b16 %v195
    %v955 = vunpack.c.l.b16 %v196
    %v956 = vunpack.c.h.b16 %v196
    %v957 = vunpack.c.l.b16 %v197
    %v958 = vunpack.c.l.b16 %v198
    %v959 = vunpack.c.h.b16 %v198
    %v960 = vunpack.c.l.b16 %v199
    %v961 = vunpack.c.h.b16 %v199
    %v962 = vunpack.c.l.b16 %v200
    %v963 = vunpack.c.l.b16 %v201
    %v964 = vunpack.c.h.b16 %v201
    %v965 = vunpack.c.l.b16 %v202
    %v966 = vunpack.c.h.b16 %v202
    %v967 = vunpack.c.l.b16 %v203
    %v968 = vunpack.c.l.b16 %v204
    %v969 = vunpack.c.h.b16 %v204
    %v970 = vunpack.c.l.b16 %v205
    %v971 = vunpack.c.h.b16 %v205
    %v972 = vunpack.c.l.b16 %v206
    %v973 = vunpack.c.l.b16 %v207
    %v974 = vunpack.c.h.b16 %v207
    %v975 = vunpack.c.l.b16 %v208
    %v976 = vunpack.c.h.b16 %v208
    %v977 = vunpack.c.l.b16 %v209
    %v978 = vunpack.c.l.b16 %v210
    %v979 = vunpack.c.h.b16 %v210
    %v980 = vunpack.c.l.b16 %v211
    %v981 = vunpack.c.h.b16 %v211
    %v982 = vunpack.c.l.b16 %v212
    %v983 = vunpack.c.l.b16 %v213
    %v984 = vunpack.c.h.b16 %v213
    %v985 = vunpack.c.l.b16 %v214
    %v986 = vunpack.c.h.b16 %v214
    %v987 = vunpack.c.l.b16 %v215
    %v988 = vunpack.c.l.b16 %v216
    %v989 = vunpack.c.h.b16 %v216
    %v990 = vunpack.c.l.b16 %v217
    %v991 = vunpack.c.h.b16 %v217
    %v992 = vunpack.c.l.b16 %v218
    %v993 = vunpack.c.l.b16 %v219
    %v994 = vunpack.c.h.b16 %v219
    %v995 = vunpack.c.l.b16 %v220
    %v996 = vunpack.c.h.b16 %v220
    %v997 = vunpack.c.l.b16 %v221
    %v998 = vunpack.c.l.b16 %v222
    %v999 = vunpack.c.h.b16 %v222
    %v1000 = vunpack.c.l.b16 %v223
    %v1001 = vunpack.c.h.b16 %v223
    %v1002 = vunpack.c.l.b16 %v224
    %v1003 = vunpack.c.l.b16 %v225
    %v1004 = vunpack.c.h.b16 %v225
    %v1005 = vunpack.c.l.b16 %v226
    %v1006 = vunpack.c.h.b16 %v226
    %v1007 = vunpack.c.l.b16 %v227
    %v1008 = vunpack.c.l.b16 %v228
    %v1009 = vunpack.c.h.b16 %v228
    %v1010 = vunpack.c.l.b16 %v229
    %v1011 = vunpack.c.h.b16 %v229
    %v1012 = vunpack.c.l.b16 %v230
    %v1013 = vunpack.c.l.b16 %v231
    %v1014 = vunpack.c.h.b16 %v231
    %v1015 = vunpack.c.l.b16 %v232
    %v1016 = vunpack.c.h.b16 %v232
    %v1017 = vunpack.c.l.b16 %v233
    %v1018 = vunpack.c.l.b16 %v234
    %v1019 = vunpack.c.h.b16 %v234
    %v1020 = vunpack.c.l.b16 %v235
    %v1021 = vunpack.c.h.b16 %v235
    %v1022 = vunpack.c.l.b16 %v236
    %v1023 = vunpack.c.l.b16 %v237
    %v1024 = vunpack.c.h.b16 %v237
    %v1025 = vunpack.c.l.b16 %v238
    %v1026 = vunpack.c.h.b16 %v238
    %v1027 = vunpack.c.l.b16 %v239
    %v1028 = vunpack.c.l.b16 %v240
    %v1029 = vunpack.c.h.b16 %v240
    %v1030 = vunpack.c.l.b16 %v241
    %v1031 = vunpack.c.h.b16 %v241
    %v1032 = vunpack.c.l.b16 %v242
    %v1033 = vunpack.c.l.b16 %v243
    %v1034 = vunpack.c.h.b16 %v243
    %v1035 = vunpack.c.l.b16 %v244
    %v1036 = vunpack.c.h.b16 %v244
    %v1037 = vunpack.c.l.b16 %v245
    %v1038 = vunpack.c.l.b16 %v246
    %v1039 = vunpack.c.h.b16 %v246
    %v1040 = vunpack.c.l.b16 %v247
    %v1041 = vunpack.c.h.b16 %v247
    %v1042 = vunpack.c.l.b16 %v248
    %v1043 = vunpack.c.l.b16 %v249
    %v1044 = vunpack.c.h.b16 %v249
    %v1045 = vunpack.c.l.b16 %v250
    %v1046 = vunpack.c.h.b16 %v250
    %v1047 = vunpack.c.l.b16 %v251
    %v1048 = vunpack.c.l.b16 %v252
    %v1049 = vunpack.c.h.b16 %v252
    %v1050 = vunpack.c.l.b16 %v253
    %v1051 = vunpack.c.h.b16 %v253
    %v1052 = vunpack.c.l.b16 %v254
    %v1053 = vunpack.c.l.b16 %v255
    %v1054 = vunpack.c.h.b16 %v255
    %v1055 = vunpack.c.l.b16 %v256
    %v1056 = vunpack.c.h.b16 %v256
    %v1057 = vunpack.c.l.b16 %v257
    %v1058 = vunpack.c.l.b16 %v258
    %v1059 = vunpack.c.h.b16 %v258
    %v1060 = vunpack.c.l.b16 %v259
    %v1061 = vunpack.c.h.b16 %v259
    %v1062 = vunpack.c.l.b16 %v260
    %v1063 = vunpack.c.l.b16 %v261
    %v1064 = vunpack.c.h.b16 %v261
    %v1065 = vunpack.c.l.b16 %v262
    %v1066 = vunpack.c.h.b16 %v262
    %v1067 = vunpack.c.l.b16 %v263
    %v1068 = vunpack.c.l.b16 %v264
    %v1069 = vunpack.c.h.b16 %v264
    %v1070 = vunpack.c.l.b16 %v265
    %v1071 = vunpack.c.h.b16 %v265
    %v1072 = vunpack.c.l.b16 %v266
    %v1073 = vunpack.c.l.b16 %v267
    %v1074 = vunpack.c.h.b16 %v267
    %v1075 = vunpack.c.l.b16 %v268
    %v1076 = vunpack.c.h.b16 %v268
    %v1077 = vunpack.c.l.b16 %v269
    %v1078 = vunpack.c.l.b16 %v270
    %v1079 = vunpack.c.h.b16 %v270
    %v1080 = vunpack.c.l.b16 %v271
    %v1081 = vunpack.c.h.b16 %v271
    %v1082 = vunpack.c.l.b16 %v272
    %v1083 = vunpack.c.l.b16 %v273
    %v1084 = vunpack.c.h.b16 %v273
    %v1085 = vunpack.c.l.b16 %v274
    %v1086 = vunpack.c.h.b16 %v274
    %v1087 = vunpack.c.l.b16 %v275
    %v1088 = vunpack.c.l.b16 %v276
    %v1089 = vunpack.c.h.b16 %v276
    %v1090 = vunpack.c.l.b16 %v277
    %v1091 = vunpack.c.h.b16 %v277
    %v1092 = vunpack.c.l.b16 %v278
    %v1093 = vunpack.c.l.b16 %v279
    %v1094 = vunpack.c.h.b16 %v279
    %v1095 = vunpack.c.l.b16 %v280
    %v1096 = vunpack.c.h.b16 %v280
    %v1097 = vunpack.c.l.b16 %v281
    %v1098 = vunpack.c.l.b16 %v282
    %v1099 = vunpack.c.h.b16 %v282
    %v1100 = vunpack.c.l.b16 %v283
    %v1101 = vunpack.c.h.b16 %v283
    %v1102 = vunpack.c.l.b16 %v284
    %v1103 = vunpack.c.l.b16 %v285
    %v1104 = vunpack.c.h.b16 %v285
    %v1105 = vunpack.c.l.b16 %v286
    %v1106 = vunpack.c.h.b16 %v286
    %v1107 = vunpack.c.l.b16 %v287
    %v1108 = vunpack.c.l.b16 %v288
    %v1109 = vunpack.c.h.b16 %v288
    %v1110 = vunpack.c.l.b16 %v289
    %v1111 = vunpack.c.h.b16 %v289
    %v1112 = vunpack.c.l.b16 %v290
    %v1113 = vunpack.c.l.b16 %v291
    %v1114 = vunpack.c.h.b16 %v291
    %v1115 = vunpack.c.l.b16 %v292
    %v1116 = vunpack.c.h.b16 %v292
    %v1117 = vunpack.c.l.b16 %v293
    %v1118 = vunpack.c.l.b16 %v294
    %v1119 = vunpack.c.h.b16 %v294
    %v1120 = vunpack.c.l.b16 %v295
    %v1121 = vunpack.c.h.b16 %v295
    %v1122 = vunpack.c.l.b16 %v296
    %v1123 = vunpack.c.l.b16 %v297
    %v1124 = vunpack.c.h.b16 %v297
    %v1125 = vunpack.c.l.b16 %v298
    %v1126 = vunpack.c.h.b16 %v298
    %v1127 = vunpack.c.l.b16 %v299
    %v1128 = vunpack.c.l.b16 %v300
    %v1129 = vunpack.c.h.b16 %v300
    %v1130 = vunpack.c.l.b16 %v301
    %v1131 = vunpack.c.h.b16 %v301
    %v1132 = vunpack.c.l.b16 %v302
    %v1133 = vunpack.c.l.b16 %v303
    %v1134 = vunpack.c.h.b16 %v303
    %v1135 = vunpack.c.l.b16 %v304
    %v1136 = vunpack.c.h.b16 %v304
    %v1137 = vunpack.c.l.b16 %v305
    %v1138 = vunpack.c.l.b16 %v306
    %v1139 = vunpack.c.h.b16 %v306
    %v1140 = vunpack.c.l.b16 %v307
    %v1141 = vunpack.c.h.b16 %v307
    %v1142 = vunpack.c.l.b16 %v308
    %v1143 = vunpack.c.l.b16 %v309
    %v1144 = vunpack.c.h.b16 %v309
    %v1145 = vunpack.c.l.b16 %v310
    %v1146 = vunpack.c.h.b16 %v310
    %v1147 = vunpack.c.l.b16 %v311
    %v1148 = vunpack.c.l.b16 %v312
    %v1149 = vunpack.c.h.b16 %v312
    %v1150 = vunpack.c.l.b16 %v313
    %v1151 = vunpack.c.h.b16 %v313
    %v1152 = vunpack.c.l.b16 %v314
    %v1153 = vunpack.c.l.b16 %v315
    %v1154 = vunpack.c.h.b16 %v315
    %v1155 = vunpack.c.l.b16 %v316
    %v1156 = vunpack.c.h.b16 %v316
    %v1157 = vunpack.c.l.b16 %v317
    %v1158 = vunpack.c.l.b16 %v318
    %v1159 = vunpack.c.h.b16 %v318
    %v1160 = vunpack.c.l.b16 %v319
    %v1161 = vunpack.c.h.b16 %v319
    %v1162 = vunpack.c.l.b16 %v320
    %v1163 = vunpack.c.l.b16 %v321
    %v1164 = vunpack.c.h.b16 %v321
    %v1165 = vunpack.c.l.b16 %v322
    %v1166 = vunpack.c.h.b16 %v322
    %v1167 = vunpack.c.l.b16 %v323
    %v1168 = vunpack.c.l.b16 %v324
    %v1169 = vunpack.c.h.b16 %v324
    %v1170 = vunpack.c.l.b16 %v325
    %v1171 = vunpack.c.h.b16 %v325
    %v1172 = vunpack.c.l.b16 %v326
    %v1173 = vunpack.c.l.b16 %v327
    %v1174 = vunpack.c.h.b16 %v327
    %v1175 = vunpack.c.l.b16 %v328
    %v1176 = vunpack.c.h.b16 %v328
    %v1177 = vunpack.c.l.b16 %v329
    %v1178 = vunpack.c.l.b16 %v330
    %v1179 = vunpack.c.h.b16 %v330
    %v1180 = vunpack.c.l.b16 %v331
    %v1181 = vunpack.c.h.b16 %v331
    %v1182 = vunpack.c.l.b16 %v332
    %v1183 = vunpack.c.l.b16 %v333
    %v1184 = vunpack.c.h.b16 %v333
    %v1185 = vunpack.c.l.b16 %v334
    %v1186 = vunpack.c.h.b16 %v334
    %v1187 = vunpack.c.l.b16 %v335
    %v1188 = vunpack.c.l.b16 %v336
    %v1189 = vunpack.c.h.b16 %v336
    %v1190 = vunpack.c.l.b16 %v337
    %v1191 = vunpack.c.h.b16 %v337
    %v1192 = vunpack.c.l.b16 %v338
    %v1193 = vunpack.c.l.b16 %v339
    %v1194 = vunpack.c.h.b16 %v339
    %v1195 = vunpack.c.l.b16 %v340
    %v1196 = vunpack.c.h.b16 %v340
    %v1197 = vunpack.c.l.b16 %v341
    %v1198 = vunpack.c.l.b16 %v342
    %v1199 = vunpack.c.h.b16 %v342
    %v1200 = vunpack.c.l.b16 %v343
    %v1201 = vunpack.c.h.b16 %v343
    %v1202 = vunpack.c.l.b16 %v344
    %v1203 = vunpack.c.l.b16 %v345
    %v1204 = vunpack.c.h.b16 %v345
    %v1205 = vunpack.c.l.b16 %v346
    %v1206 = vunpack.c.h.b16 %v346
    %v1207 = vunpack.c.l.b16 %v347
    %v1208 = vunpack.c.l.b16 %v348
    %v1209 = vunpack.c.h.b16 %v348
    %v1210 = vunpack.c.l.b16 %v349
    %v1211 = vunpack.c.h.b16 %v349
    %v1212 = vunpack.c.l.b16 %v350
    %v1213 = vunpack.c.l.b16 %v351
    %v1214 = vunpack.c.h.b16 %v351
    %v1215 = vunpack.c.l.b16 %v352
    %v1216 = vunpack.c.h.b16 %v352
    %v1217 = vunpack.c.l.b16 %v353
    %v1218 = vunpack.c.l.b16 %v354
    %v1219 = vunpack.c.h.b16 %v354
    %v1220 = vunpack.c.l.b16 %v355
    %v1221 = vunpack.c.h.b16 %v355
    %v1222 = vunpack.c.l.b16 %v356
    %v1223 = vunpack.c.l.b16 %v357
    %v1224 = vunpack.c.h.b16 %v357
    %v1225 = vunpack.c.l.b16 %v358
    %v1226 = vunpack.c.h.b16 %v358
    %v1227 = vunpack.c.l.b16 %v359
    %v1228 = vunpack.c.l.b16 %v360
    %v1229 = vunpack.c.h.b16 %v360
    %v1230 = vunpack.c.l.b16 %v361
    %v1231 = vunpack.c.h.b16 %v361
    %v1232 = vunpack.c.l.b16 %v362
    %v1233 = vunpack.c.l.b16 %v363
    %v1234 = vunpack.c.h.b16 %v363
    %v1235 = vunpack.c.l.b16 %v364
    %v1236 = vunpack.c.h.b16 %v364
    %v1237 = vunpack.c.l.b16 %v365
    %v1238 = vunpack.c.l.b16 %v366
    %v1239 = vunpack.c.h.b16 %v366
    %v1240 = vunpack.c.l.b16 %v367
    %v1241 = vunpack.c.h.b16 %v367
    %v1242 = vunpack.c.l.b16 %v368
    %v1243 = vunpack.c.l.b16 %v369
    %v1244 = vunpack.c.h.b16 %v369
    %v1245 = vunpack.c.l.b16 %v370
    %v1246 = vunpack.c.h.b16 %v370
    %v1247 = vunpack.c.l.b16 %v371
    %v1248 = vunpack.c.l.b16 %v372
    %v1249 = vunpack.c.h.b16 %v372
    %v1250 = vunpack.c.l.b16 %v373
    %v1251 = vunpack.c.h.b16 %v373
    %v1252 = vunpack.c.l.b16 %v374
    %v1253 = vunpack.c.l.b16 %v375
    %v1254 = vunpack.c.h.b16 %v375
    %v1255 = vunpack.c.l.b16 %v376
    %v1256 = vunpack.c.h.b16 %v376
    %v1257 = vunpack.c.l.b16 %v377
    %v1258 = vunpack.c.l.b16 %v378
    %v1259 = vunpack.c.h.b16 %v378
    %v1260 = vunpack.c.l.b16 %v379
    %v1261 = vunpack.c.h.b16 %v379
    %v1262 = vunpack.c.l.b16 %v380
    %v1263 = vunpack.c.l.b16 %v381
    %v1264 = vunpack.c.h.b16 %v381
    %v1265 = vunpack.c.l.b16 %v382
    %v1266 = vunpack.c.h.b16 %v382
    %v1267 = vunpack.c.l.b16 %v383
    %v1268 = vunpack.c.l.b16 %v384
    %v1269 = vunpack.c.h.b16 %v384
    %v1270 = vunpack.c.l.b16 %v385
    %v1271 = vunpack.c.h.b16 %v385
    %v1272 = vunpack.c.l.b16 %v386
    %v1273 = vunpack.c.l.b16 %v387
    %v1274 = vunpack.c.h.b16 %v387
    %v1275 = vunpack.c.l.b16 %v388
    %v1276 = vunpack.c.h.b16 %v388
    %v1277 = vunpack.c.l.b16 %v389
    %v1278 = vunpack.c.l.b16 %v390
    %v1279 = vunpack.c.h.b16 %v390
    %v1280 = vunpack.c.l.b16 %v391
    %v1281 = vunpack.c.h.b16 %v391
    %v1282 = vunpack.c.l.b16 %v392
    %v1283 = vunpack.c.l.b16 %v393
    %v1284 = vunpack.c.h.b16 %v393
    %v1285 = vunpack.c.l.b16 %v394
    %v1286 = vunpack.c.h.b16 %v394
    %v1287 = vunpack.c.l.b16 %v395
    %v1288 = vunpack.c.l.b16 %v396
    %v1289 = vunpack.c.h.b16 %v396
    %v1290 = vunpack.c.l.b16 %v397
    %v1291 = vunpack.c.h.b16 %v397
    %v1292 = vunpack.c.l.b16 %v398
    %v1293 = vunpack.c.l.b16 %v399
    %v1294 = vunpack.c.h.b16 %v399
    %v1295 = vunpack.c.l.b16 %v400
    %v1296 = vunpack.c.h.b16 %v400
    %v1297 = vunpack.c.l.b16 %v401
    %v1298 = vunpack.c.l.b16 %v402
    %v1299 = vunpack.c.h.b16 %v402
    %v1300 = vunpack.c.l.b16 %v403
    %v1301 = vunpack.c.h.b16 %v403
    %v1302 = vunpack.c.l.b16 %v404
    %v1303 = vunpack.c.l.b16 %v405
    %v1304 = vunpack.c.h.b16 %v405
    %v1305 = vunpack.c.l.b16 %v406
    %v1306 = vunpack.c.h.b16 %v406
    %v1307 = vunpack.c.l.b16 %v407
    %v1308 = vunpack.c.l.b16 %v408
    %v1309 = vunpack.c.h.b16 %v408
    %v1310 = vunpack.c.l.b16 %v409
    %v1311 = vunpack.c.h.b16 %v409
    %v1312 = vunpack.c.l.b16 %v410
    %v1313 = vunpack.c.l.b16 %v411
    %v1314 = vunpack.c.h.b16 %v411
    %v1315 = vunpack.c.l.b16 %v412
    %v1316 = vunpack.c.h.b16 %v412
    %v1317 = vunpack.c.l.b16 %v413
    %v1318 = vunpack.c.l.b16 %v414
    %v1319 = vunpack.c.h.b16 %v414
    %v1320 = vunpack.c.l.b16 %v415
    %v1321 = vunpack.c.h.b16 %v415
    %v1322 = vunpack.c.l.b16 %v416
    %v1323 = vunpack.c.l.b16 %v417
    %v1324 = vunpack.c.h.b16 %v417
    %v1325 = vunpack.c.l.b16 %v418
    %v1326 = vunpack.c.h.b16 %v418
    %v1327 = vunpack.c.l.b16 %v419
    %v1328 = vunpack.c.l.b16 %v420
    %v1329 = vunpack.c.h.b16 %v420
    %v1330 = vunpack.c.l.b16 %v421
    %v1331 = vunpack.c.h.b16 %v421
    %v1332 = vunpack.c.l.b16 %v422
    %v1333 = vunpack.c.l.b16 %v423
    %v1334 = vunpack.c.h.b16 %v423
    %v1335 = vunpack.c.l.b16 %v424
    %v1336 = vunpack.c.h.b16 %v424
    %v1337 = vunpack.c.l.b16 %v425
    %v1338 = vunpack.c.l.b16 %v426
    %v1339 = vunpack.c.h.b16 %v426
    %v1340 = vunpack.c.l.b16 %v427
    %v1341 = vunpack.c.h.b16 %v427
    %v1342 = vunpack.c.l.b16 %v428
    %v1343 = vunpack.c.l.b16 %v429
    %v1344 = vunpack.c.h.b16 %v429
    %v1345 = vunpack.c.l.b16 %v430
    %v1346 = vunpack.c.h.b16 %v430
    %v1347 = vunpack.c.l.b16 %v431
    %v1348 = vunpack.c.l.b16 %v432
    %v1349 = vunpack.c.h.b16 %v432
    %v1350 = vunpack.c.l.b16 %v433
    %v1351 = vunpack.c.h.b16 %v433
    %v1352 = vunpack.c.l.b16 %v434
    %v1353 = vunpack.c.l.b16 %v435
    %v1354 = vunpack.c.h.b16 %v435
    %v1355 = vunpack.c.l.b16 %v436
    %v1356 = vunpack.c.h.b16 %v436
    %v1357 = vunpack.c.l.b16 %v437
    %v1358 = vunpack.c.l.b16 %v438
    %v1359 = vunpack.c.h.b16 %v438
    %v1360 = vunpack.c.l.b16 %v439
    %v1361 = vunpack.c.h.b16 %v439
    %v1362 = vunpack.c.l.b16 %v440
    %v1363 = vunpack.c.l.b16 %v441
    %v1364 = vunpack.c.h.b16 %v441
    %v1365 = vunpack.c.l.b16 %v442
    %v1366 = vunpack.c.h.b16 %v442
    %v1367 = vunpack.c.l.b16 %v443
    %v1368 = vunpack.c.l.b16 %v444
    %v1369 = vunpack.c.h.b16 %v444
    %v1370 = vunpack.c.l.b16 %v445
    %v1371 = vunpack.c.h.b16 %v445
    %v1372 = vunpack.c.l.b16 %v446
    %v1373 = vunpack.c.l.b16 %v447
    %v1374 = vunpack.c.h.b16 %v447
    %v1375 = vunpack.c.l.b16 %v448
    %v1376 = vunpack.c.h.b16 %v448
    %v1377 = vunpack.c.l.b16 %v449
    %v1378 = vunpack.c.l.b16 %v450
    %v1379 = vunpack.c.h.b16 %v450
    %v1380 = vunpack.c.l.b16 %v451
    %v1381 = vunpack.c.h.b16 %v451
    %v1382 = vunpack.c.l.b16 %v452
    %v1383 = vunpack.c.l.b16 %v453
    %v1384 = vunpack.c.h.b16 %v453
    %v1385 = vunpack.c.l.b16 %v454
    %v1386 = vunpack.c.h.b16 %v454
    %v1387 = vunpack.c.l.b16 %v455
    %v1388 = vunpack.c.l.b16 %v456
    %v1389 = vunpack.c.h.b16 %v456
    %v1390 = vunpack.c.l.b16 %v457
    %v1391 = vunpack.c.h.b16 %v457
    %v1392 = vunpack.c.l.b16 %v458
    %v1393 = vunpack.c.l.b16 %v459
    %v1394 = vunpack.c.h.b16 %v459
    %v1395 = vunpack.c.l.b16 %v460
    %v1396 = vunpack.c.h.b16 %v460
    %v1397 = vunpack.c.l.b16 %v461
    %v1398 = vunpack.c.l.b16 %v462
    %v1399 = vunpack.c.h.b16 %v462
    %v1400 = vunpack.c.l.b16 %v463
    %v1401 = vunpack.c.h.b16 %v463
    %v1402 = vunpack.c.l.b16 %v464
    %v1403 = vunpack.c.l.b16 %v465
    %v1404 = vunpack.c.h.b16 %v465
    %v1405 = vunpack.c.l.b16 %v466
    %v1406 = vunpack.c.h.b16 %v466
    %v1407 = vunpack.c.l.b16 %v467
    %v1408 = vunpack.c.l.b16 %v468
    %v1409 = vunpack.c.h.b16 %v468
    %v1410 = vunpack.c.l.b16 %v469
    %v1411 = vunpack.c.h.b16 %v469
    %v1412 = vunpack.c.l.b16 %v470
    %v1413 = vunpack.c.l.b16 %v471
    %v1414 = vunpack.c.h.b16 %v471
    %v1415 = vunpack.c.l.b16 %v472
    %v1416 = vunpack.c.h.b16 %v472
    %v1417 = vunpack.c.l.b16 %v473
    %v1418 = vunpack.c.l.b16 %v474
    %v1419 = vunpack.c.h.b16 %v474
    %v1420 = vunpack.c.l.b16 %v475
    %v1421 = vunpack.c.h.b16 %v475
    %v1422 = vunpack.c.l.b16 %v476
    %v1423 = vunpack.c.l.b16 %v477
    %v1424 = vunpack.c.h.b16 %v477
    %v1425 = vunpack.c.l.b16 %v478
    %v1426 = vunpack.c.h.b16 %v478
    %v1427 = vunpack.c.l.b16 %v479
    %v1428 = vpack.c.b16 %v873, %v868
    %v1429 = vpack.c.b16 %v874, %v869
    %v1430 = vpack.c.b16 %v875, %v870
    %v1431 = vpack.c.b16 %v876, %v871
    %v1432 = vpack.c.b16 %v877, %v872
    %v1433 = vpack.c.b16 %v883, %v878
    %v1434 = vpack.c.b16 %v884, %v879
    %v1435 = vpack.c.b16 %v885, %v880
    %v1436 = vpack.c.b16 %v886, %v881
    %v1437 = vpack.c.b16 %v887, %v882
    %v1438 = vpack.c.b16 %v893, %v888
    %v1439 = vpack.c.b16 %v894, %v889
    %v1440 = vpack.c.b16 %v895, %v890
    %v1441 = vpack.c.b16 %v896, %v891
    %v1442 = vpack.c.b16 %v897, %v892
    %v1443 = vpack.c.b16 %v903, %v898
    %v1444 = vpack.c.b16 %v904, %v899
    %v1445 = vpack.c.b16 %v905, %v900
    %v1446 = vpack.c.b16 %v906, %v901
    %v1447 = vpack.c.b16 %v907, %v902
    %v1448 = vpack.c.b16 %v913, %v908
    %v1449 = vpack.c.b16 %v914, %v909
    %v1450 = vpack.c.b16 %v915, %v910
    %v1451 = vpack.c.b16 %v916, %v911
    %v1452 = vpack.c.b16 %v917, %v912
    %v1453 = vpack.c.b16 %v923, %v918
    %v1454 = vpack.c.b16 %v924, %v919
    %v1455 = vpack.c.b16 %v925, %v920
    %v1456 = vpack.c.b16 %v926, %v921
    %v1457 = vpack.c.b16 %v927, %v922
    %v1458 = vpack.c.b16 %v933, %v928
    %v1459 = vpack.c.b16 %v934, %v929
    %v1460 = vpack.c.b16 %v935, %v930
    %v1461 = vpack.c.b16 %v936, %v931
    %v1462 = vpack.c.b16 %v937, %v932
    %v1463 = vpack.c.b16 %v943, %v938
    %v1464 = vpack.c.b16 %v944, %v939
    %v1465 = vpack.c.b16 %v945, %v940
    %v1466 = vpack.c.b16 %v946, %v941
    %v1467 = vpack.c.b16 %v947, %v942
    %v1468 = vpack.c.b16 %v953, %v948
    %v1469 = vpack.c.b16 %v954, %v949
    %v1470 = vpack.c.b16 %v955, %v950
    %v1471 = vpack.c.b16 %v956, %v951
    %v1472 = vpack.c.b16 %v957, %v952
    %v1473 = vpack.c.b16 %v963, %v958
    %v1474 = vpack.c.b16 %v964, %v959
    %v1475 = vpack.c.b16 %v965, %v960
    %v1476 = vpack.c.b16 %v966, %v961
    %v1477 = vpack.c.b16 %v967, %v962
    %v1478 = vpack.c.b16 %v973, %v968
    %v1479 = vpack.c.b16 %v974, %v969
    %v1480 = vpack.c.b16 %v975, %v970
    %v1481 = vpack.c.b16 %v976, %v971
    %v1482 = vpack.c.b16 %v977, %v972
    %v1483 = vpack.c.b16 %v983, %v978
    %v1484 = vpack.c.b16 %v984, %v979
    %v1485 = vpack.c.b16 %v985, %v980
    %v1486 = vpack.c.b16 %v986, %v981
    %v1487 = vpack.c.b16 %v987, %v982
    %v1488 = vpack.c.b16 %v993, %v988
    %v1489 = vpack.c.b16 %v994, %v989
    %v1490 = vpack.c.b16 %v995, %v990
    %v1491 = vpack.c.b16 %v996, %v991
    %v1492 = vpack.c.b16 %v997, %v992
    %v1493 = vpack.c.b16 %v1003, %v998
    %v1494 = vpack.c.b16 %v1004, %v999
    %v1495 = vpack.c.b16 %v1005, %v1000
    %v1496 = vpack.c.b16 %v1006, %v1001
    %v1497 = vpack.c.b16 %v1007, %v1002
    %v1498 = vpack.c.b16 %v1013, %v1008
    %v1499 = vpack.c.b16 %v1014, %v1009
    %v1500 = vpack.c.b16 %v1015, %v1010
    %v1501 = vpack.c.b16 %v1016, %v1011
    %v1502 = vpack.c.b16 %v1017, %v1012
    %v1503 = vpack.c.b16 %v1023, %v1018
    %v1504 = vpack.c.b16 %v1024, %v1019
    %v1505 = vpack.c.b16 %v1025, %v1020
    %v1506 = vpack.c.b16 %v1026, %v1021
    %v1507 = vpack.c.b16 %v1027, %v1022
    %v1508 = vpack.c.b16 %v1033, %v1028
    %v1509 = vpack.c.b16 %v1034, %v1029
    %v1510 = vpack.c.b16 %v1035, %v1030
    %v1511 = vpack.c.b16 %v1036, %v1031
    %v1512 = vpack.c.b16 %v1037, %v1032
    %v1513 = vpack.c.b16 %v1043, %v1038
    %v1514 = vpack.c.b16 %v1044, %v1039
    %v1515 = vpack.c.b16 %v1045, %v1040
    %v1516 = vpack.c.b16 %v1046, %v1041
    %v1517 = vpack.c.b16 %v1047, %v1042
    %v1518 = vpack.c.b16 %v1053, %v1048
    %v1519 = vpack.c.b16 %v1054, %v1049
    %v1520 = vpack.c.b16 %v1055, %v1050
    %v1521 = vpack.c.b16 %v1056, %v1051
    %v1522 = vpack.c.b16 %v1057, %v1052
    %v1523 = vpack.c.b16 %v1063, %v1058
    %v1524 = vpack.c.b16 %v1064, %v1059
    %v1525 = vpack.c.b16 %v1065, %v1060
    %v1526 = vpack.c.b16 %v1066, %v1061
    %v1527 = vpack.c.b16 %v1067, %v1062
    %v1528 = vpack.c.b16 %v1073, %v1068
    %v1529 = vpack.c.b16 %v1074, %v1069
    %v1530 = vpack.c.b16 %v1075, %v1070
    %v1531 = vpack.c.b16 %v1076, %v1071
    %v1532 = vpack.c.b16 %v1077, %v1072
    %v1533 = vpack.c.b16 %v1083, %v1078
    %v1534 = vpack.c.b16 %v1084, %v1079
    %v1535 = vpack.c.b16 %v1085, %v1080
    %v1536 = vpack.c.b16 %v1086, %v1081
    %v1537 = vpack.c.b16 %v1087, %v1082
    %v1538 = vpack.c.b16 %v1093, %v1088
    %v1539 = vpack.c.b16 %v1094, %v1089
    %v1540 = vpack.c.b16 %v1095, %v1090
    %v1541 = vpack.c.b16 %v1096, %v1091
    %v1542 = vpack.c.b16 %v1097, %v1092
    %v1543 = vpack.c.b16 %v1103, %v1098
    %v1544 = vpack.c.b16 %v1104, %v1099
    %v1545 = vpack.c.b16 %v1105, %v1100
    %v1546 = vpack.c.b16 %v1106, %v1101
    %v1547 = vpack.c.b16 %v1107, %v1102
    %v1548 = vpack.c.b16 %v1113, %v1108
    %v1549 = vpack.c.b16 %v1114, %v1109
    %v1550 = vpack.c.b16 %v1115, %v1110
    %v1551 = vpack.c.b16 %v1116, %v1111
    %v1552 = vpack.c.b16 %v1117, %v1112
    %v1553 = vpack.c.b16 %v1123, %v1118
    %v1554 = vpack.c.b16 %v1124, %v1119
    %v1555 = vpack.c.b16 %v1125, %v1120
    %v1556 = vpack.c.b16 %v1126, %v1121
    %v1557 = vpack.c.b16 %v1127, %v1122
    %v1558 = vpack.c.b16 %v1133, %v1128
    %v1559 = vpack.c.b16 %v1134, %v1129
    %v1560 = vpack.c.b16 %v1135, %v1130
    %v1561 = vpack.c.b16 %v1136, %v1131
    %v1562 = vpack.c.b16 %v1137, %v1132
    %v1563 = vpack.c.b16 %v1143, %v1138
    %v1564 = vpack.c.b16 %v1144, %v1139
    %v1565 = vpack.c.b16 %v1145, %v1140
    %v1566 = vpack.c.b16 %v1146, %v1141
    %v1567 = vpack.c.b16 %v1147, %v1142
    %v1568 = vpack.c.b16 %v1153, %v1148
    %v1569 = vpack.c.b16 %v1154, %v1149
    %v1570 = vpack.c.b16 %v1155, %v1150
    %v1571 = vpack.c.b16 %v1156, %v1151
    %v1572 = vpack.c.b16 %v1157, %v1152
    %v1573 = vpack.c.b16 %v1163, %v1158
    %v1574 = vpack.c.b16 %v1164, %v1159
    %v1575 = vpack.c.b16 %v1165, %v1160
    %v1576 = vpack.c.b16 %v1166, %v1161
    %v1577 = vpack.c.b16 %v1167, %v1162
    %v1578 = vpack.c.b16 %v1173, %v1168
    %v1579 = vpack.c.b16 %v1174, %v1169
    %v1580 = vpack.c.b16 %v1175, %v1170
    %v1581 = vpack.c.b16 %v1176, %v1171
    %v1582 = vpack.c.b16 %v1177, %v1172
    %v1583 = vpack.c.b16 %v1183, %v1178
    %v1584 = vpack.c.b16 %v1184, %v1179
    %v1585 = vpack.c.b16 %v1185, %v1180
    %v1586 = vpack.c.b16 %v1186, %v1181
    %v1587 = vpack.c.b16 %v1187, %v1182
    %v1588 = vpack.c.b16 %v1193, %v1188
    %v1589 = vpack.c.b16 %v1194, %v1189
    %v1590 = vpack.c.b16 %v1195, %v1190
    %v1591 = vpack.c.b16 %v1196, %v1191
    %v1592 = vpack.c.b16 %v1197, %v1192
    %v1593 = vpack.c.b16 %v1203, %v1198
    %v1594 = vpack.c.b16 %v1204, %v1199
    %v1595 = vpack.c.b16 %v1205, %v1200
    %v1596 = vpack.c.b16 %v1206, %v1201
    %v1597 = vpack.c.b16 %v1207, %v1202
    %v1598 = vpack.c.b16 %v1213, %v1208
    %v1599 = vpack.c.b16 %v1214, %v1209
    %v1600 = vpack.c.b16 %v1215, %v1210
    %v1601 = vpack.c.b16 %v1216, %v1211
    %v1602 = vpack.c.b16 %v1217, %v1212
    %v1603 = vpack.c.b16 %v1223, %v1218
    %v1604 = vpack.c.b16 %v1224, %v1219
    %v1605 = vpack.c.b16 %v1225, %v1220
    %v1606 = vpack.c.b16 %v1226, %v1221
    %v1607 = vpack.c.b16 %v1227, %v1222
    %v1608 = vpack.c.b16 %v1233, %v1228
    %v1609 = vpack.c.b16 %v1234, %v1229
    %v1610 = vpack.c.b16 %v1235, %v1230
    %v1611 = vpack.c.b16 %v1236, %v1231
    %v1612 = vpack.c.b16 %v1237, %v1232
    %v1613 = vpack.c.b16 %v1243, %v1238
    %v1614 = vpack.c.b16 %v1244, %v1239
    %v1615 = vpack.c.b16 %v1245, %v1240
    %v1616 = vpack.c.b16 %v1246, %v1241
    %v1617 = vpack.c.b16 %v1247, %v1242
    %v1618 = vpack.c.b16 %v1253, %v1248
    %v1619 = vpack.c.b16 %v1254, %v1249
    %v1620 = vpack.c.b16 %v1255, %v1250
    %v1621 = vpack.c.b16 %v1256, %v1251
    %v1622 = vpack.c.b16 %v1257, %v1252
    %v1623 = vpack.c.b16 %v1263, %v1258
    %v1624 = vpack.c.b16 %v1264, %v1259
    %v1625 = vpack.c.b16 %v1265, %v1260
    %v1626 = vpack.c.b16 %v1266, %v1261
    %v1627 = vpack.c.b16 %v1267, %v1262
    %v1628 = vpack.c.b16 %v1273, %v1268
    %v1629 = vpack.c.b16 %v1274, %v1269
    %v1630 = vpack.c.b16 %v1275, %v1270
    %v1631 = vpack.c.b16 %v1276, %v1271
    %v1632 = vpack.c.b16 %v1277, %v1272
    %v1633 = vpack.c.b16 %v1283, %v1278
    %v1634 = vpack.c.b16 %v1284, %v1279
    %v1635 = vpack.c.b16 %v1285, %v1280
    %v1636 = vpack.c.b16 %v1286, %v1281
    %v1637 = vpack.c.b16 %v1287, %v1282
    %v1638 = vpack.c.b16 %v1293, %v1288
    %v1639 = vpack.c.b16 %v1294, %v1289
    %v1640 = vpack.c.b16 %v1295, %v1290
    %v1641 = vpack.c.b16 %v1296, %v1291
    %v1642 = vpack.c.b16 %v1297, %v1292
    %v1643 = vpack.c.b16 %v1303, %v1298
    %v1644 = vpack.c.b16 %v1304, %v1299
    %v1645 = vpack.c.b16 %v1305, %v1300
    %v1646 = vpack.c.b16 %v1306, %v1301
    %v1647 = vpack.c.b16 %v1307, %v1302
    %v1648 = vpack.c.b16 %v1313, %v1308
    %v1649 = vpack.c.b16 %v1314, %v1309
    %v1650 = vpack.c.b16 %v1315, %v1310
    %v1651 = vpack.c.b16 %v1316, %v1311
    %v1652 = vpack.c.b16 %v1317, %v1312
    %v1653 = vpack.c.b16 %v1323, %v1318
    %v1654 = vpack.c.b16 %v1324, %v1319
    %v1655 = vpack.c.b16 %v1325, %v1320
    %v1656 = vpack.c.b16 %v1326, %v1321
    %v1657 = vpack.c.b16 %v1327, %v1322
    %v1658 = vpack.c.b16 %v1333, %v1328
    %v1659 = vpack.c.b16 %v1334, %v1329
    %v1660 = vpack.c.b16 %v1335, %v1330
    %v1661 = vpack.c.b16 %v1336, %v1331
    %v1662 = vpack.c.b16 %v1337, %v1332
    %v1663 = vpack.c.b16 %v1343, %v1338
    %v1664 = vpack.c.b16 %v1344, %v1339
    %v1665 = vpack.c.b16 %v1345, %v1340
    %v1666 = vpack.c.b16 %v1346, %v1341
    %v1667 = vpack.c.b16 %v1347, %v1342
    %v1668 = vpack.c.b16 %v1353, %v1348
    %v1669 = vpack.c.b16 %v1354, %v1349
    %v1670 = vpack.c.b16 %v1355, %v1350
    %v1671 = vpack.c.b16 %v1356, %v1351
    %v1672 = vpack.c.b16 %v1357, %v1352
    %v1673 = vpack.c.b16 %v1363, %v1358
    %v1674 = vpack.c.b16 %v1364, %v1359
    %v1675 = vpack.c.b16 %v1365, %v1360
    %v1676 = vpack.c.b16 %v1366, %v1361
    %v1677 = vpack.c.b16 %v1367, %v1362
    %v1678 = vpack.c.b16 %v1373, %v1368
    %v1679 = vpack.c.b16 %v1374, %v1369
    %v1680 = vpack.c.b16 %v1375, %v1370
    %v1681 = vpack.c.b16 %v1376, %v1371
    %v1682 = vpack.c.b16 %v1377, %v1372
    %v1683 = vpack.c.b16 %v1383, %v1378
    %v1684 = vpack.c.b16 %v1384, %v1379
    %v1685 = vpack.c.b16 %v1385, %v1380
    %v1686 = vpack.c.b16 %v1386, %v1381
    %v1687 = vpack.c.b16 %v1387, %v1382
    %v1688 = vpack.c.b16 %v1393, %v1388
    %v1689 = vpack.c.b16 %v1394, %v1389
    %v1690 = vpack.c.b16 %v1395, %v1390
    %v1691 = vpack.c.b16 %v1396, %v1391
    %v1692 = vpack.c.b16 %v1397, %v1392
    %v1693 = vpack.c.b16 %v1403, %v1398
    %v1694 = vpack.c.b16 %v1404, %v1399
    %v1695 = vpack.c.b16 %v1405, %v1400
    %v1696 = vpack.c.b16 %v1406, %v1401
    %v1697 = vpack.c.b16 %v1407, %v1402
    %v1698 = vpack.c.b16 %v1413, %v1408
    %v1699 = vpack.c.b16 %v1414, %v1409
    %v1700 = vpack.c.b16 %v1415, %v1410
    %v1701 = vpack.c.b16 %v1416, %v1411
    %v1702 = vpack.c.b16 %v1417, %v1412
    %v1703 = vpack.c.b16 %v1423, %v1418
    %v1704 = vpack.c.b16 %v1424, %v1419
    %v1705 = vpack.c.b16 %v1425, %v1420
    %v1706 = vpack.c.b16 %v1426, %v1421
    %v1707 = vpack.c.b16 %v1427, %v1422
    %1988 = vmatprep.subr.bf16.mxu0 %v1429
    %1989 = vmatpush1.bf16.msra.mxu0 %v1428
    %1990 = vmatprep.subr.bf16.mxu0 %v1434
    %1991 = vmatpush1.bf16.msra.mxu0 %v1433
    %1992 = vmatprep.subr.bf16.mxu0 %v1439
    %1993 = vmatpush1.bf16.msra.mxu0 %v1438
    %1994 = vmatprep.subr.bf16.mxu0 %v1444
    %1995 = vmatpush1.bf16.msra.mxu0 %v1443
    %1996 = vmatprep.subr.bf16.mxu0 %v1449
    %1997 = vmatpush1.bf16.msra.mxu0 %v1448
    %1998 = vmatprep.subr.bf16.mxu0 %v1454
    %1999 = vmatpush1.bf16.msra.mxu0 %v1453
    %2000 = vmatprep.subr.bf16.mxu0 %v1459
    %2001 = vmatpush1.bf16.msra.mxu0 %v1458
    %2002 = vmatprep.subr.bf16.mxu0 %v1464
    %2003 = vmatpush1.bf16.msra.mxu0 %v1463
    %2004 = vmatprep.subr.bf16.mxu0 %v1469
    %2005 = vmatpush1.bf16.msra.mxu0 %v1468
    %2006 = vmatprep.subr.bf16.mxu0 %v1474
    %2007 = vmatpush1.bf16.msra.mxu0 %v1473
    %2008 = vmatprep.subr.bf16.mxu0 %v1479
    %2009 = vmatpush1.bf16.msra.mxu0 %v1478
    %2010 = vmatprep.subr.bf16.mxu0 %v1484
    %2011 = vmatpush1.bf16.msra.mxu0 %v1483
    %2012 = vmatprep.subr.bf16.mxu0 %v1489
    %2013 = vmatpush1.bf16.msra.mxu0 %v1488
    %2014 = vmatprep.subr.bf16.mxu0 %v1494
    %2015 = vmatpush1.bf16.msra.mxu0 %v1493
    %2016 = vmatprep.subr.bf16.mxu0 %v1499
    %2017 = vmatpush1.bf16.msra.mxu0 %v1498
    %2018 = vmatprep.subr.bf16.mxu0 %v1504
    %2019 = vmatpush1.bf16.msra.mxu0 %v1503
    %2020 = vmatprep.mubr.bf16.mxu0 %v519
    %2021 = vmatmul.mubr.bf16.gmra.mrb[0].mxu0 %v518
    %v2022 = vpop.f32.mrb[0].mxu0
    %v2023 = vadd.f32 %v485, %v2022
    %v2024 = vpop.f32.mrb[0].mxu0
    %v2025 = vadd.f32 %v489, %v2024
    %v2026 = vpop.f32.mrb[0].mxu0
    %v2027 = vpop.f32.mrb[0].mxu0
    %2028 = vdwg.mxu0
    %2029 = vmatprep.subr.bf16.mxu0 %v1509
    %2030 = vmatpush1.bf16.msra.mxu0 %v1508
    %2031 = vmatprep.subr.bf16.mxu0 %v1514
    %2032 = vmatpush1.bf16.msra.mxu0 %v1513
    %2033 = vmatprep.subr.bf16.mxu0 %v1519
    %2034 = vmatpush1.bf16.msra.mxu0 %v1518
    %2035 = vmatprep.subr.bf16.mxu0 %v1524
    %2036 = vmatpush1.bf16.msra.mxu0 %v1523
    %2037 = vmatprep.subr.bf16.mxu0 %v1529
    %2038 = vmatpush1.bf16.msra.mxu0 %v1528
    %2039 = vmatprep.subr.bf16.mxu0 %v1534
    %2040 = vmatpush1.bf16.msra.mxu0 %v1533
    %2041 = vmatprep.subr.bf16.mxu0 %v1539
    %2042 = vmatpush1.bf16.msra.mxu0 %v1538
    %2043 = vmatprep.subr.bf16.mxu0 %v1544
    %2044 = vmatpush1.bf16.msra.mxu0 %v1543
    %2045 = vmatprep.subr.bf16.mxu0 %v1549
    %2046 = vmatpush1.bf16.msra.mxu0 %v1548
    %2047 = vmatprep.subr.bf16.mxu0 %v1554
    %2048 = vmatpush1.bf16.msra.mxu0 %v1553
    %2049 = vmatprep.subr.bf16.mxu0 %v1559
    %2050 = vmatpush1.bf16.msra.mxu0 %v1558
    %2051 = vmatprep.subr.bf16.mxu0 %v1564
    %2052 = vmatpush1.bf16.msra.mxu0 %v1563
    %2053 = vmatprep.subr.bf16.mxu0 %v1569
    %2054 = vmatpush1.bf16.msra.mxu0 %v1568
    %2055 = vmatprep.subr.bf16.mxu0 %v1574
    %2056 = vmatpush1.bf16.msra.mxu0 %v1573
    %2057 = vmatprep.subr.bf16.mxu0 %v1579
    %2058 = vmatpush1.bf16.msra.mxu0 %v1578
    %2059 = vmatprep.subr.bf16.mxu0 %v1584
    %2060 = vmatpush1.bf16.msra.mxu0 %v1583
    %2061 = vmatprep.mubr.bf16.mxu0 %v521
    %2062 = vmatmul.mubr.bf16.gmra.mrb[0].mxu0 %v520
    %v2063 = vpop.f32.mrb[0].mxu0
    %v2064 = vadd.f32 %v2023, %v2063
    %v2065 = vpop.f32.mrb[0].mxu0
    %v2066 = vadd.f32 %v2025, %v2065
    %v2067 = vpop.f32.mrb[0].mxu0
    %v2068 = vpop.f32.mrb[0].mxu0
    %2069 = vdwg.mxu0
    %2070 = vmatprep.subr.bf16.mxu0 %v1589
    %2071 = vmatpush1.bf16.msra.mxu0 %v1588
    %2072 = vmatprep.subr.bf16.mxu0 %v1594
    %2073 = vmatpush1.bf16.msra.mxu0 %v1593
    %2074 = vmatprep.subr.bf16.mxu0 %v1599
    %2075 = vmatpush1.bf16.msra.mxu0 %v1598
    %2076 = vmatprep.subr.bf16.mxu0 %v1604
    %2077 = vmatpush1.bf16.msra.mxu0 %v1603
    %2078 = vmatprep.subr.bf16.mxu0 %v1609
    %2079 = vmatpush1.bf16.msra.mxu0 %v1608
    %2080 = vmatprep.subr.bf16.mxu0 %v1614
    %2081 = vmatpush1.bf16.msra.mxu0 %v1613
    %2082 = vmatprep.subr.bf16.mxu0 %v1619
    %2083 = vmatpush1.bf16.msra.mxu0 %v1618
    %2084 = vmatprep.subr.bf16.mxu0 %v1624
    %2085 = vmatpush1.bf16.msra.mxu0 %v1623
    %2086 = vmatprep.subr.bf16.mxu0 %v1629
    %2087 = vmatpush1.bf16.msra.mxu0 %v1628
    %2088 = vmatprep.subr.bf16.mxu0 %v1634
    %2089 = vmatpush1.bf16.msra.mxu0 %v1633
    %2090 = vmatprep.subr.bf16.mxu0 %v1639
    %2091 = vmatpush1.bf16.msra.mxu0 %v1638
    %2092 = vmatprep.subr.bf16.mxu0 %v1644
    %2093 = vmatpush1.bf16.msra.mxu0 %v1643
    %2094 = vmatprep.subr.bf16.mxu0 %v1649
    %2095 = vmatpush1.bf16.msra.mxu0 %v1648
    %2096 = vmatprep.subr.bf16.mxu0 %v1654
    %2097 = vmatpush1.bf16.msra.mxu0 %v1653
    %2098 = vmatprep.subr.bf16.mxu0 %v1659
    %2099 = vmatpush1.bf16.msra.mxu0 %v1658
    %2100 = vmatprep.subr.bf16.mxu0 %v1664
    %2101 = vmatpush1.bf16.msra.mxu0 %v1663
    %2102 = vmatprep.mubr.bf16.mxu0 %v523
    %2103 = vmatmul.mubr.bf16.gmra.mrb[0].mxu0 %v522
    %v2104 = vpop.f32.mrb[0].mxu0
    %v2105 = vadd.f32 %v2064, %v2104
    %v2106 = vpop.f32.mrb[0].mxu0
    %v2107 = vadd.f32 %v2066, %v2106
    %v2108 = vpop.f32.mrb[0].mxu0
    %v2109 = vpop.f32.mrb[0].mxu0
    %2110 = vdwg.mxu0
    %2111 = vmatprep.subr.bf16.mxu0 %v1669
    %2112 = vmatpush1.bf16.msra.mxu0 %v1668
    %2113 = vmatprep.subr.bf16.mxu0 %v1674
    %2114 = vmatpush1.bf16.msra.mxu0 %v1673
    %2115 = vmatprep.subr.bf16.mxu0 %v1679
    %2116 = vmatpush1.bf16.msra.mxu0 %v1678
    %2117 = vmatprep.subr.bf16.mxu0 %v1684
    %2118 = vmatpush1.bf16.msra.mxu0 %v1683
    %2119 = vmatprep.subr.bf16.mxu0 %v1689
    %2120 = vmatpush1.bf16.msra.mxu0 %v1688
    %2121 = vmatprep.subr.bf16.mxu0 %v1694
    %2122 = vmatpush1.bf16.msra.mxu0 %v1693
    %2123 = vmatprep.subr.bf16.mxu0 %v1699
    %2124 = vmatpush1.bf16.msra.mxu0 %v1698
    %2125 = vmatprep.subr.bf16.mxu0 %v1704
    %2126 = vmatpush1.bf16.msra.mxu0 %v1703
    %2127 = vmatprep.subr.bf16.mxu0 0
    %2128 = vmatpush1.bf16.msra.mxu0 0
    %2129 = vmatprep.subr.bf16.mxu0 0
    %2130 = vmatpush1.bf16.msra.mxu0 0
    %2131 = vmatprep.subr.bf16.mxu0 0
    %2132 = vmatpush1.bf16.msra.mxu0 0
    %2133 = vmatprep.subr.bf16.mxu0 0
    %2134 = vmatpush1.bf16.msra.mxu0 0
    %2135 = vmatprep.subr.bf16.mxu0 0
    %2136 = vmatpush1.bf16.msra.mxu0 0
    %2137 = vmatprep.subr.bf16.mxu0 0
    %2138 = vmatpush1.bf16.msra.mxu0 0
    %2139 = vmatprep.subr.bf16.mxu0 0
    %2140 = vmatpush1.bf16.msra.mxu0 0
    %2141 = vmatprep.subr.bf16.mxu0 0
    %2142 = vmatpush1.bf16.msra.mxu0 0
    %2143 = vmatprep.mubr.bf16.mxu0 0
    %2144 = vmatmul.mubr.bf16.gmra.mrb[0].mxu0 %v524
    %v2145 = vpop.f32.mrb[0].mxu0
    %v2146 = vadd.f32 %v2105, %v2145
    %v2147 = vpop.f32.mrb[0].mxu0
    %v2148 = vadd.f32 %v2107, %v2147
    %v2149 = vpop.f32.mrb[0].mxu0
    %v2150 = vpop.f32.mrb[0].mxu0
    %2151 = vdwg.mxu0
    %2152 = vmatprep.subr.bf16.mxu0 %v1431
    %2153 = vmatpush1.bf16.msra.mxu0 %v1430
    %2154 = vmatprep.subr.bf16.mxu0 %v1436
    %2155 = vmatpush1.bf16.msra.mxu0 %v1435
    %2156 = vmatprep.subr.bf16.mxu0 %v1441
    %2157 = vmatpush1.bf16.msra.mxu0 %v1440
    %2158 = vmatprep.subr.bf16.mxu0 %v1446
    %2159 = vmatpush1.bf16.msra.mxu0 %v1445
    %2160 = vmatprep.subr.bf16.mxu0 %v1451
    %2161 = vmatpush1.bf16.msra.mxu0 %v1450
    %2162 = vmatprep.subr.bf16.mxu0 %v1456
    %2163 = vmatpush1.bf16.msra.mxu0 %v1455
    %2164 = vmatprep.subr.bf16.mxu0 %v1461
    %2165 = vmatpush1.bf16.msra.mxu0 %v1460
    %2166 = vmatprep.subr.bf16.mxu0 %v1466
    %2167 = vmatpush1.bf16.msra.mxu0 %v1465
    %2168 = vmatprep.subr.bf16.mxu0 %v1471
    %2169 = vmatpush1.bf16.msra.mxu0 %v1470
    %2170 = vmatprep.subr.bf16.mxu0 %v1476
    %2171 = vmatpush1.bf16.msra.mxu0 %v1475
    %2172 = vmatprep.subr.bf16.mxu0 %v1481
    %2173 = vmatpush1.bf16.msra.mxu0 %v1480
    %2174 = vmatprep.subr.bf16.mxu0 %v1486
    %2175 = vmatpush1.bf16.msra.mxu0 %v1485
    %2176 = vmatprep.subr.bf16.mxu0 %v1491
    %2177 = vmatpush1.bf16.msra.mxu0 %v1490
    %2178 = vmatprep.subr.bf16.mxu0 %v1496
    %2179 = vmatpush1.bf16.msra.mxu0 %v1495
    %2180 = vmatprep.subr.bf16.mxu0 %v1501
    %2181 = vmatpush1.bf16.msra.mxu0 %v1500
    %2182 = vmatprep.subr.bf16.mxu0 %v1506
    %2183 = vmatpush1.bf16.msra.mxu0 %v1505
    %2184 = vmatprep.mubr.bf16.mxu0 %v519
    %2185 = vmatmul.mubr.bf16.gmra.mrb[0].mxu0 %v518
    %v2186 = vpop.f32.mrb[0].mxu0
    %v2187 = vadd.f32 %v493, %v2186
    %v2188 = vpop.f32.mrb[0].mxu0
    %v2189 = vadd.f32 %v497, %v2188
    %v2190 = vpop.f32.mrb[0].mxu0
    %v2191 = vpop.f32.mrb[0].mxu0
    %2192 = vdwg.mxu0
    %2193 = vmatprep.subr.bf16.mxu0 %v1511
    %2194 = vmatpush1.bf16.msra.mxu0 %v1510
    %2195 = vmatprep.subr.bf16.mxu0 %v1516
    %2196 = vmatpush1.bf16.msra.mxu0 %v1515
    %2197 = vmatprep.subr.bf16.mxu0 %v1521
    %2198 = vmatpush1.bf16.msra.mxu0 %v1520
    %2199 = vmatprep.subr.bf16.mxu0 %v1526
    %2200 = vmatpush1.bf16.msra.mxu0 %v1525
    %2201 = vmatprep.subr.bf16.mxu0 %v1531
    %2202 = vmatpush1.bf16.msra.mxu0 %v1530
    %2203 = vmatprep.subr.bf16.mxu0 %v1536
    %2204 = vmatpush1.bf16.msra.mxu0 %v1535
    %2205 = vmatprep.subr.bf16.mxu0 %v1541
    %2206 = vmatpush1.bf16.msra.mxu0 %v1540
    %2207 = vmatprep.subr.bf16.mxu0 %v1546
    %2208 = vmatpush1.bf16.msra.mxu0 %v1545
    %2209 = vmatprep.subr.bf16.mxu0 %v1551
    %2210 = vmatpush1.bf16.msra.mxu0 %v1550
    %2211 = vmatprep.subr.bf16.mxu0 %v1556
    %2212 = vmatpush1.bf16.msra.mxu0 %v1555
    %2213 = vmatprep.subr.bf16.mxu0 %v1561
    %2214 = vmatpush1.bf16.msra.mxu0 %v1560
    %2215 = vmatprep.subr.bf16.mxu0 %v1566
    %2216 = vmatpush1.bf16.msra.mxu0 %v1565
    %2217 = vmatprep.subr.bf16.mxu0 %v1571
    %2218 = vmatpush1.bf16.msra.mxu0 %v1570
    %2219 = vmatprep.subr.bf16.mxu0 %v1576
    %2220 = vmatpush1.bf16.msra.mxu0 %v1575
    %2221 = vmatprep.subr.bf16.mxu0 %v1581
    %2222 = vmatpush1.bf16.msra.mxu0 %v1580
    %2223 = vmatprep.subr.bf16.mxu0 %v1586
    %2224 = vmatpush1.bf16.msra.mxu0 %v1585
    %2225 = vmatprep.mubr.bf16.mxu0 %v521
    %2226 = vmatmul.mubr.bf16.gmra.mrb[0].mxu0 %v520
    %v2227 = vpop.f32.mrb[0].mxu0
    %v2228 = vadd.f32 %v2187, %v2227
    %v2229 = vpop.f32.mrb[0].mxu0
    %v2230 = vadd.f32 %v2189, %v2229
    %v2231 = vpop.f32.mrb[0].mxu0
    %v2232 = vpop.f32.mrb[0].mxu0
    %2233 = vdwg.mxu0
    %2234 = vmatprep.subr.bf16.mxu0 %v1591
    %2235 = vmatpush1.bf16.msra.mxu0 %v1590
    %2236 = vmatprep.subr.bf16.mxu0 %v1596
    %2237 = vmatpush1.bf16.msra.mxu0 %v1595
    %2238 = vmatprep.subr.bf16.mxu0 %v1601
    %2239 = vmatpush1.bf16.msra.mxu0 %v1600
    %2240 = vmatprep.subr.bf16.mxu0 %v1606
    %2241 = vmatpush1.bf16.msra.mxu0 %v1605
    %2242 = vmatprep.subr.bf16.mxu0 %v1611
    %2243 = vmatpush1.bf16.msra.mxu0 %v1610
    %2244 = vmatprep.subr.bf16.mxu0 %v1616
    %2245 = vmatpush1.bf16.msra.mxu0 %v1615
    %2246 = vmatprep.subr.bf16.mxu0 %v1621
    %2247 = vmatpush1.bf16.msra.mxu0 %v1620
    %2248 = vmatprep.subr.bf16.mxu0 %v1626
    %2249 = vmatpush1.bf16.msra.mxu0 %v1625
    %2250 = vmatprep.subr.bf16.mxu0 %v1631
    %2251 = vmatpush1.bf16.msra.mxu0 %v1630
    %2252 = vmatprep.subr.bf16.mxu0 %v1636
    %2253 = vmatpush1.bf16.msra.mxu0 %v1635
    %2254 = vmatprep.subr.bf16.mxu0 %v1641
    %2255 = vmatpush1.bf16.msra.mxu0 %v1640
    %2256 = vmatprep.subr.bf16.mxu0 %v1646
    %2257 = vmatpush1.bf16.msra.mxu0 %v1645
    %2258 = vmatprep.subr.bf16.mxu0 %v1651
    %2259 = vmatpush1.bf16.msra.mxu0 %v1650
    %2260 = vmatprep.subr.bf16.mxu0 %v1656
    %2261 = vmatpush1.bf16.msra.mxu0 %v1655
    %2262 = vmatprep.subr.bf16.mxu0 %v1661
    %2263 = vmatpush1.bf16.msra.mxu0 %v1660
    %2264 = vmatprep.subr.bf16.mxu0 %v1666
    %2265 = vmatpush1.bf16.msra.mxu0 %v1665
    %2266 = vmatprep.mubr.bf16.mxu0 %v523
    %2267 = vmatmul.mubr.bf16.gmra.mrb[0].mxu0 %v522
    %v2268 = vpop.f32.mrb[0].mxu0
    %v2269 = vadd.f32 %v2228, %v2268
    %v2270 = vpop.f32.mrb[0].mxu0
    %v2271 = vadd.f32 %v2230, %v2270
    %v2272 = vpop.f32.mrb[0].mxu0
    %v2273 = vpop.f32.mrb[0].mxu0
    %2274 = vdwg.mxu0
    %2275 = vmatprep.subr.bf16.mxu0 %v1671
    %2276 = vmatpush1.bf16.msra.mxu0 %v1670
    %2277 = vmatprep.subr.bf16.mxu0 %v1676
    %2278 = vmatpush1.bf16.msra.mxu0 %v1675
    %2279 = vmatprep.subr.bf16.mxu0 %v1681
    %2280 = vmatpush1.bf16.msra.mxu0 %v1680
    %2281 = vmatprep.subr.bf16.mxu0 %v1686
    %2282 = vmatpush1.bf16.msra.mxu0 %v1685
    %2283 = vmatprep.subr.bf16.mxu0 %v1691
    %2284 = vmatpush1.bf16.msra.mxu0 %v1690
    %2285 = vmatprep.subr.bf16.mxu0 %v1696
    %2286 = vmatpush1.bf16.msra.mxu0 %v1695
    %2287 = vmatprep.subr.bf16.mxu0 %v1701
    %2288 = vmatpush1.bf16.msra.mxu0 %v1700
    %2289 = vmatprep.subr.bf16.mxu0 %v1706
    %2290 = vmatpush1.bf16.msra.mxu0 %v1705
    %2291 = vmatprep.subr.bf16.mxu0 0
    %2292 = vmatpush1.bf16.msra.mxu0 0
    %2293 = vmatprep.subr.bf16.mxu0 0
    %2294 = vmatpush1.bf16.msra.mxu0 0
    %2295 = vmatprep.subr.bf16.mxu0 0
    %2296 = vmatpush1.bf16.msra.mxu0 0
    %2297 = vmatprep.subr.bf16.mxu0 0
    %2298 = vmatpush1.bf16.msra.mxu0 0
    %2299 = vmatprep.subr.bf16.mxu0 0
    %2300 = vmatpush1.bf16.msra.mxu0 0
    %2301 = vmatprep.subr.bf16.mxu0 0
    %2302 = vmatpush1.bf16.msra.mxu0 0
    %2303 = vmatprep.subr.bf16.mxu0 0
    %2304 = vmatpush1.bf16.msra.mxu0 0
    %2305 = vmatprep.subr.bf16.mxu0 0
    %2306 = vmatpush1.bf16.msra.mxu0 0
    %2307 = vmatprep.mubr.bf16.mxu0 0
    %2308 = vmatmul.mubr.bf16.gmra.mrb[0].mxu0 %v524
    %v2309 = vpop.f32.mrb[0].mxu0
    %v2310 = vadd.f32 %v2269, %v2309
    %v2311 = vpop.f32.mrb[0].mxu0
    %v2312 = vadd.f32 %v2271, %v2311
    %v2313 = vpop.f32.mrb[0].mxu0
    %v2314 = vpop.f32.mrb[0].mxu0
    %2315 = vdwg.mxu0
    %2316 = vmatprep.subr.bf16.mxu0 0
    %2317 = vmatpush1.bf16.msra.mxu0 %v1432
    %2318 = vmatprep.subr.bf16.mxu0 0
    %2319 = vmatpush1.bf16.msra.mxu0 %v1437
    %2320 = vmatprep.subr.bf16.mxu0 0
    %2321 = vmatpush1.bf16.msra.mxu0 %v1442
    %2322 = vmatprep.subr.bf16.mxu0 0
    %2323 = vmatpush1.bf16.msra.mxu0 %v1447
    %2324 = vmatprep.subr.bf16.mxu0 0
    %2325 = vmatpush1.bf16.msra.mxu0 %v1452
    %2326 = vmatprep.subr.bf16.mxu0 0
    %2327 = vmatpush1.bf16.msra.mxu0 %v1457
    %2328 = vmatprep.subr.bf16.mxu0 0
    %2329 = vmatpush1.bf16.msra.mxu0 %v1462
    %2330 = vmatprep.subr.bf16.mxu0 0
    %2331 = vmatpush1.bf16.msra.mxu0 %v1467
    %2332 = vmatprep.subr.bf16.mxu0 0
    %2333 = vmatpush1.bf16.msra.mxu0 %v1472
    %2334 = vmatprep.subr.bf16.mxu0 0
    %2335 = vmatpush1.bf16.msra.mxu0 %v1477
    %2336 = vmatprep.subr.bf16.mxu0 0
    %2337 = vmatpush1.bf16.msra.mxu0 %v1482
    %2338 = vmatprep.subr.bf16.mxu0 0
    %2339 = vmatpush1.bf16.msra.mxu0 %v1487
    %2340 = vmatprep.subr.bf16.mxu0 0
    %2341 = vmatpush1.bf16.msra.mxu0 %v1492
    %2342 = vmatprep.subr.bf16.mxu0 0
    %2343 = vmatpush1.bf16.msra.mxu0 %v1497
    %2344 = vmatprep.subr.bf16.mxu0 0
    %2345 = vmatpush1.bf16.msra.mxu0 %v1502
    %2346 = vmatprep.subr.bf16.mxu0 0
    %2347 = vmatpush1.bf16.msra.mxu0 %v1507
    %2348 = vmatprep.mubr.bf16.mxu0 %v519
    %2349 = vmatmul.mubr.bf16.gmra.mrb[0].mxu0 %v518
    %v2350 = vpop.f32.mrb[0].mxu0
    %v2351 = vadd.f32 %v501, %v2350
    %v2352 = vpop.f32.mrb[0].mxu0
    %v2353 = vpop.f32.mrb[0].mxu0
    %v2354 = vpop.f32.mrb[0].mxu0
    %2355 = vdwg.mxu0
    %2356 = vmatprep.subr.bf16.mxu0 0
    %2357 = vmatpush1.bf16.msra.mxu0 %v1512
    %2358 = vmatprep.subr.bf16.mxu0 0
    %2359 = vmatpush1.bf16.msra.mxu0 %v1517
    %2360 = vmatprep.subr.bf16.mxu0 0
    %2361 = vmatpush1.bf16.msra.mxu0 %v1522
    %2362 = vmatprep.subr.bf16.mxu0 0
    %2363 = vmatpush1.bf16.msra.mxu0 %v1527
    %2364 = vmatprep.subr.bf16.mxu0 0
    %2365 = vmatpush1.bf16.msra.mxu0 %v1532
    %2366 = vmatprep.subr.bf16.mxu0 0
    %2367 = vmatpush1.bf16.msra.mxu0 %v1537
    %2368 = vmatprep.subr.bf16.mxu0 0
    %2369 = vmatpush1.bf16.msra.mxu0 %v1542
    %2370 = vmatprep.subr.bf16.mxu0 0
    %2371 = vmatpush1.bf16.msra.mxu0 %v1547
    %2372 = vmatprep.subr.bf16.mxu0 0
    %2373 = vmatpush1.bf16.msra.mxu0 %v1552
    %2374 = vmatprep.subr.bf16.mxu0 0
    %2375 = vmatpush1.bf16.msra.mxu0 %v1557
    %2376 = vmatprep.subr.bf16.mxu0 0
    %2377 = vmatpush1.bf16.msra.mxu0 %v1562
    %2378 = vmatprep.subr.bf16.mxu0 0
    %2379 = vmatpush1.bf16.msra.mxu0 %v1567
    %2380 = vmatprep.subr.bf16.mxu0 0
    %2381 = vmatpush1.bf16.msra.mxu0 %v1572
    %2382 = vmatprep.subr.bf16.mxu0 0
    %2383 = vmatpush1.bf16.msra.mxu0 %v1577
    %2384 = vmatprep.subr.bf16.mxu0 0
    %2385 = vmatpush1.bf16.msra.mxu0 %v1582
    %2386 = vmatprep.subr.bf16.mxu0 0
    %2387 = vmatpush1.bf16.msra.mxu0 %v1587
    %2388 = vmatprep.mubr.bf16.mxu0 %v521
    %2389 = vmatmul.mubr.bf16.gmra.mrb[0].mxu0 %v520
    %v2390 = vpop.f32.mrb[0].mxu0
    %v2391 = vadd.f32 %v2351, %v2390
    %v2392 = vpop.f32.mrb[0].mxu0
    %v2393 = vpop.f32.mrb[0].mxu0
    %v2394 = vpop.f32.mrb[0].mxu0
    %2395 = vdwg.mxu0
    %2396 = vmatprep.subr.bf16.mxu0 0
    %2397 = vmatpush1.bf16.msra.mxu0 %v1592
    %2398 = vmatprep.subr.bf16.mxu0 0
    %2399 = vmatpush1.bf16.msra.mxu0 %v1597
    %2400 = vmatprep.subr.bf16.mxu0 0
    %2401 = vmatpush1.bf16.msra.mxu0 %v1602
    %2402 = vmatprep.subr.bf16.mxu0 0
    %2403 = vmatpush1.bf16.msra.mxu0 %v1607
    %2404 = vmatprep.subr.bf16.mxu0 0
    %2405 = vmatpush1.bf16.msra.mxu0 %v1612
    %2406 = vmatprep.subr.bf16.mxu0 0
    %2407 = vmatpush1.bf16.msra.mxu0 %v1617
    %2408 = vmatprep.subr.bf16.mxu0 0
    %2409 = vmatpush1.bf16.msra.mxu0 %v1622
    %2410 = vmatprep.subr.bf16.mxu0 0
    %2411 = vmatpush1.bf16.msra.mxu0 %v1627
    %2412 = vmatprep.subr.bf16.mxu0 0
    %2413 = vmatpush1.bf16.msra.mxu0 %v1632
    %2414 = vmatprep.subr.bf16.mxu0 0
    %2415 = vmatpush1.bf16.msra.mxu0 %v1637
    %2416 = vmatprep.subr.bf16.mxu0 0
    %2417 = vmatpush1.bf16.msra.mxu0 %v1642
    %2418 = vmatprep.subr.bf16.mxu0 0
    %2419 = vmatpush1.bf16.msra.mxu0 %v1647
    %2420 = vmatprep.subr.bf16.mxu0 0
    %2421 = vmatpush1.bf16.msra.mxu0 %v1652
    %2422 = vmatprep.subr.bf16.mxu0 0
    %2423 = vmatpush1.bf16.msra.mxu0 %v1657
    %2424 = vmatprep.subr.bf16.mxu0 0
    %2425 = vmatpush1.bf16.msra.mxu0 %v1662
    %2426 = vmatprep.subr.bf16.mxu0 0
    %2427 = vmatpush1.bf16.msra.mxu0 %v1667
    %2428 = vmatprep.mubr.bf16.mxu0 %v523
    %2429 = vmatmul.mubr.bf16.gmra.mrb[0].mxu0 %v522
    %v2430 = vpop.f32.mrb[0].mxu0
    %v2431 = vadd.f32 %v2391, %v2430
    %v2432 = vpop.f32.mrb[0].mxu0
    %v2433 = vpop.f32.mrb[0].mxu0
    %v2434 = vpop.f32.mrb[0].mxu0
    %2435 = vdwg.mxu0
    %2436 = vmatprep.subr.bf16.mxu0 0
    %2437 = vmatpush1.bf16.msra.mxu0 %v1672
    %2438 = vmatprep.subr.bf16.mxu0 0
    %2439 = vmatpush1.bf16.msra.mxu0 %v1677
    %2440 = vmatprep.subr.bf16.mxu0 0
    %2441 = vmatpush1.bf16.msra.mxu0 %v1682
    %2442 = vmatprep.subr.bf16.mxu0 0
    %2443 = vmatpush1.bf16.msra.mxu0 %v1687
    %2444 = vmatprep.subr.bf16.mxu0 0
    %2445 = vmatpush1.bf16.msra.mxu0 %v1692
    %2446 = vmatprep.subr.bf16.mxu0 0
    %2447 = vmatpush1.bf16.msra.mxu0 %v1697
    %2448 = vmatprep.subr.bf16.mxu0 0
    %2449 = vmatpush1.bf16.msra.mxu0 %v1702
    %2450 = vmatprep.subr.bf16.mxu0 0
    %2451 = vmatpush1.bf16.msra.mxu0 %v1707
    %2452 = vmatprep.subr.bf16.mxu0 0
    %2453 = vmatpush1.bf16.msra.mxu0 0
    %2454 = vmatprep.subr.bf16.mxu0 0
    %2455 = vmatpush1.bf16.msra.mxu0 0
    %2456 = vmatprep.subr.bf16.mxu0 0
    %2457 = vmatpush1.bf16.msra.mxu0 0
    %2458 = vmatprep.subr.bf16.mxu0 0
    %2459 = vmatpush1.bf16.msra.mxu0 0
    %2460 = vmatprep.subr.bf16.mxu0 0
    %2461 = vmatpush1.bf16.msra.mxu0 0
    %2462 = vmatprep.subr.bf16.mxu0 0
    %2463 = vmatpush1.bf16.msra.mxu0 0
    %2464 = vmatprep.subr.bf16.mxu0 0
    %2465 = vmatpush1.bf16.msra.mxu0 0
    %2466 = vmatprep.subr.bf16.mxu0 0
    %2467 = vmatpush1.bf16.msra.mxu0 0
    %2468 = vmatprep.mubr.bf16.mxu0 0
    %2469 = vmatmul.mubr.bf16.gmra.mrb[0].mxu0 %v524
    %v2470 = vpop.f32.mrb[0].mxu0
    %v2471 = vadd.f32 %v2431, %v2470
    %v2472 = vpop.f32.mrb[0].mxu0
    %v2473 = vpop.f32.mrb[0].mxu0
    %v2474 = vpop.f32.mrb[0].mxu0
    %2475 = vdwg.mxu0
    %v2476 = vmax.f32 %v2146, 0.0
    %v2477 = vmax.f32 %v2148, 0.0
    %v2478 = vmax.f32 %v2310, 0.0
    %v2479 = vmax.f32 %v2312, 0.0
    %v2480 = vmax.f32 %v2471, 0.0
    %v2481 = vpack.c.bf16 %v2476, %v2476
    %v2482 = vpack.c.bf16 %v2477, %v2477
    %v2483 = vpack.c.bf16 %v2478, %v2478
    %v2484 = vpack.c.bf16 %v2479, %v2479
    %v2485 = vpack.c.bf16 %v2480, %v2480
    %v2486 = vld [vmem:[#allocation7] sm:$0xff]
    %v2487 = vld [vmem:[#allocation7 + $0x8] sm:$0xff]
    %v2488 = vld [vmem:[#allocation7 + $0x10] sm:$0xff]
    %v2489 = vld [vmem:[#allocation7 + $0x18] sm:$0xff]
    %v2490 = vld [vmem:[#allocation7 + $0x20] sm:$0xff]
    %v2491 = vld [vmem:[#allocation7 + $0x28] sm:$0xff]
    %v2492 = vld [vmem:[#allocation7 + $0x30] sm:$0xff]
    %v2493 = vld [vmem:[#allocation7 + $0x38] sm:$0xff]
    %v2494 = vld [vmem:[#allocation7 + $0x40] sm:$0xff]
    %v2495 = vld [vmem:[#allocation7 + $0x48] sm:$0xff]
    %v2496 = vld [vmem:[#allocation7 + $0x50] sm:$0xff]
    %v2497 = vld [vmem:[#allocation7 + $0x58] sm:$0xff]
    %v2498 = vld [vmem:[#allocation7 + $0x60] sm:$0xff]
    %v2499 = vld [vmem:[#allocation7 + $0x68] sm:$0xff]
    %v2500 = vld [vmem:[#allocation7 + $0x70] sm:$0xff]
    %v2501 = vld [vmem:[#allocation7 + $0x78] sm:$0xff]
    %v2502 = vld [vmem:[#allocation7 + $0x80] sm:$0xff]
    %v2503 = vld [vmem:[#allocation7 + $0x88] sm:$0xff]
    %v2504 = vld [vmem:[#allocation7 + $0x90] sm:$0xff]
    %v2505 = vld [vmem:[#allocation7 + $0x98] sm:$0xff]
    %v2506 = vld [vmem:[#allocation7 + $0xa0] sm:$0xff]
    %v2507 = vld [vmem:[#allocation7 + $0xa8] sm:$0xff]
    %v2508 = vld [vmem:[#allocation7 + $0xb0] sm:$0xff]
    %v2509 = vld [vmem:[#allocation7 + $0xb8] sm:$0xff]
    %v2510 = vld [vmem:[#allocation7 + $0xc0] sm:$0xff]
    %v2511 = vld [vmem:[#allocation7 + $0xc8] sm:$0xff]
    %v2512 = vld [vmem:[#allocation7 + $0xd0] sm:$0xff]
    %v2513 = vld [vmem:[#allocation7 + $0xd8] sm:$0xff]
    %v2514 = vld [vmem:[#allocation7 + $0xe0] sm:$0xff]
    %v2515 = vld [vmem:[#allocation7 + $0xe8] sm:$0xff]
    %v2516 = vld [vmem:[#allocation7 + $0xf0] sm:$0xff]
    %v2517 = vld [vmem:[#allocation7 + $0xf8] sm:$0xff]
    %v2518 = vld [vmem:[#allocation7 + $0x100] sm:$0xff]
    %v2519 = vld [vmem:[#allocation7 + $0x108] sm:$0xff]
    %v2520 = vld [vmem:[#allocation7 + $0x110] sm:$0xff]
    %v2521 = vld [vmem:[#allocation7 + $0x118] sm:$0xff]
    %v2522 = vld [vmem:[#allocation7 + $0x120] sm:$0xff]
    %v2523 = vld [vmem:[#allocation7 + $0x128] sm:$0xff]
    %v2524 = vld [vmem:[#allocation7 + $0x130] sm:$0xff]
    %v2525 = vld [vmem:[#allocation7 + $0x138] sm:$0xff]
    %v2526 = vld [vmem:[#allocation7 + $0x140] sm:$0xff]
    %v2527 = vld [vmem:[#allocation7 + $0x148] sm:$0xff]
    %v2528 = vld [vmem:[#allocation7 + $0x150] sm:$0xff]
    %v2529 = vld [vmem:[#allocation7 + $0x158] sm:$0xff]
    %v2530 = vld [vmem:[#allocation7 + $0x160] sm:$0xff]
    %v2531 = vld [vmem:[#allocation7 + $0x168] sm:$0xff]
    %v2532 = vld [vmem:[#allocation7 + $0x170] sm:$0xff]
    %v2533 = vld [vmem:[#allocation7 + $0x178] sm:$0xff]
    %v2534 = vld [vmem:[#allocation7 + $0x180] sm:$0xff]
    %v2535 = vld [vmem:[#allocation7 + $0x188] sm:$0xff]
    %v2536 = vld [vmem:[#allocation7 + $0x190] sm:$0xff]
    %v2537 = vld [vmem:[#allocation7 + $0x198] sm:$0xff]
    %v2538 = vld [vmem:[#allocation7 + $0x1a0] sm:$0xff]
    %v2539 = vld [vmem:[#allocation7 + $0x1a8] sm:$0xff]
    %v2540 = vld [vmem:[#allocation7 + $0x1b0] sm:$0xff]
    %v2541 = vld [vmem:[#allocation7 + $0x1b8] sm:$0xff]
    %v2542 = vld [vmem:[#allocation7 + $0x1c0] sm:$0xff]
    %v2543 = vld [vmem:[#allocation7 + $0x1c8] sm:$0xff]
    %v2544 = vld [vmem:[#allocation7 + $0x1d0] sm:$0xff]
    %v2545 = vld [vmem:[#allocation7 + $0x1d8] sm:$0xff]
    %v2546 = vld [vmem:[#allocation7 + $0x1e0] sm:$0xff]
    %v2547 = vld [vmem:[#allocation7 + $0x1e8] sm:$0xff]
    %v2548 = vld [vmem:[#allocation7 + $0x1f0] sm:$0xff]
    %v2549 = vld [vmem:[#allocation7 + $0x1f8] sm:$0xff]
    %v2550 = vld [vmem:[#allocation7 + $0x200] sm:$0xff]
    %v2551 = vld [vmem:[#allocation7 + $0x208] sm:$0xff]
    %v2552 = vld [vmem:[#allocation7 + $0x210] sm:$0xff]
    %v2553 = vld [vmem:[#allocation7 + $0x218] sm:$0xff]
    %v2554 = vld [vmem:[#allocation7 + $0x220] sm:$0xff]
    %v2555 = vld [vmem:[#allocation7 + $0x228] sm:$0xff]
    %v2556 = vld [vmem:[#allocation7 + $0x230] sm:$0xff]
    %v2557 = vld [vmem:[#allocation7 + $0x238] sm:$0xff]
    %v2558 = vld [vmem:[#allocation7 + $0x240] sm:$0xff]
    %v2559 = vld [vmem:[#allocation7 + $0x248] sm:$0xff]
    %v2560 = vld [vmem:[#allocation7 + $0x250] sm:$0xff]
    %v2561 = vld [vmem:[#allocation7 + $0x258] sm:$0xff]
    %v2562 = vld [vmem:[#allocation7 + $0x260] sm:$0xff]
    %v2563 = vld [vmem:[#allocation7 + $0x268] sm:$0xff]
    %v2564 = vld [vmem:[#allocation7 + $0x270] sm:$0xff]
    %v2565 = vld [vmem:[#allocation7 + $0x278] sm:$0xff]
    %v2566 = vld [vmem:[#allocation8] sm:$0x3]
    %v2568 = vlaneseq
    %v2569 = vshrl.u32 %v2568, 7
    %v2570 = vsub.s32 0, %v2569
    %v2571 = vrot.slane %v2566, %v2570
    %v2572 = vlaneseq
    %v2573 = vshrl.u32 %v2572, 7
    %v2574 = vsub.s32 1, %v2573
    %v2575 = vrot.slane %v2566, %v2574
    %v2658 = vunpack.c.l.b16 %v2486
    %v2659 = vunpack.c.h.b16 %v2486
    %v2660 = vunpack.c.l.b16 %v2487
    %v2661 = vunpack.c.h.b16 %v2487
    %v2662 = vunpack.c.l.b16 %v2488
    %v2663 = vunpack.c.h.b16 %v2488
    %v2664 = vunpack.c.l.b16 %v2489
    %v2665 = vunpack.c.h.b16 %v2489
    %v2666 = vunpack.c.l.b16 %v2490
    %v2667 = vunpack.c.h.b16 %v2490
    %v2668 = vunpack.c.l.b16 %v2491
    %v2669 = vunpack.c.h.b16 %v2491
    %v2670 = vunpack.c.l.b16 %v2492
    %v2671 = vunpack.c.h.b16 %v2492
    %v2672 = vunpack.c.l.b16 %v2493
    %v2673 = vunpack.c.h.b16 %v2493
    %v2674 = vunpack.c.l.b16 %v2494
    %v2675 = vunpack.c.h.b16 %v2494
    %v2676 = vunpack.c.l.b16 %v2495
    %v2677 = vunpack.c.h.b16 %v2495
    %v2678 = vunpack.c.l.b16 %v2496
    %v2679 = vunpack.c.h.b16 %v2496
    %v2680 = vunpack.c.l.b16 %v2497
    %v2681 = vunpack.c.h.b16 %v2497
    %v2682 = vunpack.c.l.b16 %v2498
    %v2683 = vunpack.c.h.b16 %v2498
    %v2684 = vunpack.c.l.b16 %v2499
    %v2685 = vunpack.c.h.b16 %v2499
    %v2686 = vunpack.c.l.b16 %v2500
    %v2687 = vunpack.c.h.b16 %v2500
    %v2688 = vunpack.c.l.b16 %v2501
    %v2689 = vunpack.c.h.b16 %v2501
    %v2690 = vunpack.c.l.b16 %v2502
    %v2691 = vunpack.c.h.b16 %v2502
    %v2692 = vunpack.c.l.b16 %v2503
    %v2693 = vunpack.c.h.b16 %v2503
    %v2694 = vunpack.c.l.b16 %v2504
    %v2695 = vunpack.c.h.b16 %v2504
    %v2696 = vunpack.c.l.b16 %v2505
    %v2697 = vunpack.c.h.b16 %v2505
    %v2698 = vunpack.c.l.b16 %v2506
    %v2699 = vunpack.c.h.b16 %v2506
    %v2700 = vunpack.c.l.b16 %v2507
    %v2701 = vunpack.c.h.b16 %v2507
    %v2702 = vunpack.c.l.b16 %v2508
    %v2703 = vunpack.c.h.b16 %v2508
    %v2704 = vunpack.c.l.b16 %v2509
    %v2705 = vunpack.c.h.b16 %v2509
    %v2706 = vunpack.c.l.b16 %v2510
    %v2707 = vunpack.c.h.b16 %v2510
    %v2708 = vunpack.c.l.b16 %v2511
    %v2709 = vunpack.c.h.b16 %v2511
    %v2710 = vunpack.c.l.b16 %v2512
    %v2711 = vunpack.c.h.b16 %v2512
    %v2712 = vunpack.c.l.b16 %v2513
    %v2713 = vunpack.c.h.b16 %v2513
    %v2714 = vunpack.c.l.b16 %v2514
    %v2715 = vunpack.c.h.b16 %v2514
    %v2716 = vunpack.c.l.b16 %v2515
    %v2717 = vunpack.c.h.b16 %v2515
    %v2718 = vunpack.c.l.b16 %v2516
    %v2719 = vunpack.c.h.b16 %v2516
    %v2720 = vunpack.c.l.b16 %v2517
    %v2721 = vunpack.c.h.b16 %v2517
    %v2722 = vunpack.c.l.b16 %v2518
    %v2723 = vunpack.c.h.b16 %v2518
    %v2724 = vunpack.c.l.b16 %v2519
    %v2725 = vunpack.c.h.b16 %v2519
    %v2726 = vunpack.c.l.b16 %v2520
    %v2727 = vunpack.c.h.b16 %v2520
    %v2728 = vunpack.c.l.b16 %v2521
    %v2729 = vunpack.c.h.b16 %v2521
    %v2730 = vunpack.c.l.b16 %v2522
    %v2731 = vunpack.c.h.b16 %v2522
    %v2732 = vunpack.c.l.b16 %v2523
    %v2733 = vunpack.c.h.b16 %v2523
    %v2734 = vunpack.c.l.b16 %v2524
    %v2735 = vunpack.c.h.b16 %v2524
    %v2736 = vunpack.c.l.b16 %v2525
    %v2737 = vunpack.c.h.b16 %v2525
    %v2738 = vunpack.c.l.b16 %v2526
    %v2739 = vunpack.c.h.b16 %v2526
    %v2740 = vunpack.c.l.b16 %v2527
    %v2741 = vunpack.c.h.b16 %v2527
    %v2742 = vunpack.c.l.b16 %v2528
    %v2743 = vunpack.c.h.b16 %v2528
    %v2744 = vunpack.c.l.b16 %v2529
    %v2745 = vunpack.c.h.b16 %v2529
    %v2746 = vunpack.c.l.b16 %v2530
    %v2747 = vunpack.c.h.b16 %v2530
    %v2748 = vunpack.c.l.b16 %v2531
    %v2749 = vunpack.c.h.b16 %v2531
    %v2750 = vunpack.c.l.b16 %v2532
    %v2751 = vunpack.c.h.b16 %v2532
    %v2752 = vunpack.c.l.b16 %v2533
    %v2753 = vunpack.c.h.b16 %v2533
    %v2754 = vunpack.c.l.b16 %v2534
    %v2755 = vunpack.c.h.b16 %v2534
    %v2756 = vunpack.c.l.b16 %v2535
    %v2757 = vunpack.c.h.b16 %v2535
    %v2758 = vunpack.c.l.b16 %v2536
    %v2759 = vunpack.c.h.b16 %v2536
    %v2760 = vunpack.c.l.b16 %v2537
    %v2761 = vunpack.c.h.b16 %v2537
    %v2762 = vunpack.c.l.b16 %v2538
    %v2763 = vunpack.c.h.b16 %v2538
    %v2764 = vunpack.c.l.b16 %v2539
    %v2765 = vunpack.c.h.b16 %v2539
    %v2766 = vunpack.c.l.b16 %v2540
    %v2767 = vunpack.c.h.b16 %v2540
    %v2768 = vunpack.c.l.b16 %v2541
    %v2769 = vunpack.c.h.b16 %v2541
    %v2770 = vunpack.c.l.b16 %v2542
    %v2771 = vunpack.c.h.b16 %v2542
    %v2772 = vunpack.c.l.b16 %v2543
    %v2773 = vunpack.c.h.b16 %v2543
    %v2774 = vunpack.c.l.b16 %v2544
    %v2775 = vunpack.c.h.b16 %v2544
    %v2776 = vunpack.c.l.b16 %v2545
    %v2777 = vunpack.c.h.b16 %v2545
    %v2778 = vunpack.c.l.b16 %v2546
    %v2779 = vunpack.c.h.b16 %v2546
    %v2780 = vunpack.c.l.b16 %v2547
    %v2781 = vunpack.c.h.b16 %v2547
    %v2782 = vunpack.c.l.b16 %v2548
    %v2783 = vunpack.c.h.b16 %v2548
    %v2784 = vunpack.c.l.b16 %v2549
    %v2785 = vunpack.c.h.b16 %v2549
    %v2786 = vunpack.c.l.b16 %v2550
    %v2787 = vunpack.c.h.b16 %v2550
    %v2788 = vunpack.c.l.b16 %v2551
    %v2789 = vunpack.c.h.b16 %v2551
    %v2790 = vunpack.c.l.b16 %v2552
    %v2791 = vunpack.c.h.b16 %v2552
    %v2792 = vunpack.c.l.b16 %v2553
    %v2793 = vunpack.c.h.b16 %v2553
    %v2794 = vunpack.c.l.b16 %v2554
    %v2795 = vunpack.c.h.b16 %v2554
    %v2796 = vunpack.c.l.b16 %v2555
    %v2797 = vunpack.c.h.b16 %v2555
    %v2798 = vunpack.c.l.b16 %v2556
    %v2799 = vunpack.c.h.b16 %v2556
    %v2800 = vunpack.c.l.b16 %v2557
    %v2801 = vunpack.c.h.b16 %v2557
    %v2802 = vunpack.c.l.b16 %v2558
    %v2803 = vunpack.c.h.b16 %v2558
    %v2804 = vunpack.c.l.b16 %v2559
    %v2805 = vunpack.c.h.b16 %v2559
    %v2806 = vunpack.c.l.b16 %v2560
    %v2807 = vunpack.c.h.b16 %v2560
    %v2808 = vunpack.c.l.b16 %v2561
    %v2809 = vunpack.c.h.b16 %v2561
    %v2810 = vunpack.c.l.b16 %v2562
    %v2811 = vunpack.c.h.b16 %v2562
    %v2812 = vunpack.c.l.b16 %v2563
    %v2813 = vunpack.c.h.b16 %v2563
    %v2814 = vunpack.c.l.b16 %v2564
    %v2815 = vunpack.c.h.b16 %v2564
    %v2816 = vunpack.c.l.b16 %v2565
    %v2817 = vunpack.c.h.b16 %v2565
    %v2818 = vpack.c.b16 %v2660, %v2658
    %v2819 = vpack.c.b16 %v2661, %v2659
    %v2820 = vpack.c.b16 %v2664, %v2662
    %v2821 = vpack.c.b16 %v2665, %v2663
    %v2822 = vpack.c.b16 %v2668, %v2666
    %v2823 = vpack.c.b16 %v2669, %v2667
    %v2824 = vpack.c.b16 %v2672, %v2670
    %v2825 = vpack.c.b16 %v2673, %v2671
    %v2826 = vpack.c.b16 %v2676, %v2674
    %v2827 = vpack.c.b16 %v2677, %v2675
    %v2828 = vpack.c.b16 %v2680, %v2678
    %v2829 = vpack.c.b16 %v2681, %v2679
    %v2830 = vpack.c.b16 %v2684, %v2682
    %v2831 = vpack.c.b16 %v2685, %v2683
    %v2832 = vpack.c.b16 %v2688, %v2686
    %v2833 = vpack.c.b16 %v2689, %v2687
    %v2834 = vpack.c.b16 %v2692, %v2690
    %v2835 = vpack.c.b16 %v2693, %v2691
    %v2836 = vpack.c.b16 %v2696, %v2694
    %v2837 = vpack.c.b16 %v2697, %v2695
    %v2838 = vpack.c.b16 %v2700, %v2698
    %v2839 = vpack.c.b16 %v2701, %v2699
    %v2840 = vpack.c.b16 %v2704, %v2702
    %v2841 = vpack.c.b16 %v2705, %v2703
    %v2842 = vpack.c.b16 %v2708, %v2706
    %v2843 = vpack.c.b16 %v2709, %v2707
    %v2844 = vpack.c.b16 %v2712, %v2710
    %v2845 = vpack.c.b16 %v2713, %v2711
    %v2846 = vpack.c.b16 %v2716, %v2714
    %v2847 = vpack.c.b16 %v2717, %v2715
    %v2848 = vpack.c.b16 %v2720, %v2718
    %v2849 = vpack.c.b16 %v2721, %v2719
    %v2850 = vpack.c.b16 %v2724, %v2722
    %v2851 = vpack.c.b16 %v2725, %v2723
    %v2852 = vpack.c.b16 %v2728, %v2726
    %v2853 = vpack.c.b16 %v2729, %v2727
    %v2854 = vpack.c.b16 %v2732, %v2730
    %v2855 = vpack.c.b16 %v2733, %v2731
    %v2856 = vpack.c.b16 %v2736, %v2734
    %v2857 = vpack.c.b16 %v2737, %v2735
    %v2858 = vpack.c.b16 %v2740, %v2738
    %v2859 = vpack.c.b16 %v2741, %v2739
    %v2860 = vpack.c.b16 %v2744, %v2742
    %v2861 = vpack.c.b16 %v2745, %v2743
    %v2862 = vpack.c.b16 %v2748, %v2746
    %v2863 = vpack.c.b16 %v2749, %v2747
    %v2864 = vpack.c.b16 %v2752, %v2750
    %v2865 = vpack.c.b16 %v2753, %v2751
    %v2866 = vpack.c.b16 %v2756, %v2754
    %v2867 = vpack.c.b16 %v2757, %v2755
    %v2868 = vpack.c.b16 %v2760, %v2758
    %v2869 = vpack.c.b16 %v2761, %v2759
    %v2870 = vpack.c.b16 %v2764, %v2762
    %v2871 = vpack.c.b16 %v2765, %v2763
    %v2872 = vpack.c.b16 %v2768, %v2766
    %v2873 = vpack.c.b16 %v2769, %v2767
    %v2874 = vpack.c.b16 %v2772, %v2770
    %v2875 = vpack.c.b16 %v2773, %v2771
    %v2876 = vpack.c.b16 %v2776, %v2774
    %v2877 = vpack.c.b16 %v2777, %v2775
    %v2878 = vpack.c.b16 %v2780, %v2778
    %v2879 = vpack.c.b16 %v2781, %v2779
    %v2880 = vpack.c.b16 %v2784, %v2782
    %v2881 = vpack.c.b16 %v2785, %v2783
    %v2882 = vpack.c.b16 %v2788, %v2786
    %v2883 = vpack.c.b16 %v2789, %v2787
    %v2884 = vpack.c.b16 %v2792, %v2790
    %v2885 = vpack.c.b16 %v2793, %v2791
    %v2886 = vpack.c.b16 %v2796, %v2794
    %v2887 = vpack.c.b16 %v2797, %v2795
    %v2888 = vpack.c.b16 %v2800, %v2798
    %v2889 = vpack.c.b16 %v2801, %v2799
    %v2890 = vpack.c.b16 %v2804, %v2802
    %v2891 = vpack.c.b16 %v2805, %v2803
    %v2892 = vpack.c.b16 %v2808, %v2806
    %v2893 = vpack.c.b16 %v2809, %v2807
    %v2894 = vpack.c.b16 %v2812, %v2810
    %v2895 = vpack.c.b16 %v2813, %v2811
    %v2896 = vpack.c.b16 %v2816, %v2814
    %v2897 = vpack.c.b16 %v2817, %v2815
    %2978 = vmatprep.subr.bf16.mxu0 %v2819
    %2979 = vmatpush1.bf16.msra.mxu0 %v2818
    %2980 = vmatprep.subr.bf16.mxu0 %v2821
    %2981 = vmatpush1.bf16.msra.mxu0 %v2820
    %2982 = vmatprep.subr.bf16.mxu0 %v2823
    %2983 = vmatpush1.bf16.msra.mxu0 %v2822
    %2984 = vmatprep.subr.bf16.mxu0 %v2825
    %2985 = vmatpush1.bf16.msra.mxu0 %v2824
    %2986 = vmatprep.subr.bf16.mxu0 %v2827
    %2987 = vmatpush1.bf16.msra.mxu0 %v2826
    %2988 = vmatprep.subr.bf16.mxu0 %v2829
    %2989 = vmatpush1.bf16.msra.mxu0 %v2828
    %2990 = vmatprep.subr.bf16.mxu0 %v2831
    %2991 = vmatpush1.bf16.msra.mxu0 %v2830
    %2992 = vmatprep.subr.bf16.mxu0 %v2833
    %2993 = vmatpush1.bf16.msra.mxu0 %v2832
    %2994 = vmatprep.subr.bf16.mxu0 %v2835
    %2995 = vmatpush1.bf16.msra.mxu0 %v2834
    %2996 = vmatprep.subr.bf16.mxu0 %v2837
    %2997 = vmatpush1.bf16.msra.mxu0 %v2836
    %2998 = vmatprep.subr.bf16.mxu0 %v2839
    %2999 = vmatpush1.bf16.msra.mxu0 %v2838
    %3000 = vmatprep.subr.bf16.mxu0 %v2841
    %3001 = vmatpush1.bf16.msra.mxu0 %v2840
    %3002 = vmatprep.subr.bf16.mxu0 %v2843
    %3003 = vmatpush1.bf16.msra.mxu0 %v2842
    %3004 = vmatprep.subr.bf16.mxu0 %v2845
    %3005 = vmatpush1.bf16.msra.mxu0 %v2844
    %3006 = vmatprep.subr.bf16.mxu0 %v2847
    %3007 = vmatpush1.bf16.msra.mxu0 %v2846
    %3008 = vmatprep.subr.bf16.mxu0 %v2849
    %3009 = vmatpush1.bf16.msra.mxu0 %v2848
    %3010 = vmatprep.mubr.bf16.mxu0 %v2482
    %3011 = vmatmul.mubr.bf16.gmra.mrb[0].mxu0 %v2481
    %v3012 = vpop.f32.mrb[0].mxu0
    %v3013 = vadd.f32 %v2571, %v3012
    %v3014 = vpop.f32.mrb[0].mxu0
    %v3015 = vadd.f32 %v2575, %v3014
    %v3016 = vpop.f32.mrb[0].mxu0
    %v3017 = vpop.f32.mrb[0].mxu0
    %3018 = vdwg.mxu0
    %3019 = vmatprep.subr.bf16.mxu0 %v2851
    %3020 = vmatpush1.bf16.msra.mxu0 %v2850
    %3021 = vmatprep.subr.bf16.mxu0 %v2853
    %3022 = vmatpush1.bf16.msra.mxu0 %v2852
    %3023 = vmatprep.subr.bf16.mxu0 %v2855
    %3024 = vmatpush1.bf16.msra.mxu0 %v2854
    %3025 = vmatprep.subr.bf16.mxu0 %v2857
    %3026 = vmatpush1.bf16.msra.mxu0 %v2856
    %3027 = vmatprep.subr.bf16.mxu0 %v2859
    %3028 = vmatpush1.bf16.msra.mxu0 %v2858
    %3029 = vmatprep.subr.bf16.mxu0 %v2861
    %3030 = vmatpush1.bf16.msra.mxu0 %v2860
    %3031 = vmatprep.subr.bf16.mxu0 %v2863
    %3032 = vmatpush1.bf16.msra.mxu0 %v2862
    %3033 = vmatprep.subr.bf16.mxu0 %v2865
    %3034 = vmatpush1.bf16.msra.mxu0 %v2864
    %3035 = vmatprep.subr.bf16.mxu0 %v2867
    %3036 = vmatpush1.bf16.msra.mxu0 %v2866
    %3037 = vmatprep.subr.bf16.mxu0 %v2869
    %3038 = vmatpush1.bf16.msra.mxu0 %v2868
    %3039 = vmatprep.subr.bf16.mxu0 %v2871
    %3040 = vmatpush1.bf16.msra.mxu0 %v2870
    %3041 = vmatprep.subr.bf16.mxu0 %v2873
    %3042 = vmatpush1.bf16.msra.mxu0 %v2872
    %3043 = vmatprep.subr.bf16.mxu0 %v2875
    %3044 = vmatpush1.bf16.msra.mxu0 %v2874
    %3045 = vmatprep.subr.bf16.mxu0 %v2877
    %3046 = vmatpush1.bf16.msra.mxu0 %v2876
    %3047 = vmatprep.subr.bf16.mxu0 %v2879
    %3048 = vmatpush1.bf16.msra.mxu0 %v2878
    %3049 = vmatprep.subr.bf16.mxu0 %v2881
    %3050 = vmatpush1.bf16.msra.mxu0 %v2880
    %3051 = vmatprep.mubr.bf16.mxu0 %v2484
    %3052 = vmatmul.mubr.bf16.gmra.mrb[0].mxu0 %v2483
    %v3053 = vpop.f32.mrb[0].mxu0
    %v3054 = vadd.f32 %v3013, %v3053
    %v3055 = vpop.f32.mrb[0].mxu0
    %v3056 = vadd.f32 %v3015, %v3055
    %v3057 = vpop.f32.mrb[0].mxu0
    %v3058 = vpop.f32.mrb[0].mxu0
    %3059 = vdwg.mxu0
    %3060 = vmatprep.subr.bf16.mxu0 %v2883
    %3061 = vmatpush1.bf16.msra.mxu0 %v2882
    %3062 = vmatprep.subr.bf16.mxu0 %v2885
    %3063 = vmatpush1.bf16.msra.mxu0 %v2884
    %3064 = vmatprep.subr.bf16.mxu0 %v2887
    %3065 = vmatpush1.bf16.msra.mxu0 %v2886
    %3066 = vmatprep.subr.bf16.mxu0 %v2889
    %3067 = vmatpush1.bf16.msra.mxu0 %v2888
    %3068 = vmatprep.subr.bf16.mxu0 %v2891
    %3069 = vmatpush1.bf16.msra.mxu0 %v2890
    %3070 = vmatprep.subr.bf16.mxu0 %v2893
    %3071 = vmatpush1.bf16.msra.mxu0 %v2892
    %3072 = vmatprep.subr.bf16.mxu0 %v2895
    %3073 = vmatpush1.bf16.msra.mxu0 %v2894
    %3074 = vmatprep.subr.bf16.mxu0 %v2897
    %3075 = vmatpush1.bf16.msra.mxu0 %v2896
    %3076 = vmatprep.subr.bf16.mxu0 0
    %3077 = vmatpush1.bf16.msra.mxu0 0
    %3078 = vmatprep.subr.bf16.mxu0 0
    %3079 = vmatpush1.bf16.msra.mxu0 0
    %3080 = vmatprep.subr.bf16.mxu0 0
    %3081 = vmatpush1.bf16.msra.mxu0 0
    %3082 = vmatprep.subr.bf16.mxu0 0
    %3083 = vmatpush1.bf16.msra.mxu0 0
    %3084 = vmatprep.subr.bf16.mxu0 0
    %3085 = vmatpush1.bf16.msra.mxu0 0
    %3086 = vmatprep.subr.bf16.mxu0 0
    %3087 = vmatpush1.bf16.msra.mxu0 0
    %3088 = vmatprep.subr.bf16.mxu0 0
    %3089 = vmatpush1.bf16.msra.mxu0 0
    %3090 = vmatprep.subr.bf16.mxu0 0
    %3091 = vmatpush1.bf16.msra.mxu0 0
    %3092 = vmatprep.mubr.bf16.mxu0 0
    %3093 = vmatmul.mubr.bf16.gmra.mrb[0].mxu0 %v2485
    %v3094 = vpop.f32.mrb[0].mxu0
    %v3095 = vadd.f32 %v3054, %v3094
    %v3096 = vpop.f32.mrb[0].mxu0
    %v3097 = vadd.f32 %v3056, %v3096
    %v3098 = vpop.f32.mrb[0].mxu0
    %v3099 = vpop.f32.mrb[0].mxu0
    %3100 = vdwg.mxu0
    %v3101 = vld [vmem:[%s1] sm:$0xf]
    %v3102 = vunpack.c.l.bf16 %v3101
    %v3103 = vmul.f32 %v3097, 0.5
    %v3104 = vmul.f32 %v3103, 1.442695
    %v3105 = vpow.pop %v3104
    %v3106 = vmul.f32 %v3102, %v3105
    %v3107 = vadd.f32 %v3095, %v3106
    %v3108 = vpack.c.bf16 %v3107, %v3107
    %v3109 = vld [vmem:[#allocation10] sm:$0xff]
    %v3110 = vld [vmem:[#allocation10 + $0x8] sm:$0xff]
    %v3111 = vld [vmem:[#allocation10 + $0x10] sm:$0xf]
    %v3112 = vld [vmem:[#allocation10 + $0x14] sm:$0xff]
    %v3113 = vld [vmem:[#allocation10 + $0x1c] sm:$0xff]
    %v3114 = vld [vmem:[#allocation10 + $0x24] sm:$0xf]
    %v3115 = vld [vmem:[#allocation10 + $0x28] sm:$0xff]
    %v3116 = vld [vmem:[#allocation10 + $0x30] sm:$0xff]
    %v3117 = vld [vmem:[#allocation10 + $0x38] sm:$0xf]
    %v3118 = vld [vmem:[#allocation10 + $0x3c] sm:$0xff]
    %v3119 = vld [vmem:[#allocation10 + $0x44] sm:$0xff]
    %v3120 = vld [vmem:[#allocation10 + $0x4c] sm:$0xf]
    %v3121 = vld [vmem:[#allocation10 + $0x50] sm:$0xff]
    %v3122 = vld [vmem:[#allocation10 + $0x58] sm:$0xff]
    %v3123 = vld [vmem:[#allocation10 + $0x60] sm:$0xf]
    %v3124 = vld [vmem:[#allocation10 + $0x64] sm:$0xff]
    %v3125 = vld [vmem:[#allocation10 + $0x6c] sm:$0xff]
    %v3126 = vld [vmem:[#allocation10 + $0x74] sm:$0xf]
    %v3127 = vld [vmem:[#allocation10 + $0x78] sm:$0xff]
    %v3128 = vld [vmem:[#allocation10 + $0x80] sm:$0xff]
    %v3129 = vld [vmem:[#allocation10 + $0x88] sm:$0xf]
    %v3130 = vld [vmem:[#allocation10 + $0x8c] sm:$0xff]
    %v3131 = vld [vmem:[#allocation10 + $0x94] sm:$0xff]
    %v3132 = vld [vmem:[#allocation10 + $0x9c] sm:$0xf]
    %v3133 = vld [vmem:[#allocation10 + $0xa0] sm:$0xff]
    %v3134 = vld [vmem:[#allocation10 + $0xa8] sm:$0xff]
    %v3135 = vld [vmem:[#allocation10 + $0xb0] sm:$0xf]
    %v3136 = vld [vmem:[#allocation10 + $0xb4] sm:$0xff]
    %v3137 = vld [vmem:[#allocation10 + $0xbc] sm:$0xff]
    %v3138 = vld [vmem:[#allocation10 + $0xc4] sm:$0xf]
    %v3139 = vld [vmem:[#allocation10 + $0xc8] sm:$0xff]
    %v3140 = vld [vmem:[#allocation10 + $0xd0] sm:$0xff]
    %v3141 = vld [vmem:[#allocation10 + $0xd8] sm:$0xf]
    %v3142 = vld [vmem:[#allocation10 + $0xdc] sm:$0xff]
    %v3143 = vld [vmem:[#allocation10 + $0xe4] sm:$0xff]
    %v3144 = vld [vmem:[#allocation10 + $0xec] sm:$0xf]
    %v3145 = vld [vmem:[#allocation10 + $0xf0] sm:$0xff]
    %v3146 = vld [vmem:[#allocation10 + $0xf8] sm:$0xff]
    %v3147 = vld [vmem:[#allocation10 + $0x100] sm:$0xf]
    %v3148 = vld [vmem:[#allocation10 + $0x104] sm:$0xff]
    %v3149 = vld [vmem:[#allocation10 + $0x10c] sm:$0xff]
    %v3150 = vld [vmem:[#allocation10 + $0x114] sm:$0xf]
    %v3151 = vld [vmem:[#allocation10 + $0x118] sm:$0xff]
    %v3152 = vld [vmem:[#allocation10 + $0x120] sm:$0xff]
    %v3153 = vld [vmem:[#allocation10 + $0x128] sm:$0xf]
    %v3154 = vld [vmem:[#allocation10 + $0x12c] sm:$0xff]
    %v3155 = vld [vmem:[#allocation10 + $0x134] sm:$0xff]
    %v3156 = vld [vmem:[#allocation10 + $0x13c] sm:$0xf]
    %v3157 = vld [vmem:[#allocation11] sm:$0x1f]
    %v3159 = vlaneseq
    %v3160 = vshrl.u32 %v3159, 7
    %v3161 = vsub.s32 0, %v3160
    %v3162 = vrot.slane %v3157, %v3161
    %v3163 = vlaneseq
    %v3164 = vshrl.u32 %v3163, 7
    %v3165 = vsub.s32 1, %v3164
    %v3166 = vrot.slane %v3157, %v3165
    %v3167 = vlaneseq
    %v3168 = vshrl.u32 %v3167, 7
    %v3169 = vsub.s32 2, %v3168
    %v3170 = vrot.slane %v3157, %v3169
    %v3171 = vlaneseq
    %v3172 = vshrl.u32 %v3171, 7
    %v3173 = vsub.s32 3, %v3172
    %v3174 = vrot.slane %v3157, %v3173
    %v3175 = vlaneseq
    %v3176 = vshrl.u32 %v3175, 7
    %v3177 = vsub.s32 4, %v3176
    %v3178 = vrot.slane %v3157, %v3177
    %v3232 = vunpack.c.l.b16 %v3109
    %v3233 = vunpack.c.h.b16 %v3109
    %v3234 = vunpack.c.l.b16 %v3110
    %v3235 = vunpack.c.h.b16 %v3110
    %v3236 = vunpack.c.l.b16 %v3111
    %v3237 = vunpack.c.l.b16 %v3112
    %v3238 = vunpack.c.h.b16 %v3112
    %v3239 = vunpack.c.l.b16 %v3113
    %v3240 = vunpack.c.h.b16 %v3113
    %v3241 = vunpack.c.l.b16 %v3114
    %v3242 = vunpack.c.l.b16 %v3115
    %v3243 = vunpack.c.h.b16 %v3115
    %v3244 = vunpack.c.l.b16 %v3116
    %v3245 = vunpack.c.h.b16 %v3116
    %v3246 = vunpack.c.l.b16 %v3117
    %v3247 = vunpack.c.l.b16 %v3118
    %v3248 = vunpack.c.h.b16 %v3118
    %v3249 = vunpack.c.l.b16 %v3119
    %v3250 = vunpack.c.h.b16 %v3119
    %v3251 = vunpack.c.l.b16 %v3120
    %v3252 = vunpack.c.l.b16 %v3121
    %v3253 = vunpack.c.h.b16 %v3121
    %v3254 = vunpack.c.l.b16 %v3122
    %v3255 = vunpack.c.h.b16 %v3122
    %v3256 = vunpack.c.l.b16 %v3123
    %v3257 = vunpack.c.l.b16 %v3124
    %v3258 = vunpack.c.h.b16 %v3124
    %v3259 = vunpack.c.l.b16 %v3125
    %v3260 = vunpack.c.h.b16 %v3125
    %v3261 = vunpack.c.l.b16 %v3126
    %v3262 = vunpack.c.l.b16 %v3127
    %v3263 = vunpack.c.h.b16 %v3127
    %v3264 = vunpack.c.l.b16 %v3128
    %v3265 = vunpack.c.h.b16 %v3128
    %v3266 = vunpack.c.l.b16 %v3129
    %v3267 = vunpack.c.l.b16 %v3130
    %v3268 = vunpack.c.h.b16 %v3130
    %v3269 = vunpack.c.l.b16 %v3131
    %v3270 = vunpack.c.h.b16 %v3131
    %v3271 = vunpack.c.l.b16 %v3132
    %v3272 = vunpack.c.l.b16 %v3133
    %v3273 = vunpack.c.h.b16 %v3133
    %v3274 = vunpack.c.l.b16 %v3134
    %v3275 = vunpack.c.h.b16 %v3134
    %v3276 = vunpack.c.l.b16 %v3135
    %v3277 = vunpack.c.l.b16 %v3136
    %v3278 = vunpack.c.h.b16 %v3136
    %v3279 = vunpack.c.l.b16 %v3137
    %v3280 = vunpack.c.h.b16 %v3137
    %v3281 = vunpack.c.l.b16 %v3138
    %v3282 = vunpack.c.l.b16 %v3139
    %v3283 = vunpack.c.h.b16 %v3139
    %v3284 = vunpack.c.l.b16 %v3140
    %v3285 = vunpack.c.h.b16 %v3140
    %v3286 = vunpack.c.l.b16 %v3141
    %v3287 = vunpack.c.l.b16 %v3142
    %v3288 = vunpack.c.h.b16 %v3142
    %v3289 = vunpack.c.l.b16 %v3143
    %v3290 = vunpack.c.h.b16 %v3143
    %v3291 = vunpack.c.l.b16 %v3144
    %v3292 = vunpack.c.l.b16 %v3145
    %v3293 = vunpack.c.h.b16 %v3145
    %v3294 = vunpack.c.l.b16 %v3146
    %v3295 = vunpack.c.h.b16 %v3146
    %v3296 = vunpack.c.l.b16 %v3147
    %v3297 = vunpack.c.l.b16 %v3148
    %v3298 = vunpack.c.h.b16 %v3148
    %v3299 = vunpack.c.l.b16 %v3149
    %v3300 = vunpack.c.h.b16 %v3149
    %v3301 = vunpack.c.l.b16 %v3150
    %v3302 = vunpack.c.l.b16 %v3151
    %v3303 = vunpack.c.h.b16 %v3151
    %v3304 = vunpack.c.l.b16 %v3152
    %v3305 = vunpack.c.h.b16 %v3152
    %v3306 = vunpack.c.l.b16 %v3153
    %v3307 = vunpack.c.l.b16 %v3154
    %v3308 = vunpack.c.h.b16 %v3154
    %v3309 = vunpack.c.l.b16 %v3155
    %v3310 = vunpack.c.h.b16 %v3155
    %v3311 = vunpack.c.l.b16 %v3156
    %v3312 = vpack.c.b16 %v3237, %v3232
    %v3313 = vpack.c.b16 %v3238, %v3233
    %v3314 = vpack.c.b16 %v3239, %v3234
    %v3315 = vpack.c.b16 %v3240, %v3235
    %v3316 = vpack.c.b16 %v3241, %v3236
    %v3317 = vpack.c.b16 %v3247, %v3242
    %v3318 = vpack.c.b16 %v3248, %v3243
    %v3319 = vpack.c.b16 %v3249, %v3244
    %v3320 = vpack.c.b16 %v3250, %v3245
    %v3321 = vpack.c.b16 %v3251, %v3246
    %v3322 = vpack.c.b16 %v3257, %v3252
    %v3323 = vpack.c.b16 %v3258, %v3253
    %v3324 = vpack.c.b16 %v3259, %v3254
    %v3325 = vpack.c.b16 %v3260, %v3255
    %v3326 = vpack.c.b16 %v3261, %v3256
    %v3327 = vpack.c.b16 %v3267, %v3262
    %v3328 = vpack.c.b16 %v3268, %v3263
    %v3329 = vpack.c.b16 %v3269, %v3264
    %v3330 = vpack.c.b16 %v3270, %v3265
    %v3331 = vpack.c.b16 %v3271, %v3266
    %v3332 = vpack.c.b16 %v3277, %v3272
    %v3333 = vpack.c.b16 %v3278, %v3273
    %v3334 = vpack.c.b16 %v3279, %v3274
    %v3335 = vpack.c.b16 %v3280, %v3275
    %v3336 = vpack.c.b16 %v3281, %v3276
    %v3337 = vpack.c.b16 %v3287, %v3282
    %v3338 = vpack.c.b16 %v3288, %v3283
    %v3339 = vpack.c.b16 %v3289, %v3284
    %v3340 = vpack.c.b16 %v3290, %v3285
    %v3341 = vpack.c.b16 %v3291, %v3286
    %v3342 = vpack.c.b16 %v3297, %v3292
    %v3343 = vpack.c.b16 %v3298, %v3293
    %v3344 = vpack.c.b16 %v3299, %v3294
    %v3345 = vpack.c.b16 %v3300, %v3295
    %v3346 = vpack.c.b16 %v3301, %v3296
    %v3347 = vpack.c.b16 %v3307, %v3302
    %v3348 = vpack.c.b16 %v3308, %v3303
    %v3349 = vpack.c.b16 %v3309, %v3304
    %v3350 = vpack.c.b16 %v3310, %v3305
    %v3351 = vpack.c.b16 %v3311, %v3306
    %3392 = vmatprep.subr.bf16.mxu0 %v3313
    %3393 = vmatpush1.bf16.msra.mxu0 %v3312
    %3394 = vmatprep.subr.bf16.mxu0 %v3318
    %3395 = vmatpush1.bf16.msra.mxu0 %v3317
    %3396 = vmatprep.subr.bf16.mxu0 %v3323
    %3397 = vmatpush1.bf16.msra.mxu0 %v3322
    %3398 = vmatprep.subr.bf16.mxu0 %v3328
    %3399 = vmatpush1.bf16.msra.mxu0 %v3327
    %3400 = vmatprep.subr.bf16.mxu0 %v3333
    %3401 = vmatpush1.bf16.msra.mxu0 %v3332
    %3402 = vmatprep.subr.bf16.mxu0 %v3338
    %3403 = vmatpush1.bf16.msra.mxu0 %v3337
    %3404 = vmatprep.subr.bf16.mxu0 %v3343
    %3405 = vmatpush1.bf16.msra.mxu0 %v3342
    %3406 = vmatprep.subr.bf16.mxu0 %v3348
    %3407 = vmatpush1.bf16.msra.mxu0 %v3347
    %3408 = vmatprep.subr.bf16.mxu0 0
    %3409 = vmatpush1.bf16.msra.mxu0 0
    %3410 = vmatprep.subr.bf16.mxu0 0
    %3411 = vmatpush1.bf16.msra.mxu0 0
    %3412 = vmatprep.subr.bf16.mxu0 0
    %3413 = vmatpush1.bf16.msra.mxu0 0
    %3414 = vmatprep.subr.bf16.mxu0 0
    %3415 = vmatpush1.bf16.msra.mxu0 0
    %3416 = vmatprep.subr.bf16.mxu0 0
    %3417 = vmatpush1.bf16.msra.mxu0 0
    %3418 = vmatprep.subr.bf16.mxu0 0
    %3419 = vmatpush1.bf16.msra.mxu0 0
    %3420 = vmatprep.subr.bf16.mxu0 0
    %3421 = vmatpush1.bf16.msra.mxu0 0
    %3422 = vmatprep.subr.bf16.mxu0 0
    %3423 = vmatpush1.bf16.msra.mxu0 0
    %3424 = vmatprep.mubr.bf16.mxu0 0
    %3425 = vmatmul.mubr.bf16.gmra.mrb[0].mxu0 %v3108
    %v3426 = vpop.f32.mrb[0].mxu0
    %v3427 = vadd.f32 %v3162, %v3426
    %v3428 = vpop.f32.mrb[0].mxu0
    %v3429 = vadd.f32 %v3166, %v3428
    %v3430 = vpop.f32.mrb[0].mxu0
    %v3431 = vpop.f32.mrb[0].mxu0
    %3432 = vdwg.mxu0
    %3433 = vmatprep.subr.bf16.mxu0 %v3315
    %3434 = vmatpush1.bf16.msra.mxu0 %v3314
    %3435 = vmatprep.subr.bf16.mxu0 %v3320
    %3436 = vmatpush1.bf16.msra.mxu0 %v3319
    %3437 = vmatprep.subr.bf16.mxu0 %v3325
    %3438 = vmatpush1.bf16.msra.mxu0 %v3324
    %3439 = vmatprep.subr.bf16.mxu0 %v3330
    %3440 = vmatpush1.bf16.msra.mxu0 %v3329
    %3441 = vmatprep.subr.bf16.mxu0 %v3335
    %3442 = vmatpush1.bf16.msra.mxu0 %v3334
    %3443 = vmatprep.subr.bf16.mxu0 %v3340
    %3444 = vmatpush1.bf16.msra.mxu0 %v3339
    %3445 = vmatprep.subr.bf16.mxu0 %v3345
    %3446 = vmatpush1.bf16.msra.mxu0 %v3344
    %3447 = vmatprep.subr.bf16.mxu0 %v3350
    %3448 = vmatpush1.bf16.msra.mxu0 %v3349
    %3449 = vmatprep.subr.bf16.mxu0 0
    %3450 = vmatpush1.bf16.msra.mxu0 0
    %3451 = vmatprep.subr.bf16.mxu0 0
    %3452 = vmatpush1.bf16.msra.mxu0 0
    %3453 = vmatprep.subr.bf16.mxu0 0
    %3454 = vmatpush1.bf16.msra.mxu0 0
    %3455 = vmatprep.subr.bf16.mxu0 0
    %3456 = vmatpush1.bf16.msra.mxu0 0
    %3457 = vmatprep.subr.bf16.mxu0 0
    %3458 = vmatpush1.bf16.msra.mxu0 0
    %3459 = vmatprep.subr.bf16.mxu0 0
    %3460 = vmatpush1.bf16.msra.mxu0 0
    %3461 = vmatprep.subr.bf16.mxu0 0
    %3462 = vmatpush1.bf16.msra.mxu0 0
    %3463 = vmatprep.subr.bf16.mxu0 0
    %3464 = vmatpush1.bf16.msra.mxu0 0
    %3465 = vmatprep.mubr.bf16.mxu0 0
    %3466 = vmatmul.mubr.bf16.gmra.mrb[0].mxu0 %v3108
    %v3467 = vpop.f32.mrb[0].mxu0
    %v3468 = vadd.f32 %v3170, %v3467
    %v3469 = vpop.f32.mrb[0].mxu0
    %v3470 = vadd.f32 %v3174, %v3469
    %v3471 = vpop.f32.mrb[0].mxu0
    %v3472 = vpop.f32.mrb[0].mxu0
    %3473 = vdwg.mxu0
    %3474 = vmatprep.subr.bf16.mxu0 0
    %3475 = vmatpush1.bf16.msra.mxu0 %v3316
    %3476 = vmatprep.subr.bf16.mxu0 0
    %3477 = vmatpush1.bf16.msra.mxu0 %v3321
    %3478 = vmatprep.subr.bf16.mxu0 0
    %3479 = vmatpush1.bf16.msra.mxu0 %v3326
    %3480 = vmatprep.subr.bf16.mxu0 0
    %3481 = vmatpush1.bf16.msra.mxu0 %v3331
    %3482 = vmatprep.subr.bf16.mxu0 0
    %3483 = vmatpush1.bf16.msra.mxu0 %v3336
    %3484 = vmatprep.subr.bf16.mxu0 0
    %3485 = vmatpush1.bf16.msra.mxu0 %v3341
    %3486 = vmatprep.subr.bf16.mxu0 0
    %3487 = vmatpush1.bf16.msra.mxu0 %v3346
    %3488 = vmatprep.subr.bf16.mxu0 0
    %3489 = vmatpush1.bf16.msra.mxu0 %v3351
    %3490 = vmatprep.subr.bf16.mxu0 0
    %3491 = vmatpush1.bf16.msra.mxu0 0
    %3492 = vmatprep.subr.bf16.mxu0 0
    %3493 = vmatpush1.bf16.msra.mxu0 0
    %3494 = vmatprep.subr.bf16.mxu0 0
    %3495 = vmatpush1.bf16.msra.mxu0 0
    %3496 = vmatprep.subr.bf16.mxu0 0
    %3497 = vmatpush1.bf16.msra.mxu0 0
    %3498 = vmatprep.subr.bf16.mxu0 0
    %3499 = vmatpush1.bf16.msra.mxu0 0
    %3500 = vmatprep.subr.bf16.mxu0 0
    %3501 = vmatpush1.bf16.msra.mxu0 0
    %3502 = vmatprep.subr.bf16.mxu0 0
    %3503 = vmatpush1.bf16.msra.mxu0 0
    %3504 = vmatprep.subr.bf16.mxu0 0
    %3505 = vmatpush1.bf16.msra.mxu0 0
    %3506 = vmatprep.mubr.bf16.mxu0 0
    %3507 = vmatmul.mubr.bf16.gmra.mrb[0].mxu0 %v3108
    %v3508 = vpop.f32.mrb[0].mxu0
    %v3509 = vadd.f32 %v3178, %v3508
    %v3510 = vpop.f32.mrb[0].mxu0
    %v3511 = vpop.f32.mrb[0].mxu0
    %v3512 = vpop.f32.mrb[0].mxu0
    %3513 = vdwg.mxu0
    %v3514 = vmax.f32 %v3427, 0.0
    %v3515 = vmax.f32 %v3429, 0.0
    %v3516 = vmax.f32 %v3468, 0.0
    %v3517 = vmax.f32 %v3470, 0.0
    %v3518 = vmax.f32 %v3509, 0.0
    %v3519 = vpack.c.bf16 %v3514, %v3514
    %v3520 = vpack.c.bf16 %v3515, %v3515
    %v3521 = vpack.c.bf16 %v3516, %v3516
    %v3522 = vpack.c.bf16 %v3517, %v3517
    %v3523 = vpack.c.bf16 %v3518, %v3518
    %v3524 = vld [vmem:[#allocation13] sm:$0xff]
    %v3525 = vld [vmem:[#allocation13 + $0x8] sm:$0xff]
    %v3526 = vld [vmem:[#allocation13 + $0x10] sm:$0xff]
    %v3527 = vld [vmem:[#allocation13 + $0x18] sm:$0xf]
    %v3528 = vld [vmem:[#allocation13 + $0x1c] sm:$0xff]
    %v3529 = vld [vmem:[#allocation13 + $0x24] sm:$0xff]
    %v3530 = vld [vmem:[#allocation13 + $0x2c] sm:$0xff]
    %v3531 = vld [vmem:[#allocation13 + $0x34] sm:$0xf]
    %v3532 = vld [vmem:[#allocation13 + $0x38] sm:$0xff]
    %v3533 = vld [vmem:[#allocation13 + $0x40] sm:$0xff]
    %v3534 = vld [vmem:[#allocation13 + $0x48] sm:$0xff]
    %v3535 = vld [vmem:[#allocation13 + $0x50] sm:$0xf]
    %v3536 = vld [vmem:[#allocation13 + $0x54] sm:$0xff]
    %v3537 = vld [vmem:[#allocation13 + $0x5c] sm:$0xff]
    %v3538 = vld [vmem:[#allocation13 + $0x64] sm:$0xff]
    %v3539 = vld [vmem:[#allocation13 + $0x6c] sm:$0xf]
    %v3540 = vld [vmem:[#allocation13 + $0x70] sm:$0xff]
    %v3541 = vld [vmem:[#allocation13 + $0x78] sm:$0xff]
    %v3542 = vld [vmem:[#allocation13 + $0x80] sm:$0xff]
    %v3543 = vld [vmem:[#allocation13 + $0x88] sm:$0xf]
    %v3544 = vld [vmem:[#allocation13 + $0x8c] sm:$0xff]
    %v3545 = vld [vmem:[#allocation13 + $0x94] sm:$0xff]
    %v3546 = vld [vmem:[#allocation13 + $0x9c] sm:$0xff]
    %v3547 = vld [vmem:[#allocation13 + $0xa4] sm:$0xf]
    %v3548 = vld [vmem:[#allocation13 + $0xa8] sm:$0xff]
    %v3549 = vld [vmem:[#allocation13 + $0xb0] sm:$0xff]
    %v3550 = vld [vmem:[#allocation13 + $0xb8] sm:$0xff]
    %v3551 = vld [vmem:[#allocation13 + $0xc0] sm:$0xf]
    %v3552 = vld [vmem:[#allocation13 + $0xc4] sm:$0xff]
    %v3553 = vld [vmem:[#allocation13 + $0xcc] sm:$0xff]
    %v3554 = vld [vmem:[#allocation13 + $0xd4] sm:$0xff]
    %v3555 = vld [vmem:[#allocation13 + $0xdc] sm:$0xf]
    %v3556 = vld [vmem:[#allocation13 + $0xe0] sm:$0xff]
    %v3557 = vld [vmem:[#allocation13 + $0xe8] sm:$0xff]
    %v3558 = vld [vmem:[#allocation13 + $0xf0] sm:$0xff]
    %v3559 = vld [vmem:[#allocation13 + $0xf8] sm:$0xf]
    %v3560 = vld [vmem:[#allocation13 + $0xfc] sm:$0xff]
    %v3561 = vld [vmem:[#allocation13 + $0x104] sm:$0xff]
    %v3562 = vld [vmem:[#allocation13 + $0x10c] sm:$0xff]
    %v3563 = vld [vmem:[#allocation13 + $0x114] sm:$0xf]
    %v3564 = vld [vmem:[#allocation13 + $0x118] sm:$0xff]
    %v3565 = vld [vmem:[#allocation13 + $0x120] sm:$0xff]
    %v3566 = vld [vmem:[#allocation13 + $0x128] sm:$0xff]
    %v3567 = vld [vmem:[#allocation13 + $0x130] sm:$0xf]
    %v3568 = vld [vmem:[#allocation13 + $0x134] sm:$0xff]
    %v3569 = vld [vmem:[#allocation13 + $0x13c] sm:$0xff]
    %v3570 = vld [vmem:[#allocation13 + $0x144] sm:$0xff]
    %v3571 = vld [vmem:[#allocation13 + $0x14c] sm:$0xf]
    %v3572 = vld [vmem:[#allocation13 + $0x150] sm:$0xff]
    %v3573 = vld [vmem:[#allocation13 + $0x158] sm:$0xff]
    %v3574 = vld [vmem:[#allocation13 + $0x160] sm:$0xff]
    %v3575 = vld [vmem:[#allocation13 + $0x168] sm:$0xf]
    %v3576 = vld [vmem:[#allocation13 + $0x16c] sm:$0xff]
    %v3577 = vld [vmem:[#allocation13 + $0x174] sm:$0xff]
    %v3578 = vld [vmem:[#allocation13 + $0x17c] sm:$0xff]
    %v3579 = vld [vmem:[#allocation13 + $0x184] sm:$0xf]
    %v3580 = vld [vmem:[#allocation13 + $0x188] sm:$0xff]
    %v3581 = vld [vmem:[#allocation13 + $0x190] sm:$0xff]
    %v3582 = vld [vmem:[#allocation13 + $0x198] sm:$0xff]
    %v3583 = vld [vmem:[#allocation13 + $0x1a0] sm:$0xf]
    %v3584 = vld [vmem:[#allocation13 + $0x1a4] sm:$0xff]
    %v3585 = vld [vmem:[#allocation13 + $0x1ac] sm:$0xff]
    %v3586 = vld [vmem:[#allocation13 + $0x1b4] sm:$0xff]
    %v3587 = vld [vmem:[#allocation13 + $0x1bc] sm:$0xf]
    %v3588 = vld [vmem:[#allocation13 + $0x1c0] sm:$0xff]
    %v3589 = vld [vmem:[#allocation13 + $0x1c8] sm:$0xff]
    %v3590 = vld [vmem:[#allocation13 + $0x1d0] sm:$0xff]
    %v3591 = vld [vmem:[#allocation13 + $0x1d8] sm:$0xf]
    %v3592 = vld [vmem:[#allocation13 + $0x1dc] sm:$0xff]
    %v3593 = vld [vmem:[#allocation13 + $0x1e4] sm:$0xff]
    %v3594 = vld [vmem:[#allocation13 + $0x1ec] sm:$0xff]
    %v3595 = vld [vmem:[#allocation13 + $0x1f4] sm:$0xf]
    %v3596 = vld [vmem:[#allocation13 + $0x1f8] sm:$0xff]
    %v3597 = vld [vmem:[#allocation13 + $0x200] sm:$0xff]
    %v3598 = vld [vmem:[#allocation13 + $0x208] sm:$0xff]
    %v3599 = vld [vmem:[#allocation13 + $0x210] sm:$0xf]
    %v3600 = vld [vmem:[#allocation13 + $0x214] sm:$0xff]
    %v3601 = vld [vmem:[#allocation13 + $0x21c] sm:$0xff]
    %v3602 = vld [vmem:[#allocation13 + $0x224] sm:$0xff]
    %v3603 = vld [vmem:[#allocation13 + $0x22c] sm:$0xf]
    %v3604 = vld [vmem:[#allocation13 + $0x230] sm:$0xff]
    %v3605 = vld [vmem:[#allocation13 + $0x238] sm:$0xff]
    %v3606 = vld [vmem:[#allocation13 + $0x240] sm:$0xff]
    %v3607 = vld [vmem:[#allocation13 + $0x248] sm:$0xf]
    %v3608 = vld [vmem:[#allocation13 + $0x24c] sm:$0xff]
    %v3609 = vld [vmem:[#allocation13 + $0x254] sm:$0xff]
    %v3610 = vld [vmem:[#allocation13 + $0x25c] sm:$0xff]
    %v3611 = vld [vmem:[#allocation13 + $0x264] sm:$0xf]
    %v3612 = vld [vmem:[#allocation13 + $0x268] sm:$0xff]
    %v3613 = vld [vmem:[#allocation13 + $0x270] sm:$0xff]
    %v3614 = vld [vmem:[#allocation13 + $0x278] sm:$0xff]
    %v3615 = vld [vmem:[#allocation13 + $0x280] sm:$0xf]
    %v3616 = vld [vmem:[#allocation13 + $0x284] sm:$0xff]
    %v3617 = vld [vmem:[#allocation13 + $0x28c] sm:$0xff]
    %v3618 = vld [vmem:[#allocation13 + $0x294] sm:$0xff]
    %v3619 = vld [vmem:[#allocation13 + $0x29c] sm:$0xf]
    %v3620 = vld [vmem:[#allocation13 + $0x2a0] sm:$0xff]
    %v3621 = vld [vmem:[#allocation13 + $0x2a8] sm:$0xff]
    %v3622 = vld [vmem:[#allocation13 + $0x2b0] sm:$0xff]
    %v3623 = vld [vmem:[#allocation13 + $0x2b8] sm:$0xf]
    %v3624 = vld [vmem:[#allocation13 + $0x2bc] sm:$0xff]
    %v3625 = vld [vmem:[#allocation13 + $0x2c4] sm:$0xff]
    %v3626 = vld [vmem:[#allocation13 + $0x2cc] sm:$0xff]
    %v3627 = vld [vmem:[#allocation13 + $0x2d4] sm:$0xf]
    %v3628 = vld [vmem:[#allocation13 + $0x2d8] sm:$0xff]
    %v3629 = vld [vmem:[#allocation13 + $0x2e0] sm:$0xff]
    %v3630 = vld [vmem:[#allocation13 + $0x2e8] sm:$0xff]
    %v3631 = vld [vmem:[#allocation13 + $0x2f0] sm:$0xf]
    %v3632 = vld [vmem:[#allocation13 + $0x2f4] sm:$0xff]
    %v3633 = vld [vmem:[#allocation13 + $0x2fc] sm:$0xff]
    %v3634 = vld [vmem:[#allocation13 + $0x304] sm:$0xff]
    %v3635 = vld [vmem:[#allocation13 + $0x30c] sm:$0xf]
    %v3636 = vld [vmem:[#allocation13 + $0x310] sm:$0xff]
    %v3637 = vld [vmem:[#allocation13 + $0x318] sm:$0xff]
    %v3638 = vld [vmem:[#allocation13 + $0x320] sm:$0xff]
    %v3639 = vld [vmem:[#allocation13 + $0x328] sm:$0xf]
    %v3640 = vld [vmem:[#allocation13 + $0x32c] sm:$0xff]
    %v3641 = vld [vmem:[#allocation13 + $0x334] sm:$0xff]
    %v3642 = vld [vmem:[#allocation13 + $0x33c] sm:$0xff]
    %v3643 = vld [vmem:[#allocation13 + $0x344] sm:$0xf]
    %v3644 = vld [vmem:[#allocation13 + $0x348] sm:$0xff]
    %v3645 = vld [vmem:[#allocation13 + $0x350] sm:$0xff]
    %v3646 = vld [vmem:[#allocation13 + $0x358] sm:$0xff]
    %v3647 = vld [vmem:[#allocation13 + $0x360] sm:$0xf]
    %v3648 = vld [vmem:[#allocation13 + $0x364] sm:$0xff]
    %v3649 = vld [vmem:[#allocation13 + $0x36c] sm:$0xff]
    %v3650 = vld [vmem:[#allocation13 + $0x374] sm:$0xff]
    %v3651 = vld [vmem:[#allocation13 + $0x37c] sm:$0xf]
    %v3652 = vld [vmem:[#allocation13 + $0x380] sm:$0xff]
    %v3653 = vld [vmem:[#allocation13 + $0x388] sm:$0xff]
    %v3654 = vld [vmem:[#allocation13 + $0x390] sm:$0xff]
    %v3655 = vld [vmem:[#allocation13 + $0x398] sm:$0xf]
    %v3656 = vld [vmem:[#allocation13 + $0x39c] sm:$0xff]
    %v3657 = vld [vmem:[#allocation13 + $0x3a4] sm:$0xff]
    %v3658 = vld [vmem:[#allocation13 + $0x3ac] sm:$0xff]
    %v3659 = vld [vmem:[#allocation13 + $0x3b4] sm:$0xf]
    %v3660 = vld [vmem:[#allocation13 + $0x3b8] sm:$0xff]
    %v3661 = vld [vmem:[#allocation13 + $0x3c0] sm:$0xff]
    %v3662 = vld [vmem:[#allocation13 + $0x3c8] sm:$0xff]
    %v3663 = vld [vmem:[#allocation13 + $0x3d0] sm:$0xf]
    %v3664 = vld [vmem:[#allocation13 + $0x3d4] sm:$0xff]
    %v3665 = vld [vmem:[#allocation13 + $0x3dc] sm:$0xff]
    %v3666 = vld [vmem:[#allocation13 + $0x3e4] sm:$0xff]
    %v3667 = vld [vmem:[#allocation13 + $0x3ec] sm:$0xf]
    %v3668 = vld [vmem:[#allocation13 + $0x3f0] sm:$0xff]
    %v3669 = vld [vmem:[#allocation13 + $0x3f8] sm:$0xff]
    %v3670 = vld [vmem:[#allocation13 + $0x400] sm:$0xff]
    %v3671 = vld [vmem:[#allocation13 + $0x408] sm:$0xf]
    %v3672 = vld [vmem:[#allocation13 + $0x40c] sm:$0xff]
    %v3673 = vld [vmem:[#allocation13 + $0x414] sm:$0xff]
    %v3674 = vld [vmem:[#allocation13 + $0x41c] sm:$0xff]
    %v3675 = vld [vmem:[#allocation13 + $0x424] sm:$0xf]
    %v3676 = vld [vmem:[#allocation13 + $0x428] sm:$0xff]
    %v3677 = vld [vmem:[#allocation13 + $0x430] sm:$0xff]
    %v3678 = vld [vmem:[#allocation13 + $0x438] sm:$0xff]
    %v3679 = vld [vmem:[#allocation13 + $0x440] sm:$0xf]
    %v3680 = vld [vmem:[#allocation13 + $0x444] sm:$0xff]
    %v3681 = vld [vmem:[#allocation13 + $0x44c] sm:$0xff]
    %v3682 = vld [vmem:[#allocation13 + $0x454] sm:$0xff]
    %v3683 = vld [vmem:[#allocation13 + $0x45c] sm:$0xf]
    %v3684 = vld [vmem:[#allocation13 + $0x460] sm:$0xff]
    %v3685 = vld [vmem:[#allocation13 + $0x468] sm:$0xff]
    %v3686 = vld [vmem:[#allocation13 + $0x470] sm:$0xff]
    %v3687 = vld [vmem:[#allocation13 + $0x478] sm:$0xf]
    %v3688 = vld [vmem:[#allocation13 + $0x47c] sm:$0xff]
    %v3689 = vld [vmem:[#allocation13 + $0x484] sm:$0xff]
    %v3690 = vld [vmem:[#allocation13 + $0x48c] sm:$0xff]
    %v3691 = vld [vmem:[#allocation13 + $0x494] sm:$0xf]
    %v3692 = vld [vmem:[#allocation13 + $0x498] sm:$0xff]
    %v3693 = vld [vmem:[#allocation13 + $0x4a0] sm:$0xff]
    %v3694 = vld [vmem:[#allocation13 + $0x4a8] sm:$0xff]
    %v3695 = vld [vmem:[#allocation13 + $0x4b0] sm:$0xf]
    %v3696 = vld [vmem:[#allocation13 + $0x4b4] sm:$0xff]
    %v3697 = vld [vmem:[#allocation13 + $0x4bc] sm:$0xff]
    %v3698 = vld [vmem:[#allocation13 + $0x4c4] sm:$0xff]
    %v3699 = vld [vmem:[#allocation13 + $0x4cc] sm:$0xf]
    %v3700 = vld [vmem:[#allocation13 + $0x4d0] sm:$0xff]
    %v3701 = vld [vmem:[#allocation13 + $0x4d8] sm:$0xff]
    %v3702 = vld [vmem:[#allocation13 + $0x4e0] sm:$0xff]
    %v3703 = vld [vmem:[#allocation13 + $0x4e8] sm:$0xf]
    %v3704 = vld [vmem:[#allocation13 + $0x4ec] sm:$0xff]
    %v3705 = vld [vmem:[#allocation13 + $0x4f4] sm:$0xff]
    %v3706 = vld [vmem:[#allocation13 + $0x4fc] sm:$0xff]
    %v3707 = vld [vmem:[#allocation13 + $0x504] sm:$0xf]
    %v3708 = vld [vmem:[#allocation13 + $0x508] sm:$0xff]
    %v3709 = vld [vmem:[#allocation13 + $0x510] sm:$0xff]
    %v3710 = vld [vmem:[#allocation13 + $0x518] sm:$0xff]
    %v3711 = vld [vmem:[#allocation13 + $0x520] sm:$0xf]
    %v3712 = vld [vmem:[#allocation13 + $0x524] sm:$0xff]
    %v3713 = vld [vmem:[#allocation13 + $0x52c] sm:$0xff]
    %v3714 = vld [vmem:[#allocation13 + $0x534] sm:$0xff]
    %v3715 = vld [vmem:[#allocation13 + $0x53c] sm:$0xf]
    %v3716 = vld [vmem:[#allocation13 + $0x540] sm:$0xff]
    %v3717 = vld [vmem:[#allocation13 + $0x548] sm:$0xff]
    %v3718 = vld [vmem:[#allocation13 + $0x550] sm:$0xff]
    %v3719 = vld [vmem:[#allocation13 + $0x558] sm:$0xf]
    %v3720 = vld [vmem:[#allocation13 + $0x55c] sm:$0xff]
    %v3721 = vld [vmem:[#allocation13 + $0x564] sm:$0xff]
    %v3722 = vld [vmem:[#allocation13 + $0x56c] sm:$0xff]
    %v3723 = vld [vmem:[#allocation13 + $0x574] sm:$0xf]
    %v3724 = vld [vmem:[#allocation13 + $0x578] sm:$0xff]
    %v3725 = vld [vmem:[#allocation13 + $0x580] sm:$0xff]
    %v3726 = vld [vmem:[#allocation13 + $0x588] sm:$0xff]
    %v3727 = vld [vmem:[#allocation13 + $0x590] sm:$0xf]
    %v3728 = vld [vmem:[#allocation13 + $0x594] sm:$0xff]
    %v3729 = vld [vmem:[#allocation13 + $0x59c] sm:$0xff]
    %v3730 = vld [vmem:[#allocation13 + $0x5a4] sm:$0xff]
    %v3731 = vld [vmem:[#allocation13 + $0x5ac] sm:$0xf]
    %v3732 = vld [vmem:[#allocation13 + $0x5b0] sm:$0xff]
    %v3733 = vld [vmem:[#allocation13 + $0x5b8] sm:$0xff]
    %v3734 = vld [vmem:[#allocation13 + $0x5c0] sm:$0xff]
    %v3735 = vld [vmem:[#allocation13 + $0x5c8] sm:$0xf]
    %v3736 = vld [vmem:[#allocation13 + $0x5cc] sm:$0xff]
    %v3737 = vld [vmem:[#allocation13 + $0x5d4] sm:$0xff]
    %v3738 = vld [vmem:[#allocation13 + $0x5dc] sm:$0xff]
    %v3739 = vld [vmem:[#allocation13 + $0x5e4] sm:$0xf]
    %v3740 = vld [vmem:[#allocation13 + $0x5e8] sm:$0xff]
    %v3741 = vld [vmem:[#allocation13 + $0x5f0] sm:$0xff]
    %v3742 = vld [vmem:[#allocation13 + $0x5f8] sm:$0xff]
    %v3743 = vld [vmem:[#allocation13 + $0x600] sm:$0xf]
    %v3744 = vld [vmem:[#allocation13 + $0x604] sm:$0xff]
    %v3745 = vld [vmem:[#allocation13 + $0x60c] sm:$0xff]
    %v3746 = vld [vmem:[#allocation13 + $0x614] sm:$0xff]
    %v3747 = vld [vmem:[#allocation13 + $0x61c] sm:$0xf]
    %v3748 = vld [vmem:[#allocation13 + $0x620] sm:$0xff]
    %v3749 = vld [vmem:[#allocation13 + $0x628] sm:$0xff]
    %v3750 = vld [vmem:[#allocation13 + $0x630] sm:$0xff]
    %v3751 = vld [vmem:[#allocation13 + $0x638] sm:$0xf]
    %v3752 = vld [vmem:[#allocation13 + $0x63c] sm:$0xff]
    %v3753 = vld [vmem:[#allocation13 + $0x644] sm:$0xff]
    %v3754 = vld [vmem:[#allocation13 + $0x64c] sm:$0xff]
    %v3755 = vld [vmem:[#allocation13 + $0x654] sm:$0xf]
    %v3756 = vld [vmem:[#allocation13 + $0x658] sm:$0xff]
    %v3757 = vld [vmem:[#allocation13 + $0x660] sm:$0xff]
    %v3758 = vld [vmem:[#allocation13 + $0x668] sm:$0xff]
    %v3759 = vld [vmem:[#allocation13 + $0x670] sm:$0xf]
    %v3760 = vld [vmem:[#allocation13 + $0x674] sm:$0xff]
    %v3761 = vld [vmem:[#allocation13 + $0x67c] sm:$0xff]
    %v3762 = vld [vmem:[#allocation13 + $0x684] sm:$0xff]
    %v3763 = vld [vmem:[#allocation13 + $0x68c] sm:$0xf]
    %v3764 = vld [vmem:[#allocation13 + $0x690] sm:$0xff]
    %v3765 = vld [vmem:[#allocation13 + $0x698] sm:$0xff]
    %v3766 = vld [vmem:[#allocation13 + $0x6a0] sm:$0xff]
    %v3767 = vld [vmem:[#allocation13 + $0x6a8] sm:$0xf]
    %v3768 = vld [vmem:[#allocation13 + $0x6ac] sm:$0xff]
    %v3769 = vld [vmem:[#allocation13 + $0x6b4] sm:$0xff]
    %v3770 = vld [vmem:[#allocation13 + $0x6bc] sm:$0xff]
    %v3771 = vld [vmem:[#allocation13 + $0x6c4] sm:$0xf]
    %v3772 = vld [vmem:[#allocation13 + $0x6c8] sm:$0xff]
    %v3773 = vld [vmem:[#allocation13 + $0x6d0] sm:$0xff]
    %v3774 = vld [vmem:[#allocation13 + $0x6d8] sm:$0xff]
    %v3775 = vld [vmem:[#allocation13 + $0x6e0] sm:$0xf]
    %v3776 = vld [vmem:[#allocation13 + $0x6e4] sm:$0xff]
    %v3777 = vld [vmem:[#allocation13 + $0x6ec] sm:$0xff]
    %v3778 = vld [vmem:[#allocation13 + $0x6f4] sm:$0xff]
    %v3779 = vld [vmem:[#allocation13 + $0x6fc] sm:$0xf]
    %v3780 = vld [vmem:[#allocation13 + $0x700] sm:$0xff]
    %v3781 = vld [vmem:[#allocation13 + $0x708] sm:$0xff]
    %v3782 = vld [vmem:[#allocation13 + $0x710] sm:$0xff]
    %v3783 = vld [vmem:[#allocation13 + $0x718] sm:$0xf]
    %v3784 = vld [vmem:[#allocation13 + $0x71c] sm:$0xff]
    %v3785 = vld [vmem:[#allocation13 + $0x724] sm:$0xff]
    %v3786 = vld [vmem:[#allocation13 + $0x72c] sm:$0xff]
    %v3787 = vld [vmem:[#allocation13 + $0x734] sm:$0xf]
    %v3788 = vld [vmem:[#allocation13 + $0x738] sm:$0xff]
    %v3789 = vld [vmem:[#allocation13 + $0x740] sm:$0xff]
    %v3790 = vld [vmem:[#allocation13 + $0x748] sm:$0xff]
    %v3791 = vld [vmem:[#allocation13 + $0x750] sm:$0xf]
    %v3792 = vld [vmem:[#allocation13 + $0x754] sm:$0xff]
    %v3793 = vld [vmem:[#allocation13 + $0x75c] sm:$0xff]
    %v3794 = vld [vmem:[#allocation13 + $0x764] sm:$0xff]
    %v3795 = vld [vmem:[#allocation13 + $0x76c] sm:$0xf]
    %v3796 = vld [vmem:[#allocation13 + $0x770] sm:$0xff]
    %v3797 = vld [vmem:[#allocation13 + $0x778] sm:$0xff]
    %v3798 = vld [vmem:[#allocation13 + $0x780] sm:$0xff]
    %v3799 = vld [vmem:[#allocation13 + $0x788] sm:$0xf]
    %v3800 = vld [vmem:[#allocation13 + $0x78c] sm:$0xff]
    %v3801 = vld [vmem:[#allocation13 + $0x794] sm:$0xff]
    %v3802 = vld [vmem:[#allocation13 + $0x79c] sm:$0xff]
    %v3803 = vld [vmem:[#allocation13 + $0x7a4] sm:$0xf]
    %v3804 = vld [vmem:[#allocation13 + $0x7a8] sm:$0xff]
    %v3805 = vld [vmem:[#allocation13 + $0x7b0] sm:$0xff]
    %v3806 = vld [vmem:[#allocation13 + $0x7b8] sm:$0xff]
    %v3807 = vld [vmem:[#allocation13 + $0x7c0] sm:$0xf]
    %v3808 = vld [vmem:[#allocation13 + $0x7c4] sm:$0xff]
    %v3809 = vld [vmem:[#allocation13 + $0x7cc] sm:$0xff]
    %v3810 = vld [vmem:[#allocation13 + $0x7d4] sm:$0xff]
    %v3811 = vld [vmem:[#allocation13 + $0x7dc] sm:$0xf]
    %v3812 = vld [vmem:[#allocation13 + $0x7e0] sm:$0xff]
    %v3813 = vld [vmem:[#allocation13 + $0x7e8] sm:$0xff]
    %v3814 = vld [vmem:[#allocation13 + $0x7f0] sm:$0xff]
    %v3815 = vld [vmem:[#allocation13 + $0x7f8] sm:$0xf]
    %v3816 = vld [vmem:[#allocation13 + $0x7fc] sm:$0xff]
    %v3817 = vld [vmem:[#allocation13 + $0x804] sm:$0xff]
    %v3818 = vld [vmem:[#allocation13 + $0x80c] sm:$0xff]
    %v3819 = vld [vmem:[#allocation13 + $0x814] sm:$0xf]
    %v3820 = vld [vmem:[#allocation13 + $0x818] sm:$0xff]
    %v3821 = vld [vmem:[#allocation13 + $0x820] sm:$0xff]
    %v3822 = vld [vmem:[#allocation13 + $0x828] sm:$0xff]
    %v3823 = vld [vmem:[#allocation13 + $0x830] sm:$0xf]
    %v3824 = vld [vmem:[#allocation13 + $0x834] sm:$0xff]
    %v3825 = vld [vmem:[#allocation13 + $0x83c] sm:$0xff]
    %v3826 = vld [vmem:[#allocation13 + $0x844] sm:$0xff]
    %v3827 = vld [vmem:[#allocation13 + $0x84c] sm:$0xf]
    %v3828 = vld [vmem:[#allocation13 + $0x850] sm:$0xff]
    %v3829 = vld [vmem:[#allocation13 + $0x858] sm:$0xff]
    %v3830 = vld [vmem:[#allocation13 + $0x860] sm:$0xff]
    %v3831 = vld [vmem:[#allocation13 + $0x868] sm:$0xf]
    %v3832 = vld [vmem:[#allocation13 + $0x86c] sm:$0xff]
    %v3833 = vld [vmem:[#allocation13 + $0x874] sm:$0xff]
    %v3834 = vld [vmem:[#allocation13 + $0x87c] sm:$0xff]
    %v3835 = vld [vmem:[#allocation13 + $0x884] sm:$0xf]
    %v3836 = vld [vmem:[#allocation13 + $0x888] sm:$0xff]
    %v3837 = vld [vmem:[#allocation13 + $0x890] sm:$0xff]
    %v3838 = vld [vmem:[#allocation13 + $0x898] sm:$0xff]
    %v3839 = vld [vmem:[#allocation13 + $0x8a0] sm:$0xf]
    %v3840 = vld [vmem:[#allocation13 + $0x8a4] sm:$0xff]
    %v3841 = vld [vmem:[#allocation13 + $0x8ac] sm:$0xff]
    %v3842 = vld [vmem:[#allocation13 + $0x8b4] sm:$0xff]
    %v3843 = vld [vmem:[#allocation13 + $0x8bc] sm:$0xf]
    %v3844 = vld [vmem:[#allocation14] sm:$0xff]
    %v3846 = vlaneseq
    %v3847 = vshrl.u32 %v3846, 7
    %v3848 = vsub.s32 0, %v3847
    %v3849 = vrot.slane %v3844, %v3848
    %v3850 = vlaneseq
    %v3851 = vshrl.u32 %v3850, 7
    %v3852 = vsub.s32 1, %v3851
    %v3853 = vrot.slane %v3844, %v3852
    %v3854 = vlaneseq
    %v3855 = vshrl.u32 %v3854, 7
    %v3856 = vsub.s32 2, %v3855
    %v3857 = vrot.slane %v3844, %v3856
    %v3858 = vlaneseq
    %v3859 = vshrl.u32 %v3858, 7
    %v3860 = vsub.s32 3, %v3859
    %v3861 = vrot.slane %v3844, %v3860
    %v3862 = vlaneseq
    %v3863 = vshrl.u32 %v3862, 7
    %v3864 = vsub.s32 4, %v3863
    %v3865 = vrot.slane %v3844, %v3864
    %v3866 = vlaneseq
    %v3867 = vshrl.u32 %v3866, 7
    %v3868 = vsub.s32 5, %v3867
    %v3869 = vrot.slane %v3844, %v3868
    %v3870 = vlaneseq
    %v3871 = vshrl.u32 %v3870, 7
    %v3872 = vsub.s32 6, %v3871
    %v3873 = vrot.slane %v3844, %v3872
    %v4201 = vunpack.c.l.b16 %v3524
    %v4202 = vunpack.c.h.b16 %v3524
    %v4203 = vunpack.c.l.b16 %v3525
    %v4204 = vunpack.c.h.b16 %v3525
    %v4205 = vunpack.c.l.b16 %v3526
    %v4206 = vunpack.c.h.b16 %v3526
    %v4207 = vunpack.c.l.b16 %v3527
    %v4208 = vunpack.c.l.b16 %v3528
    %v4209 = vunpack.c.h.b16 %v3528
    %v4210 = vunpack.c.l.b16 %v3529
    %v4211 = vunpack.c.h.b16 %v3529
    %v4212 = vunpack.c.l.b16 %v3530
    %v4213 = vunpack.c.h.b16 %v3530
    %v4214 = vunpack.c.l.b16 %v3531
    %v4215 = vunpack.c.l.b16 %v3532
    %v4216 = vunpack.c.h.b16 %v3532
    %v4217 = vunpack.c.l.b16 %v3533
    %v4218 = vunpack.c.h.b16 %v3533
    %v4219 = vunpack.c.l.b16 %v3534
    %v4220 = vunpack.c.h.b16 %v3534
    %v4221 = vunpack.c.l.b16 %v3535
    %v4222 = vunpack.c.l.b16 %v3536
    %v4223 = vunpack.c.h.b16 %v3536
    %v4224 = vunpack.c.l.b16 %v3537
    %v4225 = vunpack.c.h.b16 %v3537
    %v4226 = vunpack.c.l.b16 %v3538
    %v4227 = vunpack.c.h.b16 %v3538
    %v4228 = vunpack.c.l.b16 %v3539
    %v4229 = vunpack.c.l.b16 %v3540
    %v4230 = vunpack.c.h.b16 %v3540
    %v4231 = vunpack.c.l.b16 %v3541
    %v4232 = vunpack.c.h.b16 %v3541
    %v4233 = vunpack.c.l.b16 %v3542
    %v4234 = vunpack.c.h.b16 %v3542
    %v4235 = vunpack.c.l.b16 %v3543
    %v4236 = vunpack.c.l.b16 %v3544
    %v4237 = vunpack.c.h.b16 %v3544
    %v4238 = vunpack.c.l.b16 %v3545
    %v4239 = vunpack.c.h.b16 %v3545
    %v4240 = vunpack.c.l.b16 %v3546
    %v4241 = vunpack.c.h.b16 %v3546
    %v4242 = vunpack.c.l.b16 %v3547
    %v4243 = vunpack.c.l.b16 %v3548
    %v4244 = vunpack.c.h.b16 %v3548
    %v4245 = vunpack.c.l.b16 %v3549
    %v4246 = vunpack.c.h.b16 %v3549
    %v4247 = vunpack.c.l.b16 %v3550
    %v4248 = vunpack.c.h.b16 %v3550
    %v4249 = vunpack.c.l.b16 %v3551
    %v4250 = vunpack.c.l.b16 %v3552
    %v4251 = vunpack.c.h.b16 %v3552
    %v4252 = vunpack.c.l.b16 %v3553
    %v4253 = vunpack.c.h.b16 %v3553
    %v4254 = vunpack.c.l.b16 %v3554
    %v4255 = vunpack.c.h.b16 %v3554
    %v4256 = vunpack.c.l.b16 %v3555
    %v4257 = vunpack.c.l.b16 %v3556
    %v4258 = vunpack.c.h.b16 %v3556
    %v4259 = vunpack.c.l.b16 %v3557
    %v4260 = vunpack.c.h.b16 %v3557
    %v4261 = vunpack.c.l.b16 %v3558
    %v4262 = vunpack.c.h.b16 %v3558
    %v4263 = vunpack.c.l.b16 %v3559
    %v4264 = vunpack.c.l.b16 %v3560
    %v4265 = vunpack.c.h.b16 %v3560
    %v4266 = vunpack.c.l.b16 %v3561
    %v4267 = vunpack.c.h.b16 %v3561
    %v4268 = vunpack.c.l.b16 %v3562
    %v4269 = vunpack.c.h.b16 %v3562
    %v4270 = vunpack.c.l.b16 %v3563
    %v4271 = vunpack.c.l.b16 %v3564
    %v4272 = vunpack.c.h.b16 %v3564
    %v4273 = vunpack.c.l.b16 %v3565
    %v4274 = vunpack.c.h.b16 %v3565
    %v4275 = vunpack.c.l.b16 %v3566
    %v4276 = vunpack.c.h.b16 %v3566
    %v4277 = vunpack.c.l.b16 %v3567
    %v4278 = vunpack.c.l.b16 %v3568
    %v4279 = vunpack.c.h.b16 %v3568
    %v4280 = vunpack.c.l.b16 %v3569
    %v4281 = vunpack.c.h.b16 %v3569
    %v4282 = vunpack.c.l.b16 %v3570
    %v4283 = vunpack.c.h.b16 %v3570
    %v4284 = vunpack.c.l.b16 %v3571
    %v4285 = vunpack.c.l.b16 %v3572
    %v4286 = vunpack.c.h.b16 %v3572
    %v4287 = vunpack.c.l.b16 %v3573
    %v4288 = vunpack.c.h.b16 %v3573
    %v4289 = vunpack.c.l.b16 %v3574
    %v4290 = vunpack.c.h.b16 %v3574
    %v4291 = vunpack.c.l.b16 %v3575
    %v4292 = vunpack.c.l.b16 %v3576
    %v4293 = vunpack.c.h.b16 %v3576
    %v4294 = vunpack.c.l.b16 %v3577
    %v4295 = vunpack.c.h.b16 %v3577
    %v4296 = vunpack.c.l.b16 %v3578
    %v4297 = vunpack.c.h.b16 %v3578
    %v4298 = vunpack.c.l.b16 %v3579
    %v4299 = vunpack.c.l.b16 %v3580
    %v4300 = vunpack.c.h.b16 %v3580
    %v4301 = vunpack.c.l.b16 %v3581
    %v4302 = vunpack.c.h.b16 %v3581
    %v4303 = vunpack.c.l.b16 %v3582
    %v4304 = vunpack.c.h.b16 %v3582
    %v4305 = vunpack.c.l.b16 %v3583
    %v4306 = vunpack.c.l.b16 %v3584
    %v4307 = vunpack.c.h.b16 %v3584
    %v4308 = vunpack.c.l.b16 %v3585
    %v4309 = vunpack.c.h.b16 %v3585
    %v4310 = vunpack.c.l.b16 %v3586
    %v4311 = vunpack.c.h.b16 %v3586
    %v4312 = vunpack.c.l.b16 %v3587
    %v4313 = vunpack.c.l.b16 %v3588
    %v4314 = vunpack.c.h.b16 %v3588
    %v4315 = vunpack.c.l.b16 %v3589
    %v4316 = vunpack.c.h.b16 %v3589
    %v4317 = vunpack.c.l.b16 %v3590
    %v4318 = vunpack.c.h.b16 %v3590
    %v4319 = vunpack.c.l.b16 %v3591
    %v4320 = vunpack.c.l.b16 %v3592
    %v4321 = vunpack.c.h.b16 %v3592
    %v4322 = vunpack.c.l.b16 %v3593
    %v4323 = vunpack.c.h.b16 %v3593
    %v4324 = vunpack.c.l.b16 %v3594
    %v4325 = vunpack.c.h.b16 %v3594
    %v4326 = vunpack.c.l.b16 %v3595
    %v4327 = vunpack.c.l.b16 %v3596
    %v4328 = vunpack.c.h.b16 %v3596
    %v4329 = vunpack.c.l.b16 %v3597
    %v4330 = vunpack.c.h.b16 %v3597
    %v4331 = vunpack.c.l.b16 %v3598
    %v4332 = vunpack.c.h.b16 %v3598
    %v4333 = vunpack.c.l.b16 %v3599
    %v4334 = vunpack.c.l.b16 %v3600
    %v4335 = vunpack.c.h.b16 %v3600
    %v4336 = vunpack.c.l.b16 %v3601
    %v4337 = vunpack.c.h.b16 %v3601
    %v4338 = vunpack.c.l.b16 %v3602
    %v4339 = vunpack.c.h.b16 %v3602
    %v4340 = vunpack.c.l.b16 %v3603
    %v4341 = vunpack.c.l.b16 %v3604
    %v4342 = vunpack.c.h.b16 %v3604
    %v4343 = vunpack.c.l.b16 %v3605
    %v4344 = vunpack.c.h.b16 %v3605
    %v4345 = vunpack.c.l.b16 %v3606
    %v4346 = vunpack.c.h.b16 %v3606
    %v4347 = vunpack.c.l.b16 %v3607
    %v4348 = vunpack.c.l.b16 %v3608
    %v4349 = vunpack.c.h.b16 %v3608
    %v4350 = vunpack.c.l.b16 %v3609
    %v4351 = vunpack.c.h.b16 %v3609
    %v4352 = vunpack.c.l.b16 %v3610
    %v4353 = vunpack.c.h.b16 %v3610
    %v4354 = vunpack.c.l.b16 %v3611
    %v4355 = vunpack.c.l.b16 %v3612
    %v4356 = vunpack.c.h.b16 %v3612
    %v4357 = vunpack.c.l.b16 %v3613
    %v4358 = vunpack.c.h.b16 %v3613
    %v4359 = vunpack.c.l.b16 %v3614
    %v4360 = vunpack.c.h.b16 %v3614
    %v4361 = vunpack.c.l.b16 %v3615
    %v4362 = vunpack.c.l.b16 %v3616
    %v4363 = vunpack.c.h.b16 %v3616
    %v4364 = vunpack.c.l.b16 %v3617
    %v4365 = vunpack.c.h.b16 %v3617
    %v4366 = vunpack.c.l.b16 %v3618
    %v4367 = vunpack.c.h.b16 %v3618
    %v4368 = vunpack.c.l.b16 %v3619
    %v4369 = vunpack.c.l.b16 %v3620
    %v4370 = vunpack.c.h.b16 %v3620
    %v4371 = vunpack.c.l.b16 %v3621
    %v4372 = vunpack.c.h.b16 %v3621
    %v4373 = vunpack.c.l.b16 %v3622
    %v4374 = vunpack.c.h.b16 %v3622
    %v4375 = vunpack.c.l.b16 %v3623
    %v4376 = vunpack.c.l.b16 %v3624
    %v4377 = vunpack.c.h.b16 %v3624
    %v4378 = vunpack.c.l.b16 %v3625
    %v4379 = vunpack.c.h.b16 %v3625
    %v4380 = vunpack.c.l.b16 %v3626
    %v4381 = vunpack.c.h.b16 %v3626
    %v4382 = vunpack.c.l.b16 %v3627
    %v4383 = vunpack.c.l.b16 %v3628
    %v4384 = vunpack.c.h.b16 %v3628
    %v4385 = vunpack.c.l.b16 %v3629
    %v4386 = vunpack.c.h.b16 %v3629
    %v4387 = vunpack.c.l.b16 %v3630
    %v4388 = vunpack.c.h.b16 %v3630
    %v4389 = vunpack.c.l.b16 %v3631
    %v4390 = vunpack.c.l.b16 %v3632
    %v4391 = vunpack.c.h.b16 %v3632
    %v4392 = vunpack.c.l.b16 %v3633
    %v4393 = vunpack.c.h.b16 %v3633
    %v4394 = vunpack.c.l.b16 %v3634
    %v4395 = vunpack.c.h.b16 %v3634
    %v4396 = vunpack.c.l.b16 %v3635
    %v4397 = vunpack.c.l.b16 %v3636
    %v4398 = vunpack.c.h.b16 %v3636
    %v4399 = vunpack.c.l.b16 %v3637
    %v4400 = vunpack.c.h.b16 %v3637
    %v4401 = vunpack.c.l.b16 %v3638
    %v4402 = vunpack.c.h.b16 %v3638
    %v4403 = vunpack.c.l.b16 %v3639
    %v4404 = vunpack.c.l.b16 %v3640
    %v4405 = vunpack.c.h.b16 %v3640
    %v4406 = vunpack.c.l.b16 %v3641
    %v4407 = vunpack.c.h.b16 %v3641
    %v4408 = vunpack.c.l.b16 %v3642
    %v4409 = vunpack.c.h.b16 %v3642
    %v4410 = vunpack.c.l.b16 %v3643
    %v4411 = vunpack.c.l.b16 %v3644
    %v4412 = vunpack.c.h.b16 %v3644
    %v4413 = vunpack.c.l.b16 %v3645
    %v4414 = vunpack.c.h.b16 %v3645
    %v4415 = vunpack.c.l.b16 %v3646
    %v4416 = vunpack.c.h.b16 %v3646
    %v4417 = vunpack.c.l.b16 %v3647
    %v4418 = vunpack.c.l.b16 %v3648
    %v4419 = vunpack.c.h.b16 %v3648
    %v4420 = vunpack.c.l.b16 %v3649
    %v4421 = vunpack.c.h.b16 %v3649
    %v4422 = vunpack.c.l.b16 %v3650
    %v4423 = vunpack.c.h.b16 %v3650
    %v4424 = vunpack.c.l.b16 %v3651
    %v4425 = vunpack.c.l.b16 %v3652
    %v4426 = vunpack.c.h.b16 %v3652
    %v4427 = vunpack.c.l.b16 %v3653
    %v4428 = vunpack.c.h.b16 %v3653
    %v4429 = vunpack.c.l.b16 %v3654
    %v4430 = vunpack.c.h.b16 %v3654
    %v4431 = vunpack.c.l.b16 %v3655
    %v4432 = vunpack.c.l.b16 %v3656
    %v4433 = vunpack.c.h.b16 %v3656
    %v4434 = vunpack.c.l.b16 %v3657
    %v4435 = vunpack.c.h.b16 %v3657
    %v4436 = vunpack.c.l.b16 %v3658
    %v4437 = vunpack.c.h.b16 %v3658
    %v4438 = vunpack.c.l.b16 %v3659
    %v4439 = vunpack.c.l.b16 %v3660
    %v4440 = vunpack.c.h.b16 %v3660
    %v4441 = vunpack.c.l.b16 %v3661
    %v4442 = vunpack.c.h.b16 %v3661
    %v4443 = vunpack.c.l.b16 %v3662
    %v4444 = vunpack.c.h.b16 %v3662
    %v4445 = vunpack.c.l.b16 %v3663
    %v4446 = vunpack.c.l.b16 %v3664
    %v4447 = vunpack.c.h.b16 %v3664
    %v4448 = vunpack.c.l.b16 %v3665
    %v4449 = vunpack.c.h.b16 %v3665
    %v4450 = vunpack.c.l.b16 %v3666
    %v4451 = vunpack.c.h.b16 %v3666
    %v4452 = vunpack.c.l.b16 %v3667
    %v4453 = vunpack.c.l.b16 %v3668
    %v4454 = vunpack.c.h.b16 %v3668
    %v4455 = vunpack.c.l.b16 %v3669
    %v4456 = vunpack.c.h.b16 %v3669
    %v4457 = vunpack.c.l.b16 %v3670
    %v4458 = vunpack.c.h.b16 %v3670
    %v4459 = vunpack.c.l.b16 %v3671
    %v4460 = vunpack.c.l.b16 %v3672
    %v4461 = vunpack.c.h.b16 %v3672
    %v4462 = vunpack.c.l.b16 %v3673
    %v4463 = vunpack.c.h.b16 %v3673
    %v4464 = vunpack.c.l.b16 %v3674
    %v4465 = vunpack.c.h.b16 %v3674
    %v4466 = vunpack.c.l.b16 %v3675
    %v4467 = vunpack.c.l.b16 %v3676
    %v4468 = vunpack.c.h.b16 %v3676
    %v4469 = vunpack.c.l.b16 %v3677
    %v4470 = vunpack.c.h.b16 %v3677
    %v4471 = vunpack.c.l.b16 %v3678
    %v4472 = vunpack.c.h.b16 %v3678
    %v4473 = vunpack.c.l.b16 %v3679
    %v4474 = vunpack.c.l.b16 %v3680
    %v4475 = vunpack.c.h.b16 %v3680
    %v4476 = vunpack.c.l.b16 %v3681
    %v4477 = vunpack.c.h.b16 %v3681
    %v4478 = vunpack.c.l.b16 %v3682
    %v4479 = vunpack.c.h.b16 %v3682
    %v4480 = vunpack.c.l.b16 %v3683
    %v4481 = vunpack.c.l.b16 %v3684
    %v4482 = vunpack.c.h.b16 %v3684
    %v4483 = vunpack.c.l.b16 %v3685
    %v4484 = vunpack.c.h.b16 %v3685
    %v4485 = vunpack.c.l.b16 %v3686
    %v4486 = vunpack.c.h.b16 %v3686
    %v4487 = vunpack.c.l.b16 %v3687
    %v4488 = vunpack.c.l.b16 %v3688
    %v4489 = vunpack.c.h.b16 %v3688
    %v4490 = vunpack.c.l.b16 %v3689
    %v4491 = vunpack.c.h.b16 %v3689
    %v4492 = vunpack.c.l.b16 %v3690
    %v4493 = vunpack.c.h.b16 %v3690
    %v4494 = vunpack.c.l.b16 %v3691
    %v4495 = vunpack.c.l.b16 %v3692
    %v4496 = vunpack.c.h.b16 %v3692
    %v4497 = vunpack.c.l.b16 %v3693
    %v4498 = vunpack.c.h.b16 %v3693
    %v4499 = vunpack.c.l.b16 %v3694
    %v4500 = vunpack.c.h.b16 %v3694
    %v4501 = vunpack.c.l.b16 %v3695
    %v4502 = vunpack.c.l.b16 %v3696
    %v4503 = vunpack.c.h.b16 %v3696
    %v4504 = vunpack.c.l.b16 %v3697
    %v4505 = vunpack.c.h.b16 %v3697
    %v4506 = vunpack.c.l.b16 %v3698
    %v4507 = vunpack.c.h.b16 %v3698
    %v4508 = vunpack.c.l.b16 %v3699
    %v4509 = vunpack.c.l.b16 %v3700
    %v4510 = vunpack.c.h.b16 %v3700
    %v4511 = vunpack.c.l.b16 %v3701
    %v4512 = vunpack.c.h.b16 %v3701
    %v4513 = vunpack.c.l.b16 %v3702
    %v4514 = vunpack.c.h.b16 %v3702
    %v4515 = vunpack.c.l.b16 %v3703
    %v4516 = vunpack.c.l.b16 %v3704
    %v4517 = vunpack.c.h.b16 %v3704
    %v4518 = vunpack.c.l.b16 %v3705
    %v4519 = vunpack.c.h.b16 %v3705
    %v4520 = vunpack.c.l.b16 %v3706
    %v4521 = vunpack.c.h.b16 %v3706
    %v4522 = vunpack.c.l.b16 %v3707
    %v4523 = vunpack.c.l.b16 %v3708
    %v4524 = vunpack.c.h.b16 %v3708
    %v4525 = vunpack.c.l.b16 %v3709
    %v4526 = vunpack.c.h.b16 %v3709
    %v4527 = vunpack.c.l.b16 %v3710
    %v4528 = vunpack.c.h.b16 %v3710
    %v4529 = vunpack.c.l.b16 %v3711
    %v4530 = vunpack.c.l.b16 %v3712
    %v4531 = vunpack.c.h.b16 %v3712
    %v4532 = vunpack.c.l.b16 %v3713
    %v4533 = vunpack.c.h.b16 %v3713
    %v4534 = vunpack.c.l.b16 %v3714
    %v4535 = vunpack.c.h.b16 %v3714
    %v4536 = vunpack.c.l.b16 %v3715
    %v4537 = vunpack.c.l.b16 %v3716
    %v4538 = vunpack.c.h.b16 %v3716
    %v4539 = vunpack.c.l.b16 %v3717
    %v4540 = vunpack.c.h.b16 %v3717
    %v4541 = vunpack.c.l.b16 %v3718
    %v4542 = vunpack.c.h.b16 %v3718
    %v4543 = vunpack.c.l.b16 %v3719
    %v4544 = vunpack.c.l.b16 %v3720
    %v4545 = vunpack.c.h.b16 %v3720
    %v4546 = vunpack.c.l.b16 %v3721
    %v4547 = vunpack.c.h.b16 %v3721
    %v4548 = vunpack.c.l.b16 %v3722
    %v4549 = vunpack.c.h.b16 %v3722
    %v4550 = vunpack.c.l.b16 %v3723
    %v4551 = vunpack.c.l.b16 %v3724
    %v4552 = vunpack.c.h.b16 %v3724
    %v4553 = vunpack.c.l.b16 %v3725
    %v4554 = vunpack.c.h.b16 %v3725
    %v4555 = vunpack.c.l.b16 %v3726
    %v4556 = vunpack.c.h.b16 %v3726
    %v4557 = vunpack.c.l.b16 %v3727
    %v4558 = vunpack.c.l.b16 %v3728
    %v4559 = vunpack.c.h.b16 %v3728
    %v4560 = vunpack.c.l.b16 %v3729
    %v4561 = vunpack.c.h.b16 %v3729
    %v4562 = vunpack.c.l.b16 %v3730
    %v4563 = vunpack.c.h.b16 %v3730
    %v4564 = vunpack.c.l.b16 %v3731
    %v4565 = vunpack.c.l.b16 %v3732
    %v4566 = vunpack.c.h.b16 %v3732
    %v4567 = vunpack.c.l.b16 %v3733
    %v4568 = vunpack.c.h.b16 %v3733
    %v4569 = vunpack.c.l.b16 %v3734
    %v4570 = vunpack.c.h.b16 %v3734
    %v4571 = vunpack.c.l.b16 %v3735
    %v4572 = vunpack.c.l.b16 %v3736
    %v4573 = vunpack.c.h.b16 %v3736
    %v4574 = vunpack.c.l.b16 %v3737
    %v4575 = vunpack.c.h.b16 %v3737
    %v4576 = vunpack.c.l.b16 %v3738
    %v4577 = vunpack.c.h.b16 %v3738
    %v4578 = vunpack.c.l.b16 %v3739
    %v4579 = vunpack.c.l.b16 %v3740
    %v4580 = vunpack.c.h.b16 %v3740
    %v4581 = vunpack.c.l.b16 %v3741
    %v4582 = vunpack.c.h.b16 %v3741
    %v4583 = vunpack.c.l.b16 %v3742
    %v4584 = vunpack.c.h.b16 %v3742
    %v4585 = vunpack.c.l.b16 %v3743
    %v4586 = vunpack.c.l.b16 %v3744
    %v4587 = vunpack.c.h.b16 %v3744
    %v4588 = vunpack.c.l.b16 %v3745
    %v4589 = vunpack.c.h.b16 %v3745
    %v4590 = vunpack.c.l.b16 %v3746
    %v4591 = vunpack.c.h.b16 %v3746
    %v4592 = vunpack.c.l.b16 %v3747
    %v4593 = vunpack.c.l.b16 %v3748
    %v4594 = vunpack.c.h.b16 %v3748
    %v4595 = vunpack.c.l.b16 %v3749
    %v4596 = vunpack.c.h.b16 %v3749
    %v4597 = vunpack.c.l.b16 %v3750
    %v4598 = vunpack.c.h.b16 %v3750
    %v4599 = vunpack.c.l.b16 %v3751
    %v4600 = vunpack.c.l.b16 %v3752
    %v4601 = vunpack.c.h.b16 %v3752
    %v4602 = vunpack.c.l.b16 %v3753
    %v4603 = vunpack.c.h.b16 %v3753
    %v4604 = vunpack.c.l.b16 %v3754
    %v4605 = vunpack.c.h.b16 %v3754
    %v4606 = vunpack.c.l.b16 %v3755
    %v4607 = vunpack.c.l.b16 %v3756
    %v4608 = vunpack.c.h.b16 %v3756
    %v4609 = vunpack.c.l.b16 %v3757
    %v4610 = vunpack.c.h.b16 %v3757
    %v4611 = vunpack.c.l.b16 %v3758
    %v4612 = vunpack.c.h.b16 %v3758
    %v4613 = vunpack.c.l.b16 %v3759
    %v4614 = vunpack.c.l.b16 %v3760
    %v4615 = vunpack.c.h.b16 %v3760
    %v4616 = vunpack.c.l.b16 %v3761
    %v4617 = vunpack.c.h.b16 %v3761
    %v4618 = vunpack.c.l.b16 %v3762
    %v4619 = vunpack.c.h.b16 %v3762
    %v4620 = vunpack.c.l.b16 %v3763
    %v4621 = vunpack.c.l.b16 %v3764
    %v4622 = vunpack.c.h.b16 %v3764
    %v4623 = vunpack.c.l.b16 %v3765
    %v4624 = vunpack.c.h.b16 %v3765
    %v4625 = vunpack.c.l.b16 %v3766
    %v4626 = vunpack.c.h.b16 %v3766
    %v4627 = vunpack.c.l.b16 %v3767
    %v4628 = vunpack.c.l.b16 %v3768
    %v4629 = vunpack.c.h.b16 %v3768
    %v4630 = vunpack.c.l.b16 %v3769
    %v4631 = vunpack.c.h.b16 %v3769
    %v4632 = vunpack.c.l.b16 %v3770
    %v4633 = vunpack.c.h.b16 %v3770
    %v4634 = vunpack.c.l.b16 %v3771
    %v4635 = vunpack.c.l.b16 %v3772
    %v4636 = vunpack.c.h.b16 %v3772
    %v4637 = vunpack.c.l.b16 %v3773
    %v4638 = vunpack.c.h.b16 %v3773
    %v4639 = vunpack.c.l.b16 %v3774
    %v4640 = vunpack.c.h.b16 %v3774
    %v4641 = vunpack.c.l.b16 %v3775
    %v4642 = vunpack.c.l.b16 %v3776
    %v4643 = vunpack.c.h.b16 %v3776
    %v4644 = vunpack.c.l.b16 %v3777
    %v4645 = vunpack.c.h.b16 %v3777
    %v4646 = vunpack.c.l.b16 %v3778
    %v4647 = vunpack.c.h.b16 %v3778
    %v4648 = vunpack.c.l.b16 %v3779
    %v4649 = vunpack.c.l.b16 %v3780
    %v4650 = vunpack.c.h.b16 %v3780
    %v4651 = vunpack.c.l.b16 %v3781
    %v4652 = vunpack.c.h.b16 %v3781
    %v4653 = vunpack.c.l.b16 %v3782
    %v4654 = vunpack.c.h.b16 %v3782
    %v4655 = vunpack.c.l.b16 %v3783
    %v4656 = vunpack.c.l.b16 %v3784
    %v4657 = vunpack.c.h.b16 %v3784
    %v4658 = vunpack.c.l.b16 %v3785
    %v4659 = vunpack.c.h.b16 %v3785
    %v4660 = vunpack.c.l.b16 %v3786
    %v4661 = vunpack.c.h.b16 %v3786
    %v4662 = vunpack.c.l.b16 %v3787
    %v4663 = vunpack.c.l.b16 %v3788
    %v4664 = vunpack.c.h.b16 %v3788
    %v4665 = vunpack.c.l.b16 %v3789
    %v4666 = vunpack.c.h.b16 %v3789
    %v4667 = vunpack.c.l.b16 %v3790
    %v4668 = vunpack.c.h.b16 %v3790
    %v4669 = vunpack.c.l.b16 %v3791
    %v4670 = vunpack.c.l.b16 %v3792
    %v4671 = vunpack.c.h.b16 %v3792
    %v4672 = vunpack.c.l.b16 %v3793
    %v4673 = vunpack.c.h.b16 %v3793
    %v4674 = vunpack.c.l.b16 %v3794
    %v4675 = vunpack.c.h.b16 %v3794
    %v4676 = vunpack.c.l.b16 %v3795
    %v4677 = vunpack.c.l.b16 %v3796
    %v4678 = vunpack.c.h.b16 %v3796
    %v4679 = vunpack.c.l.b16 %v3797
    %v4680 = vunpack.c.h.b16 %v3797
    %v4681 = vunpack.c.l.b16 %v3798
    %v4682 = vunpack.c.h.b16 %v3798
    %v4683 = vunpack.c.l.b16 %v3799
    %v4684 = vunpack.c.l.b16 %v3800
    %v4685 = vunpack.c.h.b16 %v3800
    %v4686 = vunpack.c.l.b16 %v3801
    %v4687 = vunpack.c.h.b16 %v3801
    %v4688 = vunpack.c.l.b16 %v3802
    %v4689 = vunpack.c.h.b16 %v3802
    %v4690 = vunpack.c.l.b16 %v3803
    %v4691 = vunpack.c.l.b16 %v3804
    %v4692 = vunpack.c.h.b16 %v3804
    %v4693 = vunpack.c.l.b16 %v3805
    %v4694 = vunpack.c.h.b16 %v3805
    %v4695 = vunpack.c.l.b16 %v3806
    %v4696 = vunpack.c.h.b16 %v3806
    %v4697 = vunpack.c.l.b16 %v3807
    %v4698 = vunpack.c.l.b16 %v3808
    %v4699 = vunpack.c.h.b16 %v3808
    %v4700 = vunpack.c.l.b16 %v3809
    %v4701 = vunpack.c.h.b16 %v3809
    %v4702 = vunpack.c.l.b16 %v3810
    %v4703 = vunpack.c.h.b16 %v3810
    %v4704 = vunpack.c.l.b16 %v3811
    %v4705 = vunpack.c.l.b16 %v3812
    %v4706 = vunpack.c.h.b16 %v3812
    %v4707 = vunpack.c.l.b16 %v3813
    %v4708 = vunpack.c.h.b16 %v3813
    %v4709 = vunpack.c.l.b16 %v3814
    %v4710 = vunpack.c.h.b16 %v3814
    %v4711 = vunpack.c.l.b16 %v3815
    %v4712 = vunpack.c.l.b16 %v3816
    %v4713 = vunpack.c.h.b16 %v3816
    %v4714 = vunpack.c.l.b16 %v3817
    %v4715 = vunpack.c.h.b16 %v3817
    %v4716 = vunpack.c.l.b16 %v3818
    %v4717 = vunpack.c.h.b16 %v3818
    %v4718 = vunpack.c.l.b16 %v3819
    %v4719 = vunpack.c.l.b16 %v3820
    %v4720 = vunpack.c.h.b16 %v3820
    %v4721 = vunpack.c.l.b16 %v3821
    %v4722 = vunpack.c.h.b16 %v3821
    %v4723 = vunpack.c.l.b16 %v3822
    %v4724 = vunpack.c.h.b16 %v3822
    %v4725 = vunpack.c.l.b16 %v3823
    %v4726 = vunpack.c.l.b16 %v3824
    %v4727 = vunpack.c.h.b16 %v3824
    %v4728 = vunpack.c.l.b16 %v3825
    %v4729 = vunpack.c.h.b16 %v3825
    %v4730 = vunpack.c.l.b16 %v3826
    %v4731 = vunpack.c.h.b16 %v3826
    %v4732 = vunpack.c.l.b16 %v3827
    %v4733 = vunpack.c.l.b16 %v3828
    %v4734 = vunpack.c.h.b16 %v3828
    %v4735 = vunpack.c.l.b16 %v3829
    %v4736 = vunpack.c.h.b16 %v3829
    %v4737 = vunpack.c.l.b16 %v3830
    %v4738 = vunpack.c.h.b16 %v3830
    %v4739 = vunpack.c.l.b16 %v3831
    %v4740 = vunpack.c.l.b16 %v3832
    %v4741 = vunpack.c.h.b16 %v3832
    %v4742 = vunpack.c.l.b16 %v3833
    %v4743 = vunpack.c.h.b16 %v3833
    %v4744 = vunpack.c.l.b16 %v3834
    %v4745 = vunpack.c.h.b16 %v3834
    %v4746 = vunpack.c.l.b16 %v3835
    %v4747 = vunpack.c.l.b16 %v3836
    %v4748 = vunpack.c.h.b16 %v3836
    %v4749 = vunpack.c.l.b16 %v3837
    %v4750 = vunpack.c.h.b16 %v3837
    %v4751 = vunpack.c.l.b16 %v3838
    %v4752 = vunpack.c.h.b16 %v3838
    %v4753 = vunpack.c.l.b16 %v3839
    %v4754 = vunpack.c.l.b16 %v3840
    %v4755 = vunpack.c.h.b16 %v3840
    %v4756 = vunpack.c.l.b16 %v3841
    %v4757 = vunpack.c.h.b16 %v3841
    %v4758 = vunpack.c.l.b16 %v3842
    %v4759 = vunpack.c.h.b16 %v3842
    %v4760 = vunpack.c.l.b16 %v3843
    %v4761 = vpack.c.b16 %v4208, %v4201
    %v4762 = vpack.c.b16 %v4209, %v4202
    %v4763 = vpack.c.b16 %v4210, %v4203
    %v4764 = vpack.c.b16 %v4211, %v4204
    %v4765 = vpack.c.b16 %v4212, %v4205
    %v4766 = vpack.c.b16 %v4213, %v4206
    %v4767 = vpack.c.b16 %v4214, %v4207
    %v4768 = vpack.c.b16 %v4222, %v4215
    %v4769 = vpack.c.b16 %v4223, %v4216
    %v4770 = vpack.c.b16 %v4224, %v4217
    %v4771 = vpack.c.b16 %v4225, %v4218
    %v4772 = vpack.c.b16 %v4226, %v4219
    %v4773 = vpack.c.b16 %v4227, %v4220
    %v4774 = vpack.c.b16 %v4228, %v4221
    %v4775 = vpack.c.b16 %v4236, %v4229
    %v4776 = vpack.c.b16 %v4237, %v4230
    %v4777 = vpack.c.b16 %v4238, %v4231
    %v4778 = vpack.c.b16 %v4239, %v4232
    %v4779 = vpack.c.b16 %v4240, %v4233
    %v4780 = vpack.c.b16 %v4241, %v4234
    %v4781 = vpack.c.b16 %v4242, %v4235
    %v4782 = vpack.c.b16 %v4250, %v4243
    %v4783 = vpack.c.b16 %v4251, %v4244
    %v4784 = vpack.c.b16 %v4252, %v4245
    %v4785 = vpack.c.b16 %v4253, %v4246
    %v4786 = vpack.c.b16 %v4254, %v4247
    %v4787 = vpack.c.b16 %v4255, %v4248
    %v4788 = vpack.c.b16 %v4256, %v4249
    %v4789 = vpack.c.b16 %v4264, %v4257
    %v4790 = vpack.c.b16 %v4265, %v4258
    %v4791 = vpack.c.b16 %v4266, %v4259
    %v4792 = vpack.c.b16 %v4267, %v4260
    %v4793 = vpack.c.b16 %v4268, %v4261
    %v4794 = vpack.c.b16 %v4269, %v4262
    %v4795 = vpack.c.b16 %v4270, %v4263
    %v4796 = vpack.c.b16 %v4278, %v4271
    %v4797 = vpack.c.b16 %v4279, %v4272
    %v4798 = vpack.c.b16 %v4280, %v4273
    %v4799 = vpack.c.b16 %v4281, %v4274
    %v4800 = vpack.c.b16 %v4282, %v4275
    %v4801 = vpack.c.b16 %v4283, %v4276
    %v4802 = vpack.c.b16 %v4284, %v4277
    %v4803 = vpack.c.b16 %v4292, %v4285
    %v4804 = vpack.c.b16 %v4293, %v4286
    %v4805 = vpack.c.b16 %v4294, %v4287
    %v4806 = vpack.c.b16 %v4295, %v4288
    %v4807 = vpack.c.b16 %v4296, %v4289
    %v4808 = vpack.c.b16 %v4297, %v4290
    %v4809 = vpack.c.b16 %v4298, %v4291
    %v4810 = vpack.c.b16 %v4306, %v4299
    %v4811 = vpack.c.b16 %v4307, %v4300
    %v4812 = vpack.c.b16 %v4308, %v4301
    %v4813 = vpack.c.b16 %v4309, %v4302
    %v4814 = vpack.c.b16 %v4310, %v4303
    %v4815 = vpack.c.b16 %v4311, %v4304
    %v4816 = vpack.c.b16 %v4312, %v4305
    %v4817 = vpack.c.b16 %v4320, %v4313
    %v4818 = vpack.c.b16 %v4321, %v4314
    %v4819 = vpack.c.b16 %v4322, %v4315
    %v4820 = vpack.c.b16 %v4323, %v4316
    %v4821 = vpack.c.b16 %v4324, %v4317
    %v4822 = vpack.c.b16 %v4325, %v4318
    %v4823 = vpack.c.b16 %v4326, %v4319
    %v4824 = vpack.c.b16 %v4334, %v4327
    %v4825 = vpack.c.b16 %v4335, %v4328
    %v4826 = vpack.c.b16 %v4336, %v4329
    %v4827 = vpack.c.b16 %v4337, %v4330
    %v4828 = vpack.c.b16 %v4338, %v4331
    %v4829 = vpack.c.b16 %v4339, %v4332
    %v4830 = vpack.c.b16 %v4340, %v4333
    %v4831 = vpack.c.b16 %v4348, %v4341
    %v4832 = vpack.c.b16 %v4349, %v4342
    %v4833 = vpack.c.b16 %v4350, %v4343
    %v4834 = vpack.c.b16 %v4351, %v4344
    %v4835 = vpack.c.b16 %v4352, %v4345
    %v4836 = vpack.c.b16 %v4353, %v4346
    %v4837 = vpack.c.b16 %v4354, %v4347
    %v4838 = vpack.c.b16 %v4362, %v4355
    %v4839 = vpack.c.b16 %v4363, %v4356
    %v4840 = vpack.c.b16 %v4364, %v4357
    %v4841 = vpack.c.b16 %v4365, %v4358
    %v4842 = vpack.c.b16 %v4366, %v4359
    %v4843 = vpack.c.b16 %v4367, %v4360
    %v4844 = vpack.c.b16 %v4368, %v4361
    %v4845 = vpack.c.b16 %v4376, %v4369
    %v4846 = vpack.c.b16 %v4377, %v4370
    %v4847 = vpack.c.b16 %v4378, %v4371
    %v4848 = vpack.c.b16 %v4379, %v4372
    %v4849 = vpack.c.b16 %v4380, %v4373
    %v4850 = vpack.c.b16 %v4381, %v4374
    %v4851 = vpack.c.b16 %v4382, %v4375
    %v4852 = vpack.c.b16 %v4390, %v4383
    %v4853 = vpack.c.b16 %v4391, %v4384
    %v4854 = vpack.c.b16 %v4392, %v4385
    %v4855 = vpack.c.b16 %v4393, %v4386
    %v4856 = vpack.c.b16 %v4394, %v4387
    %v4857 = vpack.c.b16 %v4395, %v4388
    %v4858 = vpack.c.b16 %v4396, %v4389
    %v4859 = vpack.c.b16 %v4404, %v4397
    %v4860 = vpack.c.b16 %v4405, %v4398
    %v4861 = vpack.c.b16 %v4406, %v4399
    %v4862 = vpack.c.b16 %v4407, %v4400
    %v4863 = vpack.c.b16 %v4408, %v4401
    %v4864 = vpack.c.b16 %v4409, %v4402
    %v4865 = vpack.c.b16 %v4410, %v4403
    %v4866 = vpack.c.b16 %v4418, %v4411
    %v4867 = vpack.c.b16 %v4419, %v4412
    %v4868 = vpack.c.b16 %v4420, %v4413
    %v4869 = vpack.c.b16 %v4421, %v4414
    %v4870 = vpack.c.b16 %v4422, %v4415
    %v4871 = vpack.c.b16 %v4423, %v4416
    %v4872 = vpack.c.b16 %v4424, %v4417
    %v4873 = vpack.c.b16 %v4432, %v4425
    %v4874 = vpack.c.b16 %v4433, %v4426
    %v4875 = vpack.c.b16 %v4434, %v4427
    %v4876 = vpack.c.b16 %v4435, %v4428
    %v4877 = vpack.c.b16 %v4436, %v4429
    %v4878 = vpack.c.b16 %v4437, %v4430
    %v4879 = vpack.c.b16 %v4438, %v4431
    %v4880 = vpack.c.b16 %v4446, %v4439
    %v4881 = vpack.c.b16 %v4447, %v4440
    %v4882 = vpack.c.b16 %v4448, %v4441
    %v4883 = vpack.c.b16 %v4449, %v4442
    %v4884 = vpack.c.b16 %v4450, %v4443
    %v4885 = vpack.c.b16 %v4451, %v4444
    %v4886 = vpack.c.b16 %v4452, %v4445
    %v4887 = vpack.c.b16 %v4460, %v4453
    %v4888 = vpack.c.b16 %v4461, %v4454
    %v4889 = vpack.c.b16 %v4462, %v4455
    %v4890 = vpack.c.b16 %v4463, %v4456
    %v4891 = vpack.c.b16 %v4464, %v4457
    %v4892 = vpack.c.b16 %v4465, %v4458
    %v4893 = vpack.c.b16 %v4466, %v4459
    %v4894 = vpack.c.b16 %v4474, %v4467
    %v4895 = vpack.c.b16 %v4475, %v4468
    %v4896 = vpack.c.b16 %v4476, %v4469
    %v4897 = vpack.c.b16 %v4477, %v4470
    %v4898 = vpack.c.b16 %v4478, %v4471
    %v4899 = vpack.c.b16 %v4479, %v4472
    %v4900 = vpack.c.b16 %v4480, %v4473
    %v4901 = vpack.c.b16 %v4488, %v4481
    %v4902 = vpack.c.b16 %v4489, %v4482
    %v4903 = vpack.c.b16 %v4490, %v4483
    %v4904 = vpack.c.b16 %v4491, %v4484
    %v4905 = vpack.c.b16 %v4492, %v4485
    %v4906 = vpack.c.b16 %v4493, %v4486
    %v4907 = vpack.c.b16 %v4494, %v4487
    %v4908 = vpack.c.b16 %v4502, %v4495
    %v4909 = vpack.c.b16 %v4503, %v4496
    %v4910 = vpack.c.b16 %v4504, %v4497
    %v4911 = vpack.c.b16 %v4505, %v4498
    %v4912 = vpack.c.b16 %v4506, %v4499
    %v4913 = vpack.c.b16 %v4507, %v4500
    %v4914 = vpack.c.b16 %v4508, %v4501
    %v4915 = vpack.c.b16 %v4516, %v4509
    %v4916 = vpack.c.b16 %v4517, %v4510
    %v4917 = vpack.c.b16 %v4518, %v4511
    %v4918 = vpack.c.b16 %v4519, %v4512
    %v4919 = vpack.c.b16 %v4520, %v4513
    %v4920 = vpack.c.b16 %v4521, %v4514
    %v4921 = vpack.c.b16 %v4522, %v4515
    %v4922 = vpack.c.b16 %v4530, %v4523
    %v4923 = vpack.c.b16 %v4531, %v4524
    %v4924 = vpack.c.b16 %v4532, %v4525
    %v4925 = vpack.c.b16 %v4533, %v4526
    %v4926 = vpack.c.b16 %v4534, %v4527
    %v4927 = vpack.c.b16 %v4535, %v4528
    %v4928 = vpack.c.b16 %v4536, %v4529
    %v4929 = vpack.c.b16 %v4544, %v4537
    %v4930 = vpack.c.b16 %v4545, %v4538
    %v4931 = vpack.c.b16 %v4546, %v4539
    %v4932 = vpack.c.b16 %v4547, %v4540
    %v4933 = vpack.c.b16 %v4548, %v4541
    %v4934 = vpack.c.b16 %v4549, %v4542
    %v4935 = vpack.c.b16 %v4550, %v4543
    %v4936 = vpack.c.b16 %v4558, %v4551
    %v4937 = vpack.c.b16 %v4559, %v4552
    %v4938 = vpack.c.b16 %v4560, %v4553
    %v4939 = vpack.c.b16 %v4561, %v4554
    %v4940 = vpack.c.b16 %v4562, %v4555
    %v4941 = vpack.c.b16 %v4563, %v4556
    %v4942 = vpack.c.b16 %v4564, %v4557
    %v4943 = vpack.c.b16 %v4572, %v4565
    %v4944 = vpack.c.b16 %v4573, %v4566
    %v4945 = vpack.c.b16 %v4574, %v4567
    %v4946 = vpack.c.b16 %v4575, %v4568
    %v4947 = vpack.c.b16 %v4576, %v4569
    %v4948 = vpack.c.b16 %v4577, %v4570
    %v4949 = vpack.c.b16 %v4578, %v4571
    %v4950 = vpack.c.b16 %v4586, %v4579
    %v4951 = vpack.c.b16 %v4587, %v4580
    %v4952 = vpack.c.b16 %v4588, %v4581
    %v4953 = vpack.c.b16 %v4589, %v4582
    %v4954 = vpack.c.b16 %v4590, %v4583
    %v4955 = vpack.c.b16 %v4591, %v4584
    %v4956 = vpack.c.b16 %v4592, %v4585
    %v4957 = vpack.c.b16 %v4600, %v4593
    %v4958 = vpack.c.b16 %v4601, %v4594
    %v4959 = vpack.c.b16 %v4602, %v4595
    %v4960 = vpack.c.b16 %v4603, %v4596
    %v4961 = vpack.c.b16 %v4604, %v4597
    %v4962 = vpack.c.b16 %v4605, %v4598
    %v4963 = vpack.c.b16 %v4606, %v4599
    %v4964 = vpack.c.b16 %v4614, %v4607
    %v4965 = vpack.c.b16 %v4615, %v4608
    %v4966 = vpack.c.b16 %v4616, %v4609
    %v4967 = vpack.c.b16 %v4617, %v4610
    %v4968 = vpack.c.b16 %v4618, %v4611
    %v4969 = vpack.c.b16 %v4619, %v4612
    %v4970 = vpack.c.b16 %v4620, %v4613
    %v4971 = vpack.c.b16 %v4628, %v4621
    %v4972 = vpack.c.b16 %v4629, %v4622
    %v4973 = vpack.c.b16 %v4630, %v4623
    %v4974 = vpack.c.b16 %v4631, %v4624
    %v4975 = vpack.c.b16 %v4632, %v4625
    %v4976 = vpack.c.b16 %v4633, %v4626
    %v4977 = vpack.c.b16 %v4634, %v4627
    %v4978 = vpack.c.b16 %v4642, %v4635
    %v4979 = vpack.c.b16 %v4643, %v4636
    %v4980 = vpack.c.b16 %v4644, %v4637
    %v4981 = vpack.c.b16 %v4645, %v4638
    %v4982 = vpack.c.b16 %v4646, %v4639
    %v4983 = vpack.c.b16 %v4647, %v4640
    %v4984 = vpack.c.b16 %v4648, %v4641
    %v4985 = vpack.c.b16 %v4656, %v4649
    %v4986 = vpack.c.b16 %v4657, %v4650
    %v4987 = vpack.c.b16 %v4658, %v4651
    %v4988 = vpack.c.b16 %v4659, %v4652
    %v4989 = vpack.c.b16 %v4660, %v4653
    %v4990 = vpack.c.b16 %v4661, %v4654
    %v4991 = vpack.c.b16 %v4662, %v4655
    %v4992 = vpack.c.b16 %v4670, %v4663
    %v4993 = vpack.c.b16 %v4671, %v4664
    %v4994 = vpack.c.b16 %v4672, %v4665
    %v4995 = vpack.c.b16 %v4673, %v4666
    %v4996 = vpack.c.b16 %v4674, %v4667
    %v4997 = vpack.c.b16 %v4675, %v4668
    %v4998 = vpack.c.b16 %v4676, %v4669
    %v4999 = vpack.c.b16 %v4684, %v4677
    %v5000 = vpack.c.b16 %v4685, %v4678
    %v5001 = vpack.c.b16 %v4686, %v4679
    %v5002 = vpack.c.b16 %v4687, %v4680
    %v5003 = vpack.c.b16 %v4688, %v4681
    %v5004 = vpack.c.b16 %v4689, %v4682
    %v5005 = vpack.c.b16 %v4690, %v4683
    %v5006 = vpack.c.b16 %v4698, %v4691
    %v5007 = vpack.c.b16 %v4699, %v4692
    %v5008 = vpack.c.b16 %v4700, %v4693
    %v5009 = vpack.c.b16 %v4701, %v4694
    %v5010 = vpack.c.b16 %v4702, %v4695
    %v5011 = vpack.c.b16 %v4703, %v4696
    %v5012 = vpack.c.b16 %v4704, %v4697
    %v5013 = vpack.c.b16 %v4712, %v4705
    %v5014 = vpack.c.b16 %v4713, %v4706
    %v5015 = vpack.c.b16 %v4714, %v4707
    %v5016 = vpack.c.b16 %v4715, %v4708
    %v5017 = vpack.c.b16 %v4716, %v4709
    %v5018 = vpack.c.b16 %v4717, %v4710
    %v5019 = vpack.c.b16 %v4718, %v4711
    %v5020 = vpack.c.b16 %v4726, %v4719
    %v5021 = vpack.c.b16 %v4727, %v4720
    %v5022 = vpack.c.b16 %v4728, %v4721
    %v5023 = vpack.c.b16 %v4729, %v4722
    %v5024 = vpack.c.b16 %v4730, %v4723
    %v5025 = vpack.c.b16 %v4731, %v4724
    %v5026 = vpack.c.b16 %v4732, %v4725
    %v5027 = vpack.c.b16 %v4740, %v4733
    %v5028 = vpack.c.b16 %v4741, %v4734
    %v5029 = vpack.c.b16 %v4742, %v4735
    %v5030 = vpack.c.b16 %v4743, %v4736
    %v5031 = vpack.c.b16 %v4744, %v4737
    %v5032 = vpack.c.b16 %v4745, %v4738
    %v5033 = vpack.c.b16 %v4746, %v4739
    %v5034 = vpack.c.b16 %v4754, %v4747
    %v5035 = vpack.c.b16 %v4755, %v4748
    %v5036 = vpack.c.b16 %v4756, %v4749
    %v5037 = vpack.c.b16 %v4757, %v4750
    %v5038 = vpack.c.b16 %v4758, %v4751
    %v5039 = vpack.c.b16 %v4759, %v4752
    %v5040 = vpack.c.b16 %v4760, %v4753
    %5321 = vmatprep.subr.bf16.mxu0 %v4762
    %5322 = vmatpush1.bf16.msra.mxu0 %v4761
    %5323 = vmatprep.subr.bf16.mxu0 %v4769
    %5324 = vmatpush1.bf16.msra.mxu0 %v4768
    %5325 = vmatprep.subr.bf16.mxu0 %v4776
    %5326 = vmatpush1.bf16.msra.mxu0 %v4775
    %5327 = vmatprep.subr.bf16.mxu0 %v4783
    %5328 = vmatpush1.bf16.msra.mxu0 %v4782
    %5329 = vmatprep.subr.bf16.mxu0 %v4790
    %5330 = vmatpush1.bf16.msra.mxu0 %v4789
    %5331 = vmatprep.subr.bf16.mxu0 %v4797
    %5332 = vmatpush1.bf16.msra.mxu0 %v4796
    %5333 = vmatprep.subr.bf16.mxu0 %v4804
    %5334 = vmatpush1.bf16.msra.mxu0 %v4803
    %5335 = vmatprep.subr.bf16.mxu0 %v4811
    %5336 = vmatpush1.bf16.msra.mxu0 %v4810
    %5337 = vmatprep.subr.bf16.mxu0 %v4818
    %5338 = vmatpush1.bf16.msra.mxu0 %v4817
    %5339 = vmatprep.subr.bf16.mxu0 %v4825
    %5340 = vmatpush1.bf16.msra.mxu0 %v4824
    %5341 = vmatprep.subr.bf16.mxu0 %v4832
    %5342 = vmatpush1.bf16.msra.mxu0 %v4831
    %5343 = vmatprep.subr.bf16.mxu0 %v4839
    %5344 = vmatpush1.bf16.msra.mxu0 %v4838
    %5345 = vmatprep.subr.bf16.mxu0 %v4846
    %5346 = vmatpush1.bf16.msra.mxu0 %v4845
    %5347 = vmatprep.subr.bf16.mxu0 %v4853
    %5348 = vmatpush1.bf16.msra.mxu0 %v4852
    %5349 = vmatprep.subr.bf16.mxu0 %v4860
    %5350 = vmatpush1.bf16.msra.mxu0 %v4859
    %5351 = vmatprep.subr.bf16.mxu0 %v4867
    %5352 = vmatpush1.bf16.msra.mxu0 %v4866
    %5353 = vmatprep.mubr.bf16.mxu0 %v3520
    %5354 = vmatmul.mubr.bf16.gmra.mrb[0].mxu0 %v3519
    %v5355 = vpop.f32.mrb[0].mxu0
    %v5356 = vadd.f32 %v3849, %v5355
    %v5357 = vpop.f32.mrb[0].mxu0
    %v5358 = vadd.f32 %v3853, %v5357
    %v5359 = vpop.f32.mrb[0].mxu0
    %v5360 = vpop.f32.mrb[0].mxu0
    %5361 = vdwg.mxu0
    %5362 = vmatprep.subr.bf16.mxu0 %v4874
    %5363 = vmatpush1.bf16.msra.mxu0 %v4873
    %5364 = vmatprep.subr.bf16.mxu0 %v4881
    %5365 = vmatpush1.bf16.msra.mxu0 %v4880
    %5366 = vmatprep.subr.bf16.mxu0 %v4888
    %5367 = vmatpush1.bf16.msra.mxu0 %v4887
    %5368 = vmatprep.subr.bf16.mxu0 %v4895
    %5369 = vmatpush1.bf16.msra.mxu0 %v4894
    %5370 = vmatprep.subr.bf16.mxu0 %v4902
    %5371 = vmatpush1.bf16.msra.mxu0 %v4901
    %5372 = vmatprep.subr.bf16.mxu0 %v4909
    %5373 = vmatpush1.bf16.msra.mxu0 %v4908
    %5374 = vmatprep.subr.bf16.mxu0 %v4916
    %5375 = vmatpush1.bf16.msra.mxu0 %v4915
    %5376 = vmatprep.subr.bf16.mxu0 %v4923
    %5377 = vmatpush1.bf16.msra.mxu0 %v4922
    %5378 = vmatprep.subr.bf16.mxu0 %v4930
    %5379 = vmatpush1.bf16.msra.mxu0 %v4929
    %5380 = vmatprep.subr.bf16.mxu0 %v4937
    %5381 = vmatpush1.bf16.msra.mxu0 %v4936
    %5382 = vmatprep.subr.bf16.mxu0 %v4944
    %5383 = vmatpush1.bf16.msra.mxu0 %v4943
    %5384 = vmatprep.subr.bf16.mxu0 %v4951
    %5385 = vmatpush1.bf16.msra.mxu0 %v4950
    %5386 = vmatprep.subr.bf16.mxu0 %v4958
    %5387 = vmatpush1.bf16.msra.mxu0 %v4957
    %5388 = vmatprep.subr.bf16.mxu0 %v4965
    %5389 = vmatpush1.bf16.msra.mxu0 %v4964
    %5390 = vmatprep.subr.bf16.mxu0 %v4972
    %5391 = vmatpush1.bf16.msra.mxu0 %v4971
    %5392 = vmatprep.subr.bf16.mxu0 %v4979
    %5393 = vmatpush1.bf16.msra.mxu0 %v4978
    %5394 = vmatprep.mubr.bf16.mxu0 %v3522
    %5395 = vmatmul.mubr.bf16.gmra.mrb[0].mxu0 %v3521
    %v5396 = vpop.f32.mrb[0].mxu0
    %v5397 = vadd.f32 %v5356, %v5396
    %v5398 = vpop.f32.mrb[0].mxu0
    %v5399 = vadd.f32 %v5358, %v5398
    %v5400 = vpop.f32.mrb[0].mxu0
    %v5401 = vpop.f32.mrb[0].mxu0
    %5402 = vdwg.mxu0
    %5403 = vmatprep.subr.bf16.mxu0 %v4986
    %5404 = vmatpush1.bf16.msra.mxu0 %v4985
    %5405 = vmatprep.subr.bf16.mxu0 %v4993
    %5406 = vmatpush1.bf16.msra.mxu0 %v4992
    %5407 = vmatprep.subr.bf16.mxu0 %v5000
    %5408 = vmatpush1.bf16.msra.mxu0 %v4999
    %5409 = vmatprep.subr.bf16.mxu0 %v5007
    %5410 = vmatpush1.bf16.msra.mxu0 %v5006
    %5411 = vmatprep.subr.bf16.mxu0 %v5014
    %5412 = vmatpush1.bf16.msra.mxu0 %v5013
    %5413 = vmatprep.subr.bf16.mxu0 %v5021
    %5414 = vmatpush1.bf16.msra.mxu0 %v5020
    %5415 = vmatprep.subr.bf16.mxu0 %v5028
    %5416 = vmatpush1.bf16.msra.mxu0 %v5027
    %5417 = vmatprep.subr.bf16.mxu0 %v5035
    %5418 = vmatpush1.bf16.msra.mxu0 %v5034
    %5419 = vmatprep.subr.bf16.mxu0 0
    %5420 = vmatpush1.bf16.msra.mxu0 0
    %5421 = vmatprep.subr.bf16.mxu0 0
    %5422 = vmatpush1.bf16.msra.mxu0 0
    %5423 = vmatprep.subr.bf16.mxu0 0
    %5424 = vmatpush1.bf16.msra.mxu0 0
    %5425 = vmatprep.subr.bf16.mxu0 0
    %5426 = vmatpush1.bf16.msra.mxu0 0
    %5427 = vmatprep.subr.bf16.mxu0 0
    %5428 = vmatpush1.bf16.msra.mxu0 0
    %5429 = vmatprep.subr.bf16.mxu0 0
    %5430 = vmatpush1.bf16.msra.mxu0 0
    %5431 = vmatprep.subr.bf16.mxu0 0
    %5432 = vmatpush1.bf16.msra.mxu0 0
    %5433 = vmatprep.subr.bf16.mxu0 0
    %5434 = vmatpush1.bf16.msra.mxu0 0
    %5435 = vmatprep.mubr.bf16.mxu0 0
    %5436 = vmatmul.mubr.bf16.gmra.mrb[0].mxu0 %v3523
    %v5437 = vpop.f32.mrb[0].mxu0
    %v5438 = vadd.f32 %v5397, %v5437
    %v5439 = vpop.f32.mrb[0].mxu0
    %v5440 = vadd.f32 %v5399, %v5439
    %v5441 = vpop.f32.mrb[0].mxu0
    %v5442 = vpop.f32.mrb[0].mxu0
    %5443 = vdwg.mxu0
    %5444 = vmatprep.subr.bf16.mxu0 %v4764
    %5445 = vmatpush1.bf16.msra.mxu0 %v4763
    %5446 = vmatprep.subr.bf16.mxu0 %v4771
    %5447 = vmatpush1.bf16.msra.mxu0 %v4770
    %5448 = vmatprep.subr.bf16.mxu0 %v4778
    %5449 = vmatpush1.bf16.msra.mxu0 %v4777
    %5450 = vmatprep.subr.bf16.mxu0 %v4785
    %5451 = vmatpush1.bf16.msra.mxu0 %v4784
    %5452 = vmatprep.subr.bf16.mxu0 %v4792
    %5453 = vmatpush1.bf16.msra.mxu0 %v4791
    %5454 = vmatprep.subr.bf16.mxu0 %v4799
    %5455 = vmatpush1.bf16.msra.mxu0 %v4798
    %5456 = vmatprep.subr.bf16.mxu0 %v4806
    %5457 = vmatpush1.bf16.msra.mxu0 %v4805
    %5458 = vmatprep.subr.bf16.mxu0 %v4813
    %5459 = vmatpush1.bf16.msra.mxu0 %v4812
    %5460 = vmatprep.subr.bf16.mxu0 %v4820
    %5461 = vmatpush1.bf16.msra.mxu0 %v4819
    %5462 = vmatprep.subr.bf16.mxu0 %v4827
    %5463 = vmatpush1.bf16.msra.mxu0 %v4826
    %5464 = vmatprep.subr.bf16.mxu0 %v4834
    %5465 = vmatpush1.bf16.msra.mxu0 %v4833
    %5466 = vmatprep.subr.bf16.mxu0 %v4841
    %5467 = vmatpush1.bf16.msra.mxu0 %v4840
    %5468 = vmatprep.subr.bf16.mxu0 %v4848
    %5469 = vmatpush1.bf16.msra.mxu0 %v4847
    %5470 = vmatprep.subr.bf16.mxu0 %v4855
    %5471 = vmatpush1.bf16.msra.mxu0 %v4854
    %5472 = vmatprep.subr.bf16.mxu0 %v4862
    %5473 = vmatpush1.bf16.msra.mxu0 %v4861
    %5474 = vmatprep.subr.bf16.mxu0 %v4869
    %5475 = vmatpush1.bf16.msra.mxu0 %v4868
    %5476 = vmatprep.mubr.bf16.mxu0 %v3520
    %5477 = vmatmul.mubr.bf16.gmra.mrb[0].mxu0 %v3519
    %v5478 = vpop.f32.mrb[0].mxu0
    %v5479 = vadd.f32 %v3857, %v5478
    %v5480 = vpop.f32.mrb[0].mxu0
    %v5481 = vadd.f32 %v3861, %v5480
    %v5482 = vpop.f32.mrb[0].mxu0
    %v5483 = vpop.f32.mrb[0].mxu0
    %5484 = vdwg.mxu0
    %5485 = vmatprep.subr.bf16.mxu0 %v4876
    %5486 = vmatpush1.bf16.msra.mxu0 %v4875
    %5487 = vmatprep.subr.bf16.mxu0 %v4883
    %5488 = vmatpush1.bf16.msra.mxu0 %v4882
    %5489 = vmatprep.subr.bf16.mxu0 %v4890
    %5490 = vmatpush1.bf16.msra.mxu0 %v4889
    %5491 = vmatprep.subr.bf16.mxu0 %v4897
    %5492 = vmatpush1.bf16.msra.mxu0 %v4896
    %5493 = vmatprep.subr.bf16.mxu0 %v4904
    %5494 = vmatpush1.bf16.msra.mxu0 %v4903
    %5495 = vmatprep.subr.bf16.mxu0 %v4911
    %5496 = vmatpush1.bf16.msra.mxu0 %v4910
    %5497 = vmatprep.subr.bf16.mxu0 %v4918
    %5498 = vmatpush1.bf16.msra.mxu0 %v4917
    %5499 = vmatprep.subr.bf16.mxu0 %v4925
    %5500 = vmatpush1.bf16.msra.mxu0 %v4924
    %5501 = vmatprep.subr.bf16.mxu0 %v4932
    %5502 = vmatpush1.bf16.msra.mxu0 %v4931
    %5503 = vmatprep.subr.bf16.mxu0 %v4939
    %5504 = vmatpush1.bf16.msra.mxu0 %v4938
    %5505 = vmatprep.subr.bf16.mxu0 %v4946
    %5506 = vmatpush1.bf16.msra.mxu0 %v4945
    %5507 = vmatprep.subr.bf16.mxu0 %v4953
    %5508 = vmatpush1.bf16.msra.mxu0 %v4952
    %5509 = vmatprep.subr.bf16.mxu0 %v4960
    %5510 = vmatpush1.bf16.msra.mxu0 %v4959
    %5511 = vmatprep.subr.bf16.mxu0 %v4967
    %5512 = vmatpush1.bf16.msra.mxu0 %v4966
    %5513 = vmatprep.subr.bf16.mxu0 %v4974
    %5514 = vmatpush1.bf16.msra.mxu0 %v4973
    %5515 = vmatprep.subr.bf16.mxu0 %v4981
    %5516 = vmatpush1.bf16.msra.mxu0 %v4980
    %5517 = vmatprep.mubr.bf16.mxu0 %v3522
    %5518 = vmatmul.mubr.bf16.gmra.mrb[0].mxu0 %v3521
    %v5519 = vpop.f32.mrb[0].mxu0
    %v5520 = vadd.f32 %v5479, %v5519
    %v5521 = vpop.f32.mrb[0].mxu0
    %v5522 = vadd.f32 %v5481, %v5521
    %v5523 = vpop.f32.mrb[0].mxu0
    %v5524 = vpop.f32.mrb[0].mxu0
    %5525 = vdwg.mxu0
    %5526 = vmatprep.subr.bf16.mxu0 %v4988
    %5527 = vmatpush1.bf16.msra.mxu0 %v4987
    %5528 = vmatprep.subr.bf16.mxu0 %v4995
    %5529 = vmatpush1.bf16.msra.mxu0 %v4994
    %5530 = vmatprep.subr.bf16.mxu0 %v5002
    %5531 = vmatpush1.bf16.msra.mxu0 %v5001
    %5532 = vmatprep.subr.bf16.mxu0 %v5009
    %5533 = vmatpush1.bf16.msra.mxu0 %v5008
    %5534 = vmatprep.subr.bf16.mxu0 %v5016
    %5535 = vmatpush1.bf16.msra.mxu0 %v5015
    %5536 = vmatprep.subr.bf16.mxu0 %v5023
    %5537 = vmatpush1.bf16.msra.mxu0 %v5022
    %5538 = vmatprep.subr.bf16.mxu0 %v5030
    %5539 = vmatpush1.bf16.msra.mxu0 %v5029
    %5540 = vmatprep.subr.bf16.mxu0 %v5037
    %5541 = vmatpush1.bf16.msra.mxu0 %v5036
    %5542 = vmatprep.subr.bf16.mxu0 0
    %5543 = vmatpush1.bf16.msra.mxu0 0
    %5544 = vmatprep.subr.bf16.mxu0 0
    %5545 = vmatpush1.bf16.msra.mxu0 0
    %5546 = vmatprep.subr.bf16.mxu0 0
    %5547 = vmatpush1.bf16.msra.mxu0 0
    %5548 = vmatprep.subr.bf16.mxu0 0
    %5549 = vmatpush1.bf16.msra.mxu0 0
    %5550 = vmatprep.subr.bf16.mxu0 0
    %5551 = vmatpush1.bf16.msra.mxu0 0
    %5552 = vmatprep.subr.bf16.mxu0 0
    %5553 = vmatpush1.bf16.msra.mxu0 0
    %5554 = vmatprep.subr.bf16.mxu0 0
    %5555 = vmatpush1.bf16.msra.mxu0 0
    %5556 = vmatprep.subr.bf16.mxu0 0
    %5557 = vmatpush1.bf16.msra.mxu0 0
    %5558 = vmatprep.mubr.bf16.mxu0 0
    %5559 = vmatmul.mubr.bf16.gmra.mrb[0].mxu0 %v3523
    %v5560 = vpop.f32.mrb[0].mxu0
    %v5561 = vadd.f32 %v5520, %v5560
    %v5562 = vpop.f32.mrb[0].mxu0
    %v5563 = vadd.f32 %v5522, %v5562
    %v5564 = vpop.f32.mrb[0].mxu0
    %v5565 = vpop.f32.mrb[0].mxu0
    %5566 = vdwg.mxu0
    %5567 = vmatprep.subr.bf16.mxu0 %v4766
    %5568 = vmatpush1.bf16.msra.mxu0 %v4765
    %5569 = vmatprep.subr.bf16.mxu0 %v4773
    %5570 = vmatpush1.bf16.msra.mxu0 %v4772
    %5571 = vmatprep.subr.bf16.mxu0 %v4780
    %5572 = vmatpush1.bf16.msra.mxu0 %v4779
    %5573 = vmatprep.subr.bf16.mxu0 %v4787
    %5574 = vmatpush1.bf16.msra.mxu0 %v4786
    %5575 = vmatprep.subr.bf16.mxu0 %v4794
    %5576 = vmatpush1.bf16.msra.mxu0 %v4793
    %5577 = vmatprep.subr.bf16.mxu0 %v4801
    %5578 = vmatpush1.bf16.msra.mxu0 %v4800
    %5579 = vmatprep.subr.bf16.mxu0 %v4808
    %5580 = vmatpush1.bf16.msra.mxu0 %v4807
    %5581 = vmatprep.subr.bf16.mxu0 %v4815
    %5582 = vmatpush1.bf16.msra.mxu0 %v4814
    %5583 = vmatprep.subr.bf16.mxu0 %v4822
    %5584 = vmatpush1.bf16.msra.mxu0 %v4821
    %5585 = vmatprep.subr.bf16.mxu0 %v4829
    %5586 = vmatpush1.bf16.msra.mxu0 %v4828
    %5587 = vmatprep.subr.bf16.mxu0 %v4836
    %5588 = vmatpush1.bf16.msra.mxu0 %v4835
    %5589 = vmatprep.subr.bf16.mxu0 %v4843
    %5590 = vmatpush1.bf16.msra.mxu0 %v4842
    %5591 = vmatprep.subr.bf16.mxu0 %v4850
    %5592 = vmatpush1.bf16.msra.mxu0 %v4849
    %5593 = vmatprep.subr.bf16.mxu0 %v4857
    %5594 = vmatpush1.bf16.msra.mxu0 %v4856
    %5595 = vmatprep.subr.bf16.mxu0 %v4864
    %5596 = vmatpush1.bf16.msra.mxu0 %v4863
    %5597 = vmatprep.subr.bf16.mxu0 %v4871
    %5598 = vmatpush1.bf16.msra.mxu0 %v4870
    %5599 = vmatprep.mubr.bf16.mxu0 %v3520
    %5600 = vmatmul.mubr.bf16.gmra.mrb[0].mxu0 %v3519
    %v5601 = vpop.f32.mrb[0].mxu0
    %v5602 = vadd.f32 %v3865, %v5601
    %v5603 = vpop.f32.mrb[0].mxu0
    %v5604 = vadd.f32 %v3869, %v5603
    %v5605 = vpop.f32.mrb[0].mxu0
    %v5606 = vpop.f32.mrb[0].mxu0
    %5607 = vdwg.mxu0
    %5608 = vmatprep.subr.bf16.mxu0 %v4878
    %5609 = vmatpush1.bf16.msra.mxu0 %v4877
    %5610 = vmatprep.subr.bf16.mxu0 %v4885
    %5611 = vmatpush1.bf16.msra.mxu0 %v4884
    %5612 = vmatprep.subr.bf16.mxu0 %v4892
    %5613 = vmatpush1.bf16.msra.mxu0 %v4891
    %5614 = vmatprep.subr.bf16.mxu0 %v4899
    %5615 = vmatpush1.bf16.msra.mxu0 %v4898
    %5616 = vmatprep.subr.bf16.mxu0 %v4906
    %5617 = vmatpush1.bf16.msra.mxu0 %v4905
    %5618 = vmatprep.subr.bf16.mxu0 %v4913
    %5619 = vmatpush1.bf16.msra.mxu0 %v4912
    %5620 = vmatprep.subr.bf16.mxu0 %v4920
    %5621 = vmatpush1.bf16.msra.mxu0 %v4919
    %5622 = vmatprep.subr.bf16.mxu0 %v4927
    %5623 = vmatpush1.bf16.msra.mxu0 %v4926
    %5624 = vmatprep.subr.bf16.mxu0 %v4934
    %5625 = vmatpush1.bf16.msra.mxu0 %v4933
    %5626 = vmatprep.subr.bf16.mxu0 %v4941
    %5627 = vmatpush1.bf16.msra.mxu0 %v4940
    %5628 = vmatprep.subr.bf16.mxu0 %v4948
    %5629 = vmatpush1.bf16.msra.mxu0 %v4947
    %5630 = vmatprep.subr.bf16.mxu0 %v4955
    %5631 = vmatpush1.bf16.msra.mxu0 %v4954
    %5632 = vmatprep.subr.bf16.mxu0 %v4962
    %5633 = vmatpush1.bf16.msra.mxu0 %v4961
    %5634 = vmatprep.subr.bf16.mxu0 %v4969
    %5635 = vmatpush1.bf16.msra.mxu0 %v4968
    %5636 = vmatprep.subr.bf16.mxu0 %v4976
    %5637 = vmatpush1.bf16.msra.mxu0 %v4975
    %5638 = vmatprep.subr.bf16.mxu0 %v4983
    %5639 = vmatpush1.bf16.msra.mxu0 %v4982
    %5640 = vmatprep.mubr.bf16.mxu0 %v3522
    %5641 = vmatmul.mubr.bf16.gmra.mrb[0].mxu0 %v3521
    %v5642 = vpop.f32.mrb[0].mxu0
    %v5643 = vadd.f32 %v5602, %v5642
    %v5644 = vpop.f32.mrb[0].mxu0
    %v5645 = vadd.f32 %v5604, %v5644
    %v5646 = vpop.f32.mrb[0].mxu0
    %v5647 = vpop.f32.mrb[0].mxu0
    %5648 = vdwg.mxu0
    %5649 = vmatprep.subr.bf16.mxu0 %v4990
    %5650 = vmatpush1.bf16.msra.mxu0 %v4989
    %5651 = vmatprep.subr.bf16.mxu0 %v4997
    %5652 = vmatpush1.bf16.msra.mxu0 %v4996
    %5653 = vmatprep.subr.bf16.mxu0 %v5004
    %5654 = vmatpush1.bf16.msra.mxu0 %v5003
    %5655 = vmatprep.subr.bf16.mxu0 %v5011
    %5656 = vmatpush1.bf16.msra.mxu0 %v5010
    %5657 = vmatprep.subr.bf16.mxu0 %v5018
    %5658 = vmatpush1.bf16.msra.mxu0 %v5017
    %5659 = vmatprep.subr.bf16.mxu0 %v5025
    %5660 = vmatpush1.bf16.msra.mxu0 %v5024
    %5661 = vmatprep.subr.bf16.mxu0 %v5032
    %5662 = vmatpush1.bf16.msra.mxu0 %v5031
    %5663 = vmatprep.subr.bf16.mxu0 %v5039
    %5664 = vmatpush1.bf16.msra.mxu0 %v5038
    %5665 = vmatprep.subr.bf16.mxu0 0
    %5666 = vmatpush1.bf16.msra.mxu0 0
    %5667 = vmatprep.subr.bf16.mxu0 0
    %5668 = vmatpush1.bf16.msra.mxu0 0
    %5669 = vmatprep.subr.bf16.mxu0 0
    %5670 = vmatpush1.bf16.msra.mxu0 0
    %5671 = vmatprep.subr.bf16.mxu0 0
    %5672 = vmatpush1.bf16.msra.mxu0 0
    %5673 = vmatprep.subr.bf16.mxu0 0
    %5674 = vmatpush1.bf16.msra.mxu0 0
    %5675 = vmatprep.subr.bf16.mxu0 0
    %5676 = vmatpush1.bf16.msra.mxu0 0
    %5677 = vmatprep.subr.bf16.mxu0 0
    %5678 = vmatpush1.bf16.msra.mxu0 0
    %5679 = vmatprep.subr.bf16.mxu0 0
    %5680 = vmatpush1.bf16.msra.mxu0 0
    %5681 = vmatprep.mubr.bf16.mxu0 0
    %5682 = vmatmul.mubr.bf16.gmra.mrb[0].mxu0 %v3523
    %v5683 = vpop.f32.mrb[0].mxu0
    %v5684 = vadd.f32 %v5643, %v5683
    %v5685 = vpop.f32.mrb[0].mxu0
    %v5686 = vadd.f32 %v5645, %v5685
    %v5687 = vpop.f32.mrb[0].mxu0
    %v5688 = vpop.f32.mrb[0].mxu0
    %5689 = vdwg.mxu0
    %5690 = vmatprep.subr.bf16.mxu0 0
    %5691 = vmatpush1.bf16.msra.mxu0 %v4767
    %5692 = vmatprep.subr.bf16.mxu0 0
    %5693 = vmatpush1.bf16.msra.mxu0 %v4774
    %5694 = vmatprep.subr.bf16.mxu0 0
    %5695 = vmatpush1.bf16.msra.mxu0 %v4781
    %5696 = vmatprep.subr.bf16.mxu0 0
    %5697 = vmatpush1.bf16.msra.mxu0 %v4788
    %5698 = vmatprep.subr.bf16.mxu0 0
    %5699 = vmatpush1.bf16.msra.mxu0 %v4795
    %5700 = vmatprep.subr.bf16.mxu0 0
    %5701 = vmatpush1.bf16.msra.mxu0 %v4802
    %5702 = vmatprep.subr.bf16.mxu0 0
    %5703 = vmatpush1.bf16.msra.mxu0 %v4809
    %5704 = vmatprep.subr.bf16.mxu0 0
    %5705 = vmatpush1.bf16.msra.mxu0 %v4816
    %5706 = vmatprep.subr.bf16.mxu0 0
    %5707 = vmatpush1.bf16.msra.mxu0 %v4823
    %5708 = vmatprep.subr.bf16.mxu0 0
    %5709 = vmatpush1.bf16.msra.mxu0 %v4830
    %5710 = vmatprep.subr.bf16.mxu0 0
    %5711 = vmatpush1.bf16.msra.mxu0 %v4837
    %5712 = vmatprep.subr.bf16.mxu0 0
    %5713 = vmatpush1.bf16.msra.mxu0 %v4844
    %5714 = vmatprep.subr.bf16.mxu0 0
    %5715 = vmatpush1.bf16.msra.mxu0 %v4851
    %5716 = vmatprep.subr.bf16.mxu0 0
    %5717 = vmatpush1.bf16.msra.mxu0 %v4858
    %5718 = vmatprep.subr.bf16.mxu0 0
    %5719 = vmatpush1.bf16.msra.mxu0 %v4865
    %5720 = vmatprep.subr.bf16.mxu0 0
    %5721 = vmatpush1.bf16.msra.mxu0 %v4872
    %5722 = vmatprep.mubr.bf16.mxu0 %v3520
    %5723 = vmatmul.mubr.bf16.gmra.mrb[0].mxu0 %v3519
    %v5724 = vpop.f32.mrb[0].mxu0
    %v5725 = vadd.f32 %v3873, %v5724
    %v5726 = vpop.f32.mrb[0].mxu0
    %v5727 = vpop.f32.mrb[0].mxu0
    %v5728 = vpop.f32.mrb[0].mxu0
    %5729 = vdwg.mxu0
    %5730 = vmatprep.subr.bf16.mxu0 0
    %5731 = vmatpush1.bf16.msra.mxu0 %v4879
    %5732 = vmatprep.subr.bf16.mxu0 0
    %5733 = vmatpush1.bf16.msra.mxu0 %v4886
    %5734 = vmatprep.subr.bf16.mxu0 0
    %5735 = vmatpush1.bf16.msra.mxu0 %v4893
    %5736 = vmatprep.subr.bf16.mxu0 0
    %5737 = vmatpush1.bf16.msra.mxu0 %v4900
    %5738 = vmatprep.subr.bf16.mxu0 0
    %5739 = vmatpush1.bf16.msra.mxu0 %v4907
    %5740 = vmatprep.subr.bf16.mxu0 0
    %5741 = vmatpush1.bf16.msra.mxu0 %v4914
    %5742 = vmatprep.subr.bf16.mxu0 0
    %5743 = vmatpush1.bf16.msra.mxu0 %v4921
    %5744 = vmatprep.subr.bf16.mxu0 0
    %5745 = vmatpush1.bf16.msra.mxu0 %v4928
    %5746 = vmatprep.subr.bf16.mxu0 0
    %5747 = vmatpush1.bf16.msra.mxu0 %v4935
    %5748 = vmatprep.subr.bf16.mxu0 0
    %5749 = vmatpush1.bf16.msra.mxu0 %v4942
    %5750 = vmatprep.subr.bf16.mxu0 0
    %5751 = vmatpush1.bf16.msra.mxu0 %v4949
    %5752 = vmatprep.subr.bf16.mxu0 0
    %5753 = vmatpush1.bf16.msra.mxu0 %v4956
    %5754 = vmatprep.subr.bf16.mxu0 0
    %5755 = vmatpush1.bf16.msra.mxu0 %v4963
    %5756 = vmatprep.subr.bf16.mxu0 0
    %5757 = vmatpush1.bf16.msra.mxu0 %v4970
    %5758 = vmatprep.subr.bf16.mxu0 0
    %5759 = vmatpush1.bf16.msra.mxu0 %v4977
    %5760 = vmatprep.subr.bf16.mxu0 0
    %5761 = vmatpush1.bf16.msra.mxu0 %v4984
    %5762 = vmatprep.mubr.bf16.mxu0 %v3522
    %5763 = vmatmul.mubr.bf16.gmra.mrb[0].mxu0 %v3521
    %v5764 = vpop.f32.mrb[0].mxu0
    %v5765 = vadd.f32 %v5725, %v5764
    %v5766 = vpop.f32.mrb[0].mxu0
    %v5767 = vpop.f32.mrb[0].mxu0
    %v5768 = vpop.f32.mrb[0].mxu0
    %5769 = vdwg.mxu0
    %5770 = vmatprep.subr.bf16.mxu0 0
    %5771 = vmatpush1.bf16.msra.mxu0 %v4991
    %5772 = vmatprep.subr.bf16.mxu0 0
    %5773 = vmatpush1.bf16.msra.mxu0 %v4998
    %5774 = vmatprep.subr.bf16.mxu0 0
    %5775 = vmatpush1.bf16.msra.mxu0 %v5005
    %5776 = vmatprep.subr.bf16.mxu0 0
    %5777 = vmatpush1.bf16.msra.mxu0 %v5012
    %5778 = vmatprep.subr.bf16.mxu0 0
    %5779 = vmatpush1.bf16.msra.mxu0 %v5019
    %5780 = vmatprep.subr.bf16.mxu0 0
    %5781 = vmatpush1.bf16.msra.mxu0 %v5026
    %5782 = vmatprep.subr.bf16.mxu0 0
    %5783 = vmatpush1.bf16.msra.mxu0 %v5033
    %5784 = vmatprep.subr.bf16.mxu0 0
    %5785 = vmatpush1.bf16.msra.mxu0 %v5040
    %5786 = vmatprep.subr.bf16.mxu0 0
    %5787 = vmatpush1.bf16.msra.mxu0 0
    %5788 = vmatprep.subr.bf16.mxu0 0
    %5789 = vmatpush1.bf16.msra.mxu0 0
    %5790 = vmatprep.subr.bf16.mxu0 0
    %5791 = vmatpush1.bf16.msra.mxu0 0
    %5792 = vmatprep.subr.bf16.mxu0 0
    %5793 = vmatpush1.bf16.msra.mxu0 0
    %5794 = vmatprep.subr.bf16.mxu0 0
    %5795 = vmatpush1.bf16.msra.mxu0 0
    %5796 = vmatprep.subr.bf16.mxu0 0
    %5797 = vmatpush1.bf16.msra.mxu0 0
    %5798 = vmatprep.subr.bf16.mxu0 0
    %5799 = vmatpush1.bf16.msra.mxu0 0
    %5800 = vmatprep.subr.bf16.mxu0 0
    %5801 = vmatpush1.bf16.msra.mxu0 0
    %5802 = vmatprep.mubr.bf16.mxu0 0
    %5803 = vmatmul.mubr.bf16.gmra.mrb[0].mxu0 %v3523
    %v5804 = vpop.f32.mrb[0].mxu0
    %v5805 = vadd.f32 %v5765, %v5804
    %v5806 = vpop.f32.mrb[0].mxu0
    %v5807 = vpop.f32.mrb[0].mxu0
    %v5808 = vpop.f32.mrb[0].mxu0
    %5809 = vdwg.mxu0
    %v5810 = vxor.u32 %v5438, 2147483648
    %v5811 = vxor.u32 %v5440, 2147483648
    %v5812 = vxor.u32 %v5561, 2147483648
    %v5813 = vxor.u32 %v5563, 2147483648
    %v5814 = vxor.u32 %v5684, 2147483648
    %v5815 = vxor.u32 %v5686, 2147483648
    %v5816 = vxor.u32 %v5805, 2147483648
    %v5817 = vmul.f32 %v5810, 1.442695
    %v5818 = vpow.pop %v5817
    %v5819 = vmul.f32 %v5811, 1.442695
    %v5820 = vpow.pop %v5819
    %v5821 = vmul.f32 %v5812, 1.442695
    %v5822 = vpow.pop %v5821
    %v5823 = vmul.f32 %v5813, 1.442695
    %v5824 = vpow.pop %v5823
    %v5825 = vmul.f32 %v5814, 1.442695
    %v5826 = vpow.pop %v5825
    %v5827 = vmul.f32 %v5815, 1.442695
    %v5828 = vpow.pop %v5827
    %v5829 = vmul.f32 %v5816, 1.442695
    %v5830 = vpow.pop %v5829
    %v5831 = vadd.f32 %v5818, 1.0
    %v5832 = vadd.f32 %v5820, 1.0
    %v5833 = vadd.f32 %v5822, 1.0
    %v5834 = vadd.f32 %v5824, 1.0
    %v5835 = vadd.f32 %v5826, 1.0
    %v5836 = vadd.f32 %v5828, 1.0
    %v5837 = vadd.f32 %v5830, 1.0
    %v5838 = vrcp.pop %v5831
    %v5839 = vmul.f32 1.0, %v5838
    %v5840 = vrcp.pop %v5832
    %v5841 = vmul.f32 1.0, %v5840
    %v5842 = vrcp.pop %v5833
    %v5843 = vmul.f32 1.0, %v5842
    %v5844 = vrcp.pop %v5834
    %v5845 = vmul.f32 1.0, %v5844
    %v5846 = vrcp.pop %v5835
    %v5847 = vmul.f32 1.0, %v5846
    %v5848 = vrcp.pop %v5836
    %v5849 = vmul.f32 1.0, %v5848
    %v5850 = vrcp.pop %v5837
    %v5851 = vmul.f32 1.0, %v5850
    %v5852 = vpack.c.bf16 %v5839, %v5839
    %v5853 = vpack.c.bf16 %v5841, %v5841
    %v5854 = vpack.c.bf16 %v5843, %v5843
    %v5855 = vpack.c.bf16 %v5845, %v5845
    %v5856 = vpack.c.bf16 %v5847, %v5847
    %v5857 = vpack.c.bf16 %v5849, %v5849
    %v5858 = vpack.c.bf16 %v5851, %v5851
    %v5866 = vunpack.c.l.b16 %v5852
    %v5867 = vunpack.c.l.b16 %v5853
    %v5868 = vunpack.c.l.b16 %v5854
    %v5869 = vunpack.c.l.b16 %v5855
    %v5870 = vunpack.c.l.b16 %v5856
    %v5871 = vunpack.c.l.b16 %v5857
    %v5872 = vunpack.c.l.b16 %v5858
    %v5873 = vpack.c.b16 %v5867, %v5866
    %v5874 = vpack.c.b16 %v5869, %v5868
    %v5875 = vpack.c.b16 %v5871, %v5870
    %v5876 = vpack.c.b16 %v5872, %v5872
    %5881 = vst [vmem:[#allocation16] sm:$0xff] %v5873
    %5882 = vst [vmem:[#allocation16 + $0x8] sm:$0xff] %v5874
    %5883 = vst [vmem:[#allocation16 + $0x10] sm:$0xff] %v5875
    %5884 = vst [vmem:[#allocation16 + $0x18] sm:$0xf] %v5876
    %5885 = vst [vmem:[%s11] sm:$0xff] %v3095
    %5886 = vst [vmem:[%s11 + $0x8] sm:$0xff] %v3097
    // Predicated region
    $region74: #{vae_forward.1} parent=1 // pred_check
      _
    $region75: #{vae_forward.1} parent=1 // pred_check_branch
      %5888 = sbr.rel (0) target = $region77
    $region76: #{vae_forward.1} parent=1 // pred_region
      %s5890 = ssub.s32 448, 448
      %5891 = vsyncadd [#allocation4], %s5890
      %s5893 = sshll.u32 [#allocation16], 4
      %s5894 = int_to_ptr.vmem [resolvable:$true] %s5893
      %5896 = dma.vmem_to_hbm [thread:$0]  %s5894, 448, %s10, [#allocation4]
    $region77: #{vae_forward.1} parent=1 // pred_fallthru
      _
    // Predicated region
    $region78: #{vae_forward.1} parent=1 // pred_check
      _
    $region79: #{vae_forward.1} parent=1 // pred_check_branch
      %5898 = sbr.rel (0) target = $region81
    $region80: #{vae_forward.1} parent=1 // pred_region
      _
    $region81: #{vae_forward.1} parent=1 // pred_fallthru
      _
    // Predicated region
    $region82: #{vae_forward.1} parent=1 // pred_check
      _
    $region83: #{vae_forward.1} parent=1 // pred_check_branch
      %5900 = sbr.rel (0) target = $region85
    $region84: #{vae_forward.1} parent=1 // pred_region
      %5901 = dma.done [#allocation4], 448
    $region85: #{vae_forward.1} parent=1 // pred_fallthru
      _
    // Predicated region
    $region86: #{vae_forward.1} parent=1 // pred_check
      _
    $region87: #{vae_forward.1} parent=1 // pred_check_branch
      %5903 = sbr.rel (0) target = $region89
    $region88: #{vae_forward.1} parent=1 // pred_region
      _
    $region89: #{vae_forward.1} parent=1 // pred_fallthru
      _
    %5904 = vsyncpa [#allocation3], 1
    %5905 = vsyncpa [#allocation6], 1
    %5906 = vsyncpa [#allocation9], 1
    %5907 = vsyncpa [#allocation12], 1
    %5908 = vsyncpa [#allocation15], 1
    %5909 = vsyncpa [#allocation4], 1

</llo_original>
